<compile_context>
chip_gen: v5e
topology: v5e:2x2
jax: 0.10.0
libtpu: 0.0.40
codegen_flags: <defaults>
</compile_context>

<pallas_src>
import functools

import jax
import jax.numpy as jnp
import numpy as np
from jax.experimental import pallas as pl
from jax.experimental.pallas import tpu as pltpu


def _pick_tile_h(hc, wc, pool, target_m=256):
    """Row-tile for the conv grid.

    Prefer divisors of Hc that are multiples of `pool` (pool windows stay
    tile-aligned) with TILE_H*Wc close to `target_m` (MXU M dimension).
    Fall back to the whole image (also handles MaxPool floor-mode leftover
    rows, which must still contribute to the BN statistics).
    """
    cands = [d for d in range(1, hc + 1) if hc % d == 0 and d % pool == 0]
    if not cands:
        return hc
    target = max(pool, max(1, target_m // max(wc, 1)))
    fits = [d for d in cands if d <= target]
    return max(fits) if fits else min(cands)


# ----------------------------------------------------------------------------
# Kernel 1: conv (single im2col matmul) + bias + ReLU + BN batch-stat partials
#           + fused MaxPool window max/min.
#   x_ref    : (1, Hp, Wp, Cin)          padded NHWC image (bf16), per n
#   w_ref    : (K*K*Cin, Cpad)           weights (bf16), Cout zero-padded
#   b_ref    : (1, Cpad)                 bias (f32), zero-padded
#   pmax_ref : (1, TILE_HO*Wo, Cpad)     pooled window max (bf16), lane-dense
#   pmin_ref : (1, TILE_HO*Wo, Cpad)     pooled window min (bf16)
#   sum_ref  : (1, 1, 8, Cpad)           per-(n,h) partial channel sums (f32)
#   sumsq_ref: (1, 1, 8, Cpad)           per-(n,h) partial channel sum-sq (f32)
# grid = (N, Hc // TILE_H); both axes "parallel" (distinct output blocks).
# ----------------------------------------------------------------------------
def conv_relu_stats_pool_kernel(k, pool, tile_h, x_ref, w_ref, b_ref,
                                pmax_ref, pmin_ref, sum_ref, sumsq_ref):
    _, hp, wp, cin = x_ref.shape
    kkcin, cp = w_ref.shape
    wc = wp - k + 1
    th = tile_h
    hw_out = pmax_ref.shape[1]
    wo = wc // pool
    tho = hw_out // wo

    h0 = pl.multiple_of(pl.program_id(1) * th, th)    # first conv row of tile

    # ---- single im2col matmul (contraction depth K*K*Cin) -------------------
    taps = []
    for ki in range(k):
        rows = x_ref[0, pl.ds(h0 + ki, th), :, :].astype(jnp.float32)  # (th, wp, cin)
        for kj in range(k):
            taps.append(rows[:, kj:kj + wc, :])                        # (th, wc, cin)
    patch = jnp.concatenate(taps, axis=-1)            # (th, wc, K*K*cin) f32
    patch = patch.reshape(th * wc, kkcin).astype(jnp.bfloat16)
    acc = jnp.dot(patch, w_ref[...], preferred_element_type=jnp.float32)

    y = jnp.maximum(acc + b_ref[...], 0.0)            # bias + ReLU, f32

    # ---- BN batch-statistic partials (f32, BEFORE the bf16 cast) ------------
    rows_n = th * wc
    pad_rows = (-rows_n) % 8
    y_stats = y
    if pad_rows:                                      # zero rows don't bias sums
        y_stats = jnp.concatenate(
            [y, jnp.zeros((pad_rows, cp), jnp.float32)], axis=0)
    y8 = y_stats.reshape(-1, 8, cp)
    sum_ref[...] = jnp.sum(y8, axis=0).reshape(1, 1, 8, cp)
    sumsq_ref[...] = jnp.sum(y8 * y8, axis=0).reshape(1, 1, 8, cp)

    # ---- fused MaxPool: per-window max AND min of the ReLU'd activations ----
    # (BN affine is per-channel monotone; kernel 2 selects by sign(scale).)
    yhw = y.reshape(th, wc, cp)
    z = yhw[:tho * pool, :wo * pool, :].reshape(tho, pool, wo, pool, cp)
    zmax = jnp.max(jnp.max(z, axis=3), axis=1)        # (tho, wo, cp)
    zmin = jnp.min(jnp.min(z, axis=3), axis=1)
    pmax_ref[...] = zmax.reshape(1, tho * wo, cp).astype(pmax_ref.dtype)
    pmin_ref[...] = zmin.reshape(1, tho * wo, cp).astype(pmin_ref.dtype)


# ----------------------------------------------------------------------------
# Kernel 2: BatchNorm affine applied to the pooled max/min, selected by
#           sign(scale):  out = where(scale>=0, max, min) * scale + shift.
#   pmax/pmin: (1, Ho*Wo, Cpad) bf16;  scale/shift: (1, Cpad) f32
#   o_ref    : (1, Ho*Wo, Cpad) f32
# grid = (N,), "parallel".
# ----------------------------------------------------------------------------
def bn_select_kernel(pmax_ref, pmin_ref, scale_ref, shift_ref, o_ref):
    s = scale_ref[...]                                # (1, cp)
    t = shift_ref[...]
    vmax = pmax_ref[...].astype(jnp.float32)          # (1, hw, cp)
    vmin = pmin_ref[...].astype(jnp.float32)
    o_ref[...] = jnp.where(s >= 0.0, vmax, vmin) * s + t


def conv_block_forward(x_nchw, w_oihw, bias, gamma, beta, *, padding, pool, eps=1e-5):
    N, Cin, H, W = x_nchw.shape
    Cout, _, K, _ = w_oihw.shape
    Hp, Wp = H + 2 * padding, W + 2 * padding
    Hc, Wc = Hp - K + 1, Wp - K + 1
    Ho, Wo = Hc // pool, Wc // pool                   # MaxPool2d floor, stride=kernel
    C_pad = ((Cout + 127) // 128) * 128               # lane-dense channel padding

    # ---- glue: NCHW -> NHWC, spatial zero pad, bf16 MXU operands ------------
    # TODO(synk): this transpose/pad/cast is a standalone XLA input round-trip;
    # folding it into the pallas_call input DMA (allow_input_fusion / in-kernel
    # border masking) is a further optimization not taken here.
    x = jnp.transpose(x_nchw, (0, 2, 3, 1)).astype(jnp.float32)
    xp = jnp.pad(x, ((0, 0), (padding, padding), (padding, padding), (0, 0)))
    xp = xp.astype(jnp.bfloat16)
    # (O,I,Kh,Kw) -> (K*K*Cin, Cpad); row (ki*K+kj)*Cin+ci matches the in-kernel
    # tap concatenation order.
    w_t = jnp.transpose(w_oihw, (2, 3, 1, 0)).reshape(K * K * Cin, Cout)
    w_p = jnp.pad(w_t.astype(jnp.float32), ((0, 0), (0, C_pad - Cout)))
    w_p = w_p.astype(jnp.bfloat16)
    b_p = jnp.pad(bias.astype(jnp.float32), (0, C_pad - Cout)).reshape(1, C_pad)

    TILE_H = _pick_tile_h(Hc, Wc, pool, target_m=256)
    nh = Hc // TILE_H
    TILE_HO = (TILE_H // pool) if (TILE_H % pool == 0) else Ho
    assert nh * TILE_HO == Ho
    grid1 = (N, nh)

    flops = 2 * N * Hc * Wc * K * K * Cin * C_pad
    bytes_accessed = (int(xp.size) * 2 + int(w_p.size) * 2 + int(b_p.size) * 4
                      + 2 * N * Ho * Wo * C_pad * 2       # pooled max/min, bf16
                      + 2 * N * nh * 8 * C_pad * 4)       # stat partials, f32

    kernel1 = functools.partial(conv_relu_stats_pool_kernel, K, pool, TILE_H)
    pmax, pmin, s_part, sq_part = pl.pallas_call(
        kernel1,
        grid=grid1,
        in_specs=[
            pl.BlockSpec((1, Hp, Wp, Cin), lambda n, h: (n, 0, 0, 0)),   # resident per n
            pl.BlockSpec((K * K * Cin, C_pad), lambda n, h: (0, 0)),
            pl.BlockSpec((1, C_pad), lambda n, h: (0, 0)),
        ],
        out_specs=(
            pl.BlockSpec((1, TILE_HO * Wo, C_pad), lambda n, h: (n, h, 0)),
            pl.BlockSpec((1, TILE_HO * Wo, C_pad), lambda n, h: (n, h, 0)),
            pl.BlockSpec((1, 1, 8, C_pad), lambda n, h: (n, h, 0, 0)),
            pl.BlockSpec((1, 1, 8, C_pad), lambda n, h: (n, h, 0, 0)),
        ),
        out_shape=(
            jax.ShapeDtypeStruct((N, Ho * Wo, C_pad), jnp.bfloat16),
            jax.ShapeDtypeStruct((N, Ho * Wo, C_pad), jnp.bfloat16),
            jax.ShapeDtypeStruct((N, nh, 8, C_pad), jnp.float32),
            jax.ShapeDtypeStruct((N, nh, 8, C_pad), jnp.float32),
        ),
        compiler_params=pltpu.CompilerParams(
            dimension_semantics=("parallel", "parallel"),
            vmem_limit_bytes=32 * 1024 * 1024),
        cost_estimate=pl.CostEstimate(flops=flops, transcendentals=0,
                                      bytes_accessed=bytes_accessed),
    )(xp, w_p, b_p)

    # ---- glue: per-channel BN scale/shift from training-mode batch stats ----
    # PyTorch BatchNorm2d (training) normalizes with the biased batch variance.
    # TODO(synk): running_mean/running_var buffer updates are training-state
    # mutation and do not affect the returned tensor; omitted here.
    count = jnp.float32(N * Hc * Wc)
    s = jnp.sum(s_part, axis=(0, 1, 2))
    sq = jnp.sum(sq_part, axis=(0, 1, 2))
    mean = s / count
    var = jnp.maximum(sq / count - mean * mean, 0.0)   # guard f32 cancellation
    gamma_p = jnp.pad(gamma.astype(jnp.float32), (0, C_pad - Cout))
    beta_p = jnp.pad(beta.astype(jnp.float32), (0, C_pad - Cout))
    inv = gamma_p * jax.lax.rsqrt(var + eps)
    scale = inv.reshape(1, C_pad)
    shift = (beta_p - mean * inv).reshape(1, C_pad)

    # ---- kernel 2: BN affine over the pooled max/min, select by sign(scale) --
    out_pool = pl.pallas_call(
        bn_select_kernel,
        grid=(N,),
        in_specs=[
            pl.BlockSpec((1, Ho * Wo, C_pad), lambda n: (n, 0, 0)),
            pl.BlockSpec((1, Ho * Wo, C_pad), lambda n: (n, 0, 0)),
            pl.BlockSpec((1, C_pad), lambda n: (0, 0)),
            pl.BlockSpec((1, C_pad), lambda n: (0, 0)),
        ],
        out_specs=pl.BlockSpec((1, Ho * Wo, C_pad), lambda n: (n, 0, 0)),
        out_shape=jax.ShapeDtypeStruct((N, Ho * Wo, C_pad), jnp.float32),
        compiler_params=pltpu.CompilerParams(
            dimension_semantics=("parallel",),
            vmem_limit_bytes=32 * 1024 * 1024),
    )(pmax, pmin, scale, shift)

    # drop channel padding, return in PyTorch's NCHW convention
    out = out_pool.reshape(N, Ho, Wo, C_pad)[:, :, :, :Cout]
    return jnp.transpose(out, (0, 3, 1, 2))


# ---- pure-JAX reference (for correctness checks only) ------------------------
def reference_forward(x, w, b, gamma, beta, *, padding, pool, eps=1e-5):
    y = jax.lax.conv_general_dilated(
        x, w, window_strides=(1, 1),
        padding=[(padding, padding), (padding, padding)],
        dimension_numbers=('NCHW', 'OIHW', 'NCHW'))
    y = y + b.reshape(1, -1, 1, 1)
    y = jnp.maximum(y, 0.0)
    mean = jnp.mean(y, axis=(0, 2, 3), keepdims=True)
    var = jnp.mean((y - mean) ** 2, axis=(0, 2, 3), keepdims=True)
    y = (y - mean) / jnp.sqrt(var + eps) * gamma.reshape(1, -1, 1, 1) + beta.reshape(1, -1, 1, 1)
    y = jax.lax.reduce_window(y, -jnp.inf, jax.lax.max,
                              (1, 1, pool, pool), (1, 1, pool, pool), 'VALID')
    return y


if __name__ == "__main__":
    # ConvBlock(c_in=4, c_out=8, kernel_size=3, padding=1, num_features=8, m_kernal=2)
    N, Cin, H, W = 2, 4, 16, 16
    Cout, K, PAD, POOL = 8, 3, 1, 2

    key = jax.random.PRNGKey(0)
    k_x, k_w, k_b = jax.random.split(key, 3)
    x = jax.random.normal(k_x, (N, Cin, H, W), dtype=jnp.float32)
    w = jax.random.normal(k_w, (Cout, Cin, K, K), dtype=jnp.float32) * 0.1
    b = jax.random.normal(k_b, (Cout,), dtype=jnp.float32) * 0.1
    gamma = jnp.ones((Cout,), dtype=jnp.float32)    # BatchNorm2d default init
    beta = jnp.zeros((Cout,), dtype=jnp.float32)

    fwd = jax.jit(functools.partial(conv_block_forward, padding=PAD, pool=POOL))
    out = jax.block_until_ready(fwd(x, w, b, gamma, beta))
    assert out.shape == (N, Cout, H // POOL, W // POOL)

    # Check vs. reference fed the same bf16-rounded conv operands the kernel
    # uses.  Tolerance also covers the intentional bf16 rounding of the pooled
    # activations before the BN affine (bounded by bf16 ulp * 1/std).
    x_r = x.astype(jnp.bfloat16).astype(jnp.float32)
    w_r = w.astype(jnp.bfloat16).astype(jnp.float32)
    ref_bf16 = reference_forward(x_r, w_r, b, gamma, beta, padding=PAD, pool=POOL)
    np.testing.assert_allclose(np.asarray(out), np.asarray(ref_bf16), rtol=2e-2, atol=2e-2)

    # Loose sanity check against the full-f32 module semantics (bf16 operand error).
    ref_f32 = reference_forward(x, w, b, gamma, beta, padding=PAD, pool=POOL)
    np.testing.assert_allclose(np.asarray(out), np.asarray(ref_f32), rtol=1e-1, atol=1e-1)

    print("KERNEL_OK")
</pallas_src>

<mosaic_0001>
module attributes {stable_mosaic.version = 11 : i64} {
  func.func @conv_relu_stats_pool_kernel(%arg0: i32, %arg1: i32, %arg2: memref<1x18x18x4xbf16, #tpu.memory_space<vmem>>, %arg3: memref<36x128xbf16, #tpu.memory_space<vmem>>, %arg4: memref<1x128xf32, #tpu.memory_space<vmem>>, %arg5: memref<1x64x128xbf16, #tpu.memory_space<vmem>>, %arg6: memref<1x64x128xbf16, #tpu.memory_space<vmem>>, %arg7: memref<1x1x8x128xf32, #tpu.memory_space<vmem>>, %arg8: memref<1x1x8x128xf32, #tpu.memory_space<vmem>>) attributes {dimension_semantics = [#tpu.dimension_semantics<parallel>, #tpu.dimension_semantics<parallel>], iteration_bounds = array<i64: 2, 1>, scalar_prefetch = 0 : i64, scratch_operands = 0 : i64, tpu.core_type = #tpu.core_type<tc>, window_params = [{transform_indices = @transform_0, window_bounds = array<i64: 1, 18, 18, 4>}, {pipeline_mode = #tpu.pipeline_mode<synchronous>, transform_indices = @transform_1, window_bounds = array<i64: 36, 128>}, {pipeline_mode = #tpu.pipeline_mode<synchronous>, transform_indices = @transform_2, window_bounds = array<i64: 1, 128>}, {transform_indices = @transform_3, window_bounds = array<i64: 1, 64, 128>}, {transform_indices = @transform_4, window_bounds = array<i64: 1, 64, 128>}, {transform_indices = @transform_5, window_bounds = array<i64: 1, 1, 8, 128>}, {transform_indices = @transform_6, window_bounds = array<i64: 1, 1, 8, 128>}]} {
    %c16_i32 = arith.constant 16 : i32
    %0 = arith.muli %arg1, %c16_i32 : i32
    %1 = tpu.assume_multiple %0, 16 : i32
    %c0_i32 = arith.constant 0 : i32
    %2 = arith.addi %1, %c0_i32 : i32
    %c0 = arith.constant 0 : index
    %3 = arith.index_cast %2 : i32 to index
    %c0_0 = arith.constant 0 : index
    %c0_1 = arith.constant 0 : index
    %4 = vector.load %arg2[%c0, %3, %c0_0, %c0_1] : memref<1x18x18x4xbf16, #tpu.memory_space<vmem>>, vector<1x16x18x4xbf16>
    %5 = vector.shape_cast %4 : vector<1x16x18x4xbf16> to vector<16x18x4xbf16>
    %6 = arith.extf %5 : vector<16x18x4xbf16> to vector<16x18x4xf32>
    %7 = vector.extract_strided_slice %6 {offsets = [0, 0, 0], sizes = [16, 16, 4], strides = [1, 1, 1]} : vector<16x18x4xf32> to vector<16x16x4xf32>
    %8 = vector.extract_strided_slice %6 {offsets = [0, 1, 0], sizes = [16, 16, 4], strides = [1, 1, 1]} : vector<16x18x4xf32> to vector<16x16x4xf32>
    %9 = vector.extract_strided_slice %6 {offsets = [0, 2, 0], sizes = [16, 16, 4], strides = [1, 1, 1]} : vector<16x18x4xf32> to vector<16x16x4xf32>
    %c1_i32 = arith.constant 1 : i32
    %10 = arith.addi %1, %c1_i32 : i32
    %c0_2 = arith.constant 0 : index
    %11 = arith.index_cast %10 : i32 to index
    %c0_3 = arith.constant 0 : index
    %c0_4 = arith.constant 0 : index
    %12 = vector.load %arg2[%c0_2, %11, %c0_3, %c0_4] : memref<1x18x18x4xbf16, #tpu.memory_space<vmem>>, vector<1x16x18x4xbf16>
    %13 = vector.shape_cast %12 : vector<1x16x18x4xbf16> to vector<16x18x4xbf16>
    %14 = arith.extf %13 : vector<16x18x4xbf16> to vector<16x18x4xf32>
    %15 = vector.extract_strided_slice %14 {offsets = [0, 0, 0], sizes = [16, 16, 4], strides = [1, 1, 1]} : vector<16x18x4xf32> to vector<16x16x4xf32>
    %16 = vector.extract_strided_slice %14 {offsets = [0, 1, 0], sizes = [16, 16, 4], strides = [1, 1, 1]} : vector<16x18x4xf32> to vector<16x16x4xf32>
    %17 = vector.extract_strided_slice %14 {offsets = [0, 2, 0], sizes = [16, 16, 4], strides = [1, 1, 1]} : vector<16x18x4xf32> to vector<16x16x4xf32>
    %c2_i32 = arith.constant 2 : i32
    %18 = arith.addi %1, %c2_i32 : i32
    %c0_5 = arith.constant 0 : index
    %19 = arith.index_cast %18 : i32 to index
    %c0_6 = arith.constant 0 : index
    %c0_7 = arith.constant 0 : index
    %20 = vector.load %arg2[%c0_5, %19, %c0_6, %c0_7] : memref<1x18x18x4xbf16, #tpu.memory_space<vmem>>, vector<1x16x18x4xbf16>
    %21 = vector.shape_cast %20 : vector<1x16x18x4xbf16> to vector<16x18x4xbf16>
    %22 = arith.extf %21 : vector<16x18x4xbf16> to vector<16x18x4xf32>
    %23 = vector.extract_strided_slice %22 {offsets = [0, 0, 0], sizes = [16, 16, 4], strides = [1, 1, 1]} : vector<16x18x4xf32> to vector<16x16x4xf32>
    %24 = vector.extract_strided_slice %22 {offsets = [0, 1, 0], sizes = [16, 16, 4], strides = [1, 1, 1]} : vector<16x18x4xf32> to vector<16x16x4xf32>
    %25 = vector.extract_strided_slice %22 {offsets = [0, 2, 0], sizes = [16, 16, 4], strides = [1, 1, 1]} : vector<16x18x4xf32> to vector<16x16x4xf32>
    %26 = tpu.concatenate %7, %8, %9, %15, %16, %17, %23, %24, %25 in 2 : vector<16x16x4xf32>, vector<16x16x4xf32>, vector<16x16x4xf32>, vector<16x16x4xf32>, vector<16x16x4xf32>, vector<16x16x4xf32>, vector<16x16x4xf32>, vector<16x16x4xf32>, vector<16x16x4xf32> -> vector<16x16x36xf32>
    %27 = vector.shape_cast %26 : vector<16x16x36xf32> to vector<256x36xf32>
    %28 = arith.truncf %27 : vector<256x36xf32> to vector<256x36xbf16>
    %c0_8 = arith.constant 0 : index
    %c0_9 = arith.constant 0 : index
    %29 = vector.load %arg3[%c0_8, %c0_9] : memref<36x128xbf16, #tpu.memory_space<vmem>>, vector<36x128xbf16>
    %cst = arith.constant dense<0.000000e+00> : vector<256x128xf32>
    %30 = tpu.matmul %28, %29, %cst {dimension_numbers = #tpu.dot_dimension_numbers<[1], [0], [0], [1], [0, 0, 1, 1], [], []>} : vector<256x36xbf16>, vector<36x128xbf16>, vector<256x128xf32> -> vector<256x128xf32>
    %c0_10 = arith.constant 0 : index
    %c0_11 = arith.constant 0 : index
    %31 = vector.load %arg4[%c0_10, %c0_11] : memref<1x128xf32, #tpu.memory_space<vmem>>, vector<1x128xf32>
    %32 = vector.broadcast %31 : vector<1x128xf32> to vector<256x128xf32>
    %33 = arith.addf %30, %32 : vector<256x128xf32>
    %cst_12 = arith.constant 0.000000e+00 : f32
    %34 = vector.broadcast %cst_12 : f32 to vector<256x128xf32>
    %35 = arith.maximumf %33, %34 : vector<256x128xf32>
    %36 = vector.shape_cast %35 : vector<256x128xf32> to vector<32x8x128xf32>
    %cst_13 = arith.constant dense<0.000000e+00> : vector<8x128xf32>
    %37 = vector.multi_reduction <add>, %36, %cst_13 [0] : vector<32x8x128xf32> to vector<8x128xf32>
    %38 = vector.shape_cast %37 : vector<8x128xf32> to vector<1x1x8x128xf32>
    %c0_14 = arith.constant 0 : index
    %c0_15 = arith.constant 0 : index
    %c0_16 = arith.constant 0 : index
    %c0_17 = arith.constant 0 : index
    %39 = vector.load %arg7[%c0_14, %c0_15, %c0_16, %c0_17] : memref<1x1x8x128xf32, #tpu.memory_space<vmem>>, vector<1x1x8x128xf32>
    tpu.vector_store %arg7[%c0_14, %c0_15, %c0_16, %c0_17], %38 {strides = array<i32>} : memref<1x1x8x128xf32, #tpu.memory_space<vmem>>, vector<1x1x8x128xf32>,
    %40 = arith.mulf %36, %36 : vector<32x8x128xf32>
    %cst_18 = arith.constant dense<0.000000e+00> : vector<8x128xf32>
    %41 = vector.multi_reduction <add>, %40, %cst_18 [0] : vector<32x8x128xf32> to vector<8x128xf32>
    %42 = vector.shape_cast %41 : vector<8x128xf32> to vector<1x1x8x128xf32>
    %c0_19 = arith.constant 0 : index
    %c0_20 = arith.constant 0 : index
    %c0_21 = arith.constant 0 : index
    %c0_22 = arith.constant 0 : index
    %43 = vector.load %arg8[%c0_19, %c0_20, %c0_21, %c0_22] : memref<1x1x8x128xf32, #tpu.memory_space<vmem>>, vector<1x1x8x128xf32>
    tpu.vector_store %arg8[%c0_19, %c0_20, %c0_21, %c0_22], %42 {strides = array<i32>} : memref<1x1x8x128xf32, #tpu.memory_space<vmem>>, vector<1x1x8x128xf32>,
    %44 = vector.shape_cast %35 : vector<256x128xf32> to vector<16x16x128xf32>
    %45 = vector.shape_cast %44 : vector<16x16x128xf32> to vector<8x2x8x2x128xf32>
    %cst_23 = arith.constant dense<0xFF800000> : vector<8x2x8x128xf32>
    %46 = vector.multi_reduction <maximumf>, %45, %cst_23 [3] : vector<8x2x8x2x128xf32> to vector<8x2x8x128xf32>
    %cst_24 = arith.constant dense<0xFF800000> : vector<8x8x128xf32>
    %47 = vector.multi_reduction <maximumf>, %46, %cst_24 [1] : vector<8x2x8x128xf32> to vector<8x8x128xf32>
    %cst_25 = arith.constant dense<0x7F800000> : vector<8x2x8x128xf32>
    %48 = vector.multi_reduction <minimumf>, %45, %cst_25 [3] : vector<8x2x8x2x128xf32> to vector<8x2x8x128xf32>
    %cst_26 = arith.constant dense<0x7F800000> : vector<8x8x128xf32>
    %49 = vector.multi_reduction <minimumf>, %48, %cst_26 [1] : vector<8x2x8x128xf32> to vector<8x8x128xf32>
    %50 = vector.shape_cast %47 : vector<8x8x128xf32> to vector<1x64x128xf32>
    %51 = arith.truncf %50 : vector<1x64x128xf32> to vector<1x64x128xbf16>
    %c0_27 = arith.constant 0 : index
    %c0_28 = arith.constant 0 : index
    %c0_29 = arith.constant 0 : index
    %52 = vector.load %arg5[%c0_27, %c0_28, %c0_29] : memref<1x64x128xbf16, #tpu.memory_space<vmem>>, vector<1x64x128xbf16>
    tpu.vector_store %arg5[%c0_27, %c0_28, %c0_29], %51 {strides = array<i32>} : memref<1x64x128xbf16, #tpu.memory_space<vmem>>, vector<1x64x128xbf16>,
    %53 = vector.shape_cast %49 : vector<8x8x128xf32> to vector<1x64x128xf32>
    %54 = arith.truncf %53 : vector<1x64x128xf32> to vector<1x64x128xbf16>
    %c0_30 = arith.constant 0 : index
    %c0_31 = arith.constant 0 : index
    %c0_32 = arith.constant 0 : index
    %55 = vector.load %arg6[%c0_30, %c0_31, %c0_32] : memref<1x64x128xbf16, #tpu.memory_space<vmem>>, vector<1x64x128xbf16>
    tpu.vector_store %arg6[%c0_30, %c0_31, %c0_32], %54 {strides = array<i32>} : memref<1x64x128xbf16, #tpu.memory_space<vmem>>, vector<1x64x128xbf16>,
    return
  }
  func.func @transform_0(%arg0: i32, %arg1: i32) -> (i32, i32, i32, i32) {
    %c0_i32 = arith.constant 0 : i32
    %c0_i32_0 = arith.constant 0 : i32
    %c0_i32_1 = arith.constant 0 : i32
    %c0_i32_2 = arith.constant 0 : i32
    return %arg0, %c0_i32, %c0_i32_0, %c0_i32_1 : i32, i32, i32, i32
  }
  func.func @transform_1(%arg0: i32, %arg1: i32) -> (i32, i32) {
    %c0_i32 = arith.constant 0 : i32
    %c0_i32_0 = arith.constant 0 : i32
    %c0_i32_1 = arith.constant 0 : i32
    return %c0_i32, %c0_i32_0 : i32, i32
  }
  func.func @transform_2(%arg0: i32, %arg1: i32) -> (i32, i32) {
    %c0_i32 = arith.constant 0 : i32
    %c0_i32_0 = arith.constant 0 : i32
    %c0_i32_1 = arith.constant 0 : i32
    return %c0_i32, %c0_i32_0 : i32, i32
  }
  func.func @transform_3(%arg0: i32, %arg1: i32) -> (i32, i32, i32) {
    %c0_i32 = arith.constant 0 : i32
    %c0_i32_0 = arith.constant 0 : i32
    return %arg0, %arg1, %c0_i32 : i32, i32, i32
  }
  func.func @transform_4(%arg0: i32, %arg1: i32) -> (i32, i32, i32) {
    %c0_i32 = arith.constant 0 : i32
    %c0_i32_0 = arith.constant 0 : i32
    return %arg0, %arg1, %c0_i32 : i32, i32, i32
  }
  func.func @transform_5(%arg0: i32, %arg1: i32) -> (i32, i32, i32, i32) {
    %c0_i32 = arith.constant 0 : i32
    %c0_i32_0 = arith.constant 0 : i32
    %c0_i32_1 = arith.constant 0 : i32
    return %arg0, %arg1, %c0_i32, %c0_i32_0 : i32, i32, i32, i32
  }
  func.func @transform_6(%arg0: i32, %arg1: i32) -> (i32, i32, i32, i32) {
    %c0_i32 = arith.constant 0 : i32
    %c0_i32_0 = arith.constant 0 : i32
    %c0_i32_1 = arith.constant 0 : i32
    return %arg0, %arg1, %c0_i32, %c0_i32_0 : i32, i32, i32, i32
  }
}

module attributes {stable_mosaic.version = 11 : i64} {
  func.func @bn_select_kernel(%arg0: i32, %arg1: memref<1x64x128xbf16, #tpu.memory_space<vmem>>, %arg2: memref<1x64x128xbf16, #tpu.memory_space<vmem>>, %arg3: memref<1x128xf32, #tpu.memory_space<vmem>>, %arg4: memref<1x128xf32, #tpu.memory_space<vmem>>, %arg5: memref<1x64x128xf32, #tpu.memory_space<vmem>>) attributes {dimension_semantics = [#tpu.dimension_semantics<parallel>], iteration_bounds = array<i64: 2>, scalar_prefetch = 0 : i64, scratch_operands = 0 : i64, tpu.core_type = #tpu.core_type<tc>, window_params = [{transform_indices = @transform_0, window_bounds = array<i64: 1, 64, 128>}, {transform_indices = @transform_1, window_bounds = array<i64: 1, 64, 128>}, {pipeline_mode = #tpu.pipeline_mode<synchronous>, transform_indices = @transform_2, window_bounds = array<i64: 1, 128>}, {pipeline_mode = #tpu.pipeline_mode<synchronous>, transform_indices = @transform_3, window_bounds = array<i64: 1, 128>}, {transform_indices = @transform_4, window_bounds = array<i64: 1, 64, 128>}]} {
    %c0 = arith.constant 0 : index
    %c0_0 = arith.constant 0 : index
    %0 = vector.load %arg3[%c0, %c0_0] : memref<1x128xf32, #tpu.memory_space<vmem>>, vector<1x128xf32>
    %c0_1 = arith.constant 0 : index
    %c0_2 = arith.constant 0 : index
    %1 = vector.load %arg4[%c0_1, %c0_2] : memref<1x128xf32, #tpu.memory_space<vmem>>, vector<1x128xf32>
    %c0_3 = arith.constant 0 : index
    %c0_4 = arith.constant 0 : index
    %c0_5 = arith.constant 0 : index
    %2 = vector.load %arg1[%c0_3, %c0_4, %c0_5] : memref<1x64x128xbf16, #tpu.memory_space<vmem>>, vector<1x64x128xbf16>
    %3 = arith.extf %2 : vector<1x64x128xbf16> to vector<1x64x128xf32>
    %c0_6 = arith.constant 0 : index
    %c0_7 = arith.constant 0 : index
    %c0_8 = arith.constant 0 : index
    %4 = vector.load %arg2[%c0_6, %c0_7, %c0_8] : memref<1x64x128xbf16, #tpu.memory_space<vmem>>, vector<1x64x128xbf16>
    %5 = arith.extf %4 : vector<1x64x128xbf16> to vector<1x64x128xf32>
    %cst = arith.constant 0.000000e+00 : f32
    %6 = vector.broadcast %cst : f32 to vector<1x128xf32>
    %7 = arith.cmpf oge, %0, %6 : vector<1x128xf32>
    %8 = vector.shape_cast %7 : vector<1x128xi1> to vector<1x1x128xi1>
    %9 = vector.broadcast %8 : vector<1x1x128xi1> to vector<1x64x128xi1>
    %10 = arith.select %9, %3, %5 : vector<1x64x128xi1>, vector<1x64x128xf32>
    %11 = vector.shape_cast %0 : vector<1x128xf32> to vector<1x1x128xf32>
    %12 = vector.broadcast %11 : vector<1x1x128xf32> to vector<1x64x128xf32>
    %13 = arith.mulf %10, %12 : vector<1x64x128xf32>
    %14 = vector.shape_cast %1 : vector<1x128xf32> to vector<1x1x128xf32>
    %15 = vector.broadcast %14 : vector<1x1x128xf32> to vector<1x64x128xf32>
    %16 = arith.addf %13, %15 : vector<1x64x128xf32>
    %c0_9 = arith.constant 0 : index
    %c0_10 = arith.constant 0 : index
    %c0_11 = arith.constant 0 : index
    %17 = vector.load %arg5[%c0_9, %c0_10, %c0_11] : memref<1x64x128xf32, #tpu.memory_space<vmem>>, vector<1x64x128xf32>
    tpu.vector_store %arg5[%c0_9, %c0_10, %c0_11], %16 {strides = array<i32>} : memref<1x64x128xf32, #tpu.memory_space<vmem>>, vector<1x64x128xf32>,
    return
  }
  func.func @transform_0(%arg0: i32) -> (i32, i32, i32) {
    %c0_i32 = arith.constant 0 : i32
    %c0_i32_0 = arith.constant 0 : i32
    %c0_i32_1 = arith.constant 0 : i32
    return %arg0, %c0_i32, %c0_i32_0 : i32, i32, i32
  }
  func.func @transform_1(%arg0: i32) -> (i32, i32, i32) {
    %c0_i32 = arith.constant 0 : i32
    %c0_i32_0 = arith.constant 0 : i32
    %c0_i32_1 = arith.constant 0 : i32
    return %arg0, %c0_i32, %c0_i32_0 : i32, i32, i32
  }
  func.func @transform_2(%arg0: i32) -> (i32, i32) {
    %c0_i32 = arith.constant 0 : i32
    %c0_i32_0 = arith.constant 0 : i32
    %c0_i32_1 = arith.constant 0 : i32
    return %c0_i32, %c0_i32_0 : i32, i32
  }
  func.func @transform_3(%arg0: i32) -> (i32, i32) {
    %c0_i32 = arith.constant 0 : i32
    %c0_i32_0 = arith.constant 0 : i32
    %c0_i32_1 = arith.constant 0 : i32
    return %c0_i32, %c0_i32_0 : i32, i32
  }
  func.func @transform_4(%arg0: i32) -> (i32, i32, i32) {
    %c0_i32 = arith.constant 0 : i32
    %c0_i32_0 = arith.constant 0 : i32
    %c0_i32_1 = arith.constant 0 : i32
    return %arg0, %c0_i32, %c0_i32_0 : i32, i32, i32
  }
}

</mosaic_0001>

<llo_original>
// kernel: conv_block_forward.3
$region0: #{conv_block_forward.3}
  #allocation0 [shape = 'u32[]', space=smem, size = 0x4, offset = 0x4, fixed_abs, tag = 'smem constant byte address 0x4 - core index']
  #allocation1 [shape = 'u32[72,128]{1,0:T(1,128)}', space=vmem, size = 0x9000, scoped, tag = 'internal scratch']
  %s0 = inlined_call_operand.vmem [shape: bf16[2,64,128], index: 0, kind: input, shape index: {}]
  %s1 = inlined_call_operand.vmem [shape: bf16[2,64,128], index: 1, kind: input, shape index: {}]
  %s2 = inlined_call_operand.vmem [shape: f32[1,128], index: 2, kind: input, shape index: {}]
  %s3 = inlined_call_operand.vmem [shape: f32[1,128], index: 3, kind: input, shape index: {}]
  %s4 = inlined_call_operand.vmem [shape: f32[2,64,128], index: 4, kind: output, shape index: {}]
  %s5 = sld [smem:[#allocation0]]
  $region49: #{conv_block_forward.3} parent=0
    _
  %s7 = ssub.s32 1, %s5
  %s8 = scalar_select 0, %s7, %s5
  loop: start=0, step=1, limit=4
  $region2: #{conv_block_forward.3} parent=0 // loop_pre_header
    _
  $region3: #{conv_block_forward.3} parent=0 // loop_header
    %s10 = sphi 0, %s14
    %p11 = scmp.ge.s32.totalorder %s10, 4
    %s20 = sphi 0, %s22
    %s23 = sphi 0, %s20
    %s24 = sphi 0, %s23
    %s40 = sphi 0, %s24
    %s46 = sphi 0, %s48
    %s49 = sphi 0, %s46
    %s50 = sphi 0, %s49
    %s66 = sphi 0, %s50
    %s70 = sphi 0, %s70
    %s72 = sphi 0, %s70
    %s73 = sphi 0, %s72
    %s87 = sphi 0, %s73
    %s91 = sphi 0, %s91
    %s93 = sphi 0, %s91
    %s94 = sphi 0, %s93
    %s108 = sphi 0, %s94
    %s114 = sphi 0, %s116
    %s117 = sphi 0, %s114
    %s118 = sphi 0, %s117
    %s134 = sphi 0, %s118
  $region4: #{conv_block_forward.3} parent=0 // loop_header_branch
    %13 = sbr.rel (%p11) target = $region8
  $region5: #{conv_block_forward.3} parent=0 // loop_body
    %s15 = ssub.s32 %s10, 1
    %s16 = ssub.s32 %s10, 2
    %s17 = sadd.s32 %s10, 1
    %s18 = ssub.s32 %s10, %s17
    %p19 = scmp.eq.s32.totalorder %s18, 0
    %s21 = sadd.s32 %s20, 1
    %s22 = scalar_select %p19, %s20, %s21
    %p25 = pneg %p19
    %p26 = scmp.eq.s32.totalorder %s10, 1
    %p27 = por %p25, %p26
    %p28 = scmp.ne.s32.totalorder %s20, %s23
    %p29 = scmp.eq.s32.totalorder %s10, 0
    %p30 = por %p28, %p29
    %p31 = scmp.ne.s32.totalorder %s20, %s23
    %p32 = scmp.eq.s32.totalorder %s15, 1
    %p33 = por %p31, %p32
    %p34 = scmp.ne.s32.totalorder %s23, %s24
    %p35 = scmp.eq.s32.totalorder %s15, 0
    %p36 = por %p34, %p35
    %p37 = scmp.ne.s32.totalorder %s23, %s24
    %p38 = scmp.eq.s32.totalorder %s16, 1
    %p39 = por %p37, %p38
    %p41 = scmp.ne.s32.totalorder %s24, %s40
    %p42 = scmp.eq.s32.totalorder %s16, 0
    %p43 = por %p41, %p42
    %s44 = ssub.s32 %s10, %s17
    %p45 = scmp.eq.s32.totalorder %s44, 0
    %s47 = sadd.s32 %s46, 1
    %s48 = scalar_select %p45, %s46, %s47
    %p51 = pneg %p45
    %p52 = scmp.eq.s32.totalorder %s10, 1
    %p53 = por %p51, %p52
    %p54 = scmp.ne.s32.totalorder %s46, %s49
    %p55 = scmp.eq.s32.totalorder %s10, 0
    %p56 = por %p54, %p55
    %p57 = scmp.ne.s32.totalorder %s46, %s49
    %p58 = scmp.eq.s32.totalorder %s15, 1
    %p59 = por %p57, %p58
    %p60 = scmp.ne.s32.totalorder %s49, %s50
    %p61 = scmp.eq.s32.totalorder %s15, 0
    %p62 = por %p60, %p61
    %p63 = scmp.ne.s32.totalorder %s49, %s50
    %p64 = scmp.eq.s32.totalorder %s16, 1
    %p65 = por %p63, %p64
    %p67 = scmp.ne.s32.totalorder %s50, %s66
    %p68 = scmp.eq.s32.totalorder %s16, 0
    %p69 = por %p67, %p68
    %s71 = sadd.s32 %s70, 1
    %p74 = scmp.eq.s32.totalorder %s10, 1
    %p75 = scmp.ne.s32.totalorder %s70, %s72
    %p76 = scmp.eq.s32.totalorder %s10, 0
    %p77 = por %p75, %p76
    %p78 = scmp.ne.s32.totalorder %s70, %s72
    %p79 = scmp.eq.s32.totalorder %s15, 1
    %p80 = por %p78, %p79
    %p81 = scmp.ne.s32.totalorder %s72, %s73
    %p82 = scmp.eq.s32.totalorder %s15, 0
    %p83 = por %p81, %p82
    %p84 = scmp.ne.s32.totalorder %s72, %s73
    %p85 = scmp.eq.s32.totalorder %s16, 1
    %p86 = por %p84, %p85
    %p88 = scmp.ne.s32.totalorder %s73, %s87
    %p89 = scmp.eq.s32.totalorder %s16, 0
    %p90 = por %p88, %p89
    %s92 = sadd.s32 %s91, 1
    %p95 = scmp.eq.s32.totalorder %s10, 1
    %p96 = scmp.ne.s32.totalorder %s91, %s93
    %p97 = scmp.eq.s32.totalorder %s10, 0
    %p98 = por %p96, %p97
    %p99 = scmp.ne.s32.totalorder %s91, %s93
    %p100 = scmp.eq.s32.totalorder %s15, 1
    %p101 = por %p99, %p100
    %p102 = scmp.ne.s32.totalorder %s93, %s94
    %p103 = scmp.eq.s32.totalorder %s15, 0
    %p104 = por %p102, %p103
    %p105 = scmp.ne.s32.totalorder %s93, %s94
    %p106 = scmp.eq.s32.totalorder %s16, 1
    %p107 = por %p105, %p106
    %p109 = scmp.ne.s32.totalorder %s94, %s108
    %p110 = scmp.eq.s32.totalorder %s16, 0
    %p111 = por %p109, %p110
    %s112 = ssub.s32 %s10, %s17
    %p113 = scmp.eq.s32.totalorder %s112, 0
    %s115 = sadd.s32 %s114, 1
    %s116 = scalar_select %p113, %s114, %s115
    %p119 = pneg %p113
    %p120 = scmp.eq.s32.totalorder %s10, 1
    %p121 = por %p119, %p120
    %p122 = scmp.ne.s32.totalorder %s114, %s117
    %p123 = scmp.eq.s32.totalorder %s10, 0
    %p124 = por %p122, %p123
    %p125 = scmp.ne.s32.totalorder %s114, %s117
    %p126 = scmp.eq.s32.totalorder %s15, 1
    %p127 = por %p125, %p126
    %p128 = scmp.ne.s32.totalorder %s117, %s118
    %p129 = scmp.eq.s32.totalorder %s15, 0
    %p130 = por %p128, %p129
    %p131 = scmp.ne.s32.totalorder %s117, %s118
    %p132 = scmp.eq.s32.totalorder %s16, 1
    %p133 = por %p131, %p132
    %p135 = scmp.ne.s32.totalorder %s118, %s134
    %p136 = scmp.eq.s32.totalorder %s16, 0
    %p137 = por %p135, %p136
    %p138 = scmp.le.s32.totalorder 1, %s10
    %p139 = scmp.lt.s32.totalorder %s10, 3
    %p140 = pnand %p138, %p139
    %p141 = pneg %p140
    // Predicated region
    $region9: #{conv_block_forward.3} parent=5 // pred_check
      _
    $region10: #{conv_block_forward.3} parent=5 // pred_check_branch
      %143 = sbr.rel (%p140) target = $region12
    $region11: #{conv_block_forward.3} parent=5 // pred_region
      %s144 = ssub.s32 %s10, 1
      // Predicated region
      $region13: #{conv_block_forward.3} parent=11 // pred_check
        %p145 = pneg %p83
      $region14: #{conv_block_forward.3} parent=11 // pred_check_branch
        %147 = sbr.rel (%p145) target = $region16
      $region15: #{conv_block_forward.3} parent=11 // pred_region
        _
      $region16: #{conv_block_forward.3} parent=11 // pred_fallthru
        _
      // Predicated region
      $region17: #{conv_block_forward.3} parent=11 // pred_check
        %p148 = pneg %p104
      $region18: #{conv_block_forward.3} parent=11 // pred_check_branch
        %150 = sbr.rel (%p148) target = $region20
      $region19: #{conv_block_forward.3} parent=11 // pred_region
        _
      $region20: #{conv_block_forward.3} parent=11 // pred_fallthru
        _
    $region12: #{conv_block_forward.3} parent=5 // pred_fallthru
      _
    %p151 = scmp.lt.s32.totalorder %s10, 2
    // Predicated region
    $region21: #{conv_block_forward.3} parent=5 // pred_check
      %p152 = pneg %p151
    $region22: #{conv_block_forward.3} parent=5 // pred_check_branch
      %154 = sbr.rel (%p152) target = $region24
    $region23: #{conv_block_forward.3} parent=5 // pred_region
      // Predicated region
      $region25: #{conv_block_forward.3} parent=23 // pred_check
        %p155 = pneg %p30
      $region26: #{conv_block_forward.3} parent=23 // pred_check_branch
        %157 = sbr.rel (%p155) target = $region28
      $region27: #{conv_block_forward.3} parent=23 // pred_region
        %p158 = scmp.lt.s32.totalorder %s10, 1
        %s159 = scalar_select %p158, %s10, 1
        %s160 = smul.addr %s159, 8
        %s161 = smul.addr %s160, 4
        %s162 = scalar_lea.vmem %s0, %s161
      $region28: #{conv_block_forward.3} parent=23 // pred_fallthru
        _
      // Predicated region
      $region29: #{conv_block_forward.3} parent=23 // pred_check
        %p163 = pneg %p56
      $region30: #{conv_block_forward.3} parent=23 // pred_check_branch
        %165 = sbr.rel (%p163) target = $region32
      $region31: #{conv_block_forward.3} parent=23 // pred_region
        %p166 = scmp.lt.s32.totalorder %s10, 1
        %s167 = scalar_select %p166, %s10, 1
        %s168 = smul.addr %s167, 8
        %s169 = smul.addr %s168, 4
        %s170 = scalar_lea.vmem %s1, %s169
      $region32: #{conv_block_forward.3} parent=23 // pred_fallthru
        _
    $region24: #{conv_block_forward.3} parent=5 // pred_fallthru
      _
    %p171 = scmp.le.s32.totalorder 1, %s10
    %p172 = scmp.lt.s32.totalorder %s10, 3
    %p173 = pnand %p171, %p172
    %p174 = pneg %p173
    // Predicated region
    $region33: #{conv_block_forward.3} parent=5 // pred_check
      _
    $region34: #{conv_block_forward.3} parent=5 // pred_check_branch
      %176 = sbr.rel (%p173) target = $region36
    $region35: #{conv_block_forward.3} parent=5 // pred_region
      %s177 = ssub.s32 %s10, 1
      %p178 = scmp.lt.s32.totalorder %s15, 1
      %s179 = scalar_select %p178, %s15, 1
      %s180 = smul.addr %s179, 8
      %s181 = smul.addr %s180, 4
      %s182 = scalar_lea.vmem %s0, %s181
      %p183 = pneg %p36
      %p184 = pneg %p33
      %p185 = scmp.lt.s32.totalorder %s15, 1
      %s186 = scalar_select %p185, %s15, 1
      %s187 = smul.addr %s186, 8
      %s188 = smul.addr %s187, 4
      %s189 = scalar_lea.vmem %s1, %s188
      %p190 = pneg %p62
      %p191 = pneg %p59
      %p192 = pneg %p83
      %p193 = pneg %p80
      %p194 = pneg %p104
      %p195 = pneg %p101
      %p196 = pneg %p130
      %p197 = pneg %p127
      %p198 = scmp.lt.s32.totalorder %s15, 1
      %s199 = scalar_select %p198, %s15, 1
      %s200 = smul.addr %s199, 8
      %s201 = smul.addr %s200, 8
      %s202 = scalar_lea.vmem %s4, %s201
      %p203 = scmp.lt.s32.totalorder %s15, 1
      %s204 = scalar_select %p203, %s15, 1
      %s205 = smul.addr %s204, 8
      %s206 = smul.addr %s205, 4
      %s207 = scalar_lea.vmem %s0, %s206
      %p208 = scmp.lt.s32.totalorder %s15, 1
      %s209 = scalar_select %p208, %s15, 1
      %s210 = smul.addr %s209, 8
      %s211 = smul.addr %s210, 4
      %s212 = scalar_lea.vmem %s1, %s211
      %p213 = scmp.lt.s32.totalorder %s15, 1
      %s214 = scalar_select %p213, %s15, 1
      %s215 = smul.addr %s214, 8
      %s216 = smul.addr %s215, 8
      %s217 = scalar_lea.vmem %s4, %s216
      %v218 = vld [vmem:[%s2] sm:$0x1]
      %v219 = vld [vmem:[%s3] sm:$0x1]
      %v220 = vld [vmem:[%s207] sm:$0xf]
      %v221 = vld [vmem:[%s207 + $0x4] sm:$0xf]
      %v222 = vld [vmem:[%s207 + $0x8] sm:$0xf]
      %v223 = vld [vmem:[%s207 + $0xc] sm:$0xf]
      %v224 = vld [vmem:[%s207 + $0x10] sm:$0xf]
      %v225 = vld [vmem:[%s207 + $0x14] sm:$0xf]
      %v226 = vld [vmem:[%s207 + $0x18] sm:$0xf]
      %v227 = vld [vmem:[%s207 + $0x1c] sm:$0xf]
      %v228 = vunpack.c.l.bf16 %v220
      %v229 = vunpack.c.l.bf16 %v221
      %v230 = vunpack.c.l.bf16 %v222
      %v231 = vunpack.c.l.bf16 %v223
      %v232 = vunpack.c.l.bf16 %v224
      %v233 = vunpack.c.l.bf16 %v225
      %v234 = vunpack.c.l.bf16 %v226
      %v235 = vunpack.c.l.bf16 %v227
      %v236 = vld [vmem:[%s212] sm:$0xf]
      %v237 = vld [vmem:[%s212 + $0x4] sm:$0xf]
      %v238 = vld [vmem:[%s212 + $0x8] sm:$0xf]
      %v239 = vld [vmem:[%s212 + $0xc] sm:$0xf]
      %v240 = vld [vmem:[%s212 + $0x10] sm:$0xf]
      %v241 = vld [vmem:[%s212 + $0x14] sm:$0xf]
      %v242 = vld [vmem:[%s212 + $0x18] sm:$0xf]
      %v243 = vld [vmem:[%s212 + $0x1c] sm:$0xf]
      %v244 = vunpack.c.l.bf16 %v236
      %v245 = vunpack.c.l.bf16 %v237
      %v246 = vunpack.c.l.bf16 %v238
      %v247 = vunpack.c.l.bf16 %v239
      %v248 = vunpack.c.l.bf16 %v240
      %v249 = vunpack.c.l.bf16 %v241
      %v250 = vunpack.c.l.bf16 %v242
      %v251 = vunpack.c.l.bf16 %v243
      %vm252 = vcmp.ge.f32.partialorder %v218, 0.0
      %v253 = vsel %vm252, 1, 0
      %v254 = vperm.slane %v253, 0
      %vm255 = vcmp.eq.s32.totalorder %v254, 1
      %v256 = vsel %vm255, %v228, %v244
      %v257 = vsel %vm255, %v229, %v245
      %v258 = vsel %vm255, %v230, %v246
      %v259 = vsel %vm255, %v231, %v247
      %v260 = vsel %vm255, %v232, %v248
      %v261 = vsel %vm255, %v233, %v249
      %v262 = vsel %vm255, %v234, %v250
      %v263 = vsel %vm255, %v235, %v251
      %v265 = vperm.slane %v218, 0
      %v267 = vmul.f32 %v256, %v265
      %v268 = vmul.f32 %v257, %v265
      %v269 = vmul.f32 %v258, %v265
      %v270 = vmul.f32 %v259, %v265
      %v271 = vmul.f32 %v260, %v265
      %v272 = vmul.f32 %v261, %v265
      %v273 = vmul.f32 %v262, %v265
      %v274 = vmul.f32 %v263, %v265
      %v276 = vperm.slane %v219, 0
      %v278 = vadd.f32 %v267, %v276
      %v279 = vadd.f32 %v268, %v276
      %v280 = vadd.f32 %v269, %v276
      %v281 = vadd.f32 %v270, %v276
      %v282 = vadd.f32 %v271, %v276
      %v283 = vadd.f32 %v272, %v276
      %v284 = vadd.f32 %v273, %v276
      %v285 = vadd.f32 %v274, %v276
      %286 = vst [vmem:[%s217] sm:$0xff] %v278
      %287 = vst [vmem:[%s217 + $0x8] sm:$0xff] %v279
      %288 = vst [vmem:[%s217 + $0x10] sm:$0xff] %v280
      %289 = vst [vmem:[%s217 + $0x18] sm:$0xff] %v281
      %290 = vst [vmem:[%s217 + $0x20] sm:$0xff] %v282
      %291 = vst [vmem:[%s217 + $0x28] sm:$0xff] %v283
      %292 = vst [vmem:[%s217 + $0x30] sm:$0xff] %v284
      %293 = vst [vmem:[%s217 + $0x38] sm:$0xff] %v285
      %p294 = scmp.lt.s32.totalorder %s15, 1
      %s295 = scalar_select %p294, %s15, 1
      %s296 = smul.addr %s295, 8
      %s297 = smul.addr %s296, 8
      %s298 = scalar_lea.vmem %s4, %s297
      // Predicated region
      $region37: #{conv_block_forward.3} parent=35 // pred_check
        %p299 = pneg %p127
      $region38: #{conv_block_forward.3} parent=35 // pred_check_branch
        %301 = sbr.rel (%p299) target = $region40
      $region39: #{conv_block_forward.3} parent=35 // pred_region
        _
      $region40: #{conv_block_forward.3} parent=35 // pred_fallthru
        _
    $region36: #{conv_block_forward.3} parent=5 // pred_fallthru
      _
    %p302 = scmp.le.s32.totalorder 2, %s10
    // Predicated region
    $region41: #{conv_block_forward.3} parent=5 // pred_check
      %p303 = pneg %p302
    $region42: #{conv_block_forward.3} parent=5 // pred_check_branch
      %305 = sbr.rel (%p303) target = $region44
    $region43: #{conv_block_forward.3} parent=5 // pred_region
      %s306 = ssub.s32 %s10, 2
      // Predicated region
      $region45: #{conv_block_forward.3} parent=43 // pred_check
        %p307 = pneg %p133
      $region46: #{conv_block_forward.3} parent=43 // pred_check_branch
        %309 = sbr.rel (%p307) target = $region48
      $region47: #{conv_block_forward.3} parent=43 // pred_region
        %p310 = scmp.lt.s32.totalorder %s16, 1
        %s311 = scalar_select %p310, %s16, 1
        %s312 = smul.addr %s311, 8
        %s313 = smul.addr %s312, 8
        %s314 = scalar_lea.vmem %s4, %s313
      $region48: #{conv_block_forward.3} parent=43 // pred_fallthru
        _
    $region44: #{conv_block_forward.3} parent=5 // pred_fallthru
      _
  $region6: #{conv_block_forward.3} parent=0 // loop_footer
    %s14 = sadd.s32 1, %s10
  $region7: #{conv_block_forward.3} parent=0 // loop_footer_branch
    %9 = sbr.rel target = $region3
  $region8: #{conv_block_forward.3} parent=0 // loop_exit
    _

// kernel: conv_block_forward.2
$region0: #{conv_block_forward.2}
  #allocation0 [shape = 'u32[]', space=smem, size = 0x4, offset = 0x4, fixed_abs, tag = 'smem constant byte address 0x4 - core index']
  #allocation1 [shape = 'u32[72,128]{1,0:T(1,128)}', space=vmem, size = 0x9000, scoped, tag = 'internal scratch']
  %s0 = inlined_call_operand.vmem [shape: bf16[2,18,18,4], index: 0, kind: input, shape index: {}]
  %s1 = inlined_call_operand.vmem [shape: bf16[36,128], index: 1, kind: input, shape index: {}]
  %s2 = inlined_call_operand.vmem [shape: f32[1,128], index: 2, kind: input, shape index: {}]
  %s3 = inlined_call_operand.vmem [shape: bf16[2,64,128], index: 3, kind: output, shape index: {0}]
  %s4 = inlined_call_operand.vmem [shape: bf16[2,64,128], index: 4, kind: output, shape index: {1}]
  %s5 = inlined_call_operand.vmem [shape: f32[2,1,8,128], index: 5, kind: output, shape index: {2}]
  %s6 = inlined_call_operand.vmem [shape: f32[2,1,8,128], index: 6, kind: output, shape index: {3}]
  %7 = xla_tuple %s3, %s4, %s5, %s6
  %s8 = sld [smem:[#allocation0]]
  $region69: #{conv_block_forward.2} parent=0
    _
  %s10 = ssub.s32 1, %s8
  %s11 = scalar_select 0, %s10, %s8
  loop: start=0, step=1, limit=4
  $region2: #{conv_block_forward.2} parent=0 // loop_pre_header
    _
  $region3: #{conv_block_forward.2} parent=0 // loop_header
    %s13 = sphi 0, %s17
    %p14 = scmp.ge.s32.totalorder %s13, 4
    %s20 = sphi 0, %s32
    %s21 = sphi 0, %s28
    %s22 = sphi 0, %s20
    %s23 = sphi 0, %s21
    %s24 = sphi 0, %s22
    %s25 = sphi 0, %s23
    %s35 = sphi 0, %s37
    %s38 = sphi 0, %s35
    %s39 = sphi 0, %s38
    %s55 = sphi 0, %s39
    %s59 = sphi 0, %s59
    %s61 = sphi 0, %s59
    %s62 = sphi 0, %s61
    %s76 = sphi 0, %s62
    %s80 = sphi 0, %s80
    %s82 = sphi 0, %s80
    %s83 = sphi 0, %s82
    %s97 = sphi 0, %s83
    %s105 = sphi 0, %s107
    %s108 = sphi 0, %s105
    %s109 = sphi 0, %s108
    %s125 = sphi 0, %s109
    %s133 = sphi 0, %s135
    %s136 = sphi 0, %s133
    %s137 = sphi 0, %s136
    %s153 = sphi 0, %s137
    %s161 = sphi 0, %s163
    %s164 = sphi 0, %s161
    %s165 = sphi 0, %s164
    %s181 = sphi 0, %s165
    %s189 = sphi 0, %s191
    %s192 = sphi 0, %s189
    %s193 = sphi 0, %s192
    %s209 = sphi 0, %s193
  $region4: #{conv_block_forward.2} parent=0 // loop_header_branch
    %16 = sbr.rel (%p14) target = $region8
  $region5: #{conv_block_forward.2} parent=0 // loop_body
    %s18 = ssub.s32 %s13, 1
    %s19 = ssub.s32 %s13, 2
    %s26 = sadd.s32 1, %s21
    %p27 = scmp.ge.s32.totalorder %s26, 1
    %s28 = scalar_select %p27, 0, %s26
    %s29 = sadd.s32 1, %s20
    %s30 = scalar_select %p27, %s29, %s20
    %p31 = scmp.ge.s32.totalorder %s30, 2
    %s32 = scalar_select %p31, 0, %s30
    %s33 = ssub.s32 %s20, %s32
    %p34 = scmp.eq.s32.totalorder %s33, 0
    %s36 = sadd.s32 %s35, 1
    %s37 = scalar_select %p34, %s35, %s36
    %p40 = pneg %p34
    %p41 = scmp.eq.s32.totalorder %s13, 1
    %p42 = por %p40, %p41
    %p43 = scmp.ne.s32.totalorder %s35, %s38
    %p44 = scmp.eq.s32.totalorder %s13, 0
    %p45 = por %p43, %p44
    %p46 = scmp.ne.s32.totalorder %s35, %s38
    %p47 = scmp.eq.s32.totalorder %s18, 1
    %p48 = por %p46, %p47
    %p49 = scmp.ne.s32.totalorder %s38, %s39
    %p50 = scmp.eq.s32.totalorder %s18, 0
    %p51 = por %p49, %p50
    %p52 = scmp.ne.s32.totalorder %s38, %s39
    %p53 = scmp.eq.s32.totalorder %s19, 1
    %p54 = por %p52, %p53
    %p56 = scmp.ne.s32.totalorder %s39, %s55
    %p57 = scmp.eq.s32.totalorder %s19, 0
    %p58 = por %p56, %p57
    %s60 = sadd.s32 %s59, 1
    %p63 = scmp.eq.s32.totalorder %s13, 1
    %p64 = scmp.ne.s32.totalorder %s59, %s61
    %p65 = scmp.eq.s32.totalorder %s13, 0
    %p66 = por %p64, %p65
    %p67 = scmp.ne.s32.totalorder %s59, %s61
    %p68 = scmp.eq.s32.totalorder %s18, 1
    %p69 = por %p67, %p68
    %p70 = scmp.ne.s32.totalorder %s61, %s62
    %p71 = scmp.eq.s32.totalorder %s18, 0
    %p72 = por %p70, %p71
    %p73 = scmp.ne.s32.totalorder %s61, %s62
    %p74 = scmp.eq.s32.totalorder %s19, 1
    %p75 = por %p73, %p74
    %p77 = scmp.ne.s32.totalorder %s62, %s76
    %p78 = scmp.eq.s32.totalorder %s19, 0
    %p79 = por %p77, %p78
    %s81 = sadd.s32 %s80, 1
    %p84 = scmp.eq.s32.totalorder %s13, 1
    %p85 = scmp.ne.s32.totalorder %s80, %s82
    %p86 = scmp.eq.s32.totalorder %s13, 0
    %p87 = por %p85, %p86
    %p88 = scmp.ne.s32.totalorder %s80, %s82
    %p89 = scmp.eq.s32.totalorder %s18, 1
    %p90 = por %p88, %p89
    %p91 = scmp.ne.s32.totalorder %s82, %s83
    %p92 = scmp.eq.s32.totalorder %s18, 0
    %p93 = por %p91, %p92
    %p94 = scmp.ne.s32.totalorder %s82, %s83
    %p95 = scmp.eq.s32.totalorder %s19, 1
    %p96 = por %p94, %p95
    %p98 = scmp.ne.s32.totalorder %s83, %s97
    %p99 = scmp.eq.s32.totalorder %s19, 0
    %p100 = por %p98, %p99
    %s101 = ssub.s32 %s20, %s32
    %s102 = ssub.s32 %s21, %s28
    %s103 = sor.u32 %s101, %s102
    %p104 = scmp.eq.s32.totalorder %s103, 0
    %s106 = sadd.s32 %s105, 1
    %s107 = scalar_select %p104, %s105, %s106
    %p110 = pneg %p104
    %p111 = scmp.eq.s32.totalorder %s13, 1
    %p112 = por %p110, %p111
    %p113 = scmp.ne.s32.totalorder %s105, %s108
    %p114 = scmp.eq.s32.totalorder %s13, 0
    %p115 = por %p113, %p114
    %p116 = scmp.ne.s32.totalorder %s105, %s108
    %p117 = scmp.eq.s32.totalorder %s18, 1
    %p118 = por %p116, %p117
    %p119 = scmp.ne.s32.totalorder %s108, %s109
    %p120 = scmp.eq.s32.totalorder %s18, 0
    %p121 = por %p119, %p120
    %p122 = scmp.ne.s32.totalorder %s108, %s109
    %p123 = scmp.eq.s32.totalorder %s19, 1
    %p124 = por %p122, %p123
    %p126 = scmp.ne.s32.totalorder %s109, %s125
    %p127 = scmp.eq.s32.totalorder %s19, 0
    %p128 = por %p126, %p127
    %s129 = ssub.s32 %s20, %s32
    %s130 = ssub.s32 %s21, %s28
    %s131 = sor.u32 %s129, %s130
    %p132 = scmp.eq.s32.totalorder %s131, 0
    %s134 = sadd.s32 %s133, 1
    %s135 = scalar_select %p132, %s133, %s134
    %p138 = pneg %p132
    %p139 = scmp.eq.s32.totalorder %s13, 1
    %p140 = por %p138, %p139
    %p141 = scmp.ne.s32.totalorder %s133, %s136
    %p142 = scmp.eq.s32.totalorder %s13, 0
    %p143 = por %p141, %p142
    %p144 = scmp.ne.s32.totalorder %s133, %s136
    %p145 = scmp.eq.s32.totalorder %s18, 1
    %p146 = por %p144, %p145
    %p147 = scmp.ne.s32.totalorder %s136, %s137
    %p148 = scmp.eq.s32.totalorder %s18, 0
    %p149 = por %p147, %p148
    %p150 = scmp.ne.s32.totalorder %s136, %s137
    %p151 = scmp.eq.s32.totalorder %s19, 1
    %p152 = por %p150, %p151
    %p154 = scmp.ne.s32.totalorder %s137, %s153
    %p155 = scmp.eq.s32.totalorder %s19, 0
    %p156 = por %p154, %p155
    %s157 = ssub.s32 %s20, %s32
    %s158 = ssub.s32 %s21, %s28
    %s159 = sor.u32 %s157, %s158
    %p160 = scmp.eq.s32.totalorder %s159, 0
    %s162 = sadd.s32 %s161, 1
    %s163 = scalar_select %p160, %s161, %s162
    %p166 = pneg %p160
    %p167 = scmp.eq.s32.totalorder %s13, 1
    %p168 = por %p166, %p167
    %p169 = scmp.ne.s32.totalorder %s161, %s164
    %p170 = scmp.eq.s32.totalorder %s13, 0
    %p171 = por %p169, %p170
    %p172 = scmp.ne.s32.totalorder %s161, %s164
    %p173 = scmp.eq.s32.totalorder %s18, 1
    %p174 = por %p172, %p173
    %p175 = scmp.ne.s32.totalorder %s164, %s165
    %p176 = scmp.eq.s32.totalorder %s18, 0
    %p177 = por %p175, %p176
    %p178 = scmp.ne.s32.totalorder %s164, %s165
    %p179 = scmp.eq.s32.totalorder %s19, 1
    %p180 = por %p178, %p179
    %p182 = scmp.ne.s32.totalorder %s165, %s181
    %p183 = scmp.eq.s32.totalorder %s19, 0
    %p184 = por %p182, %p183
    %s185 = ssub.s32 %s20, %s32
    %s186 = ssub.s32 %s21, %s28
    %s187 = sor.u32 %s185, %s186
    %p188 = scmp.eq.s32.totalorder %s187, 0
    %s190 = sadd.s32 %s189, 1
    %s191 = scalar_select %p188, %s189, %s190
    %p194 = pneg %p188
    %p195 = scmp.eq.s32.totalorder %s13, 1
    %p196 = por %p194, %p195
    %p197 = scmp.ne.s32.totalorder %s189, %s192
    %p198 = scmp.eq.s32.totalorder %s13, 0
    %p199 = por %p197, %p198
    %p200 = scmp.ne.s32.totalorder %s189, %s192
    %p201 = scmp.eq.s32.totalorder %s18, 1
    %p202 = por %p200, %p201
    %p203 = scmp.ne.s32.totalorder %s192, %s193
    %p204 = scmp.eq.s32.totalorder %s18, 0
    %p205 = por %p203, %p204
    %p206 = scmp.ne.s32.totalorder %s192, %s193
    %p207 = scmp.eq.s32.totalorder %s19, 1
    %p208 = por %p206, %p207
    %p210 = scmp.ne.s32.totalorder %s193, %s209
    %p211 = scmp.eq.s32.totalorder %s19, 0
    %p212 = por %p210, %p211
    %p213 = scmp.le.s32.totalorder 1, %s13
    %p214 = scmp.lt.s32.totalorder %s13, 3
    %p215 = pnand %p213, %p214
    %p216 = pneg %p215
    // Predicated region
    $region9: #{conv_block_forward.2} parent=5 // pred_check
      _
    $region10: #{conv_block_forward.2} parent=5 // pred_check_branch
      %218 = sbr.rel (%p215) target = $region12
    $region11: #{conv_block_forward.2} parent=5 // pred_region
      %s219 = ssub.s32 %s13, 1
      // Predicated region
      $region13: #{conv_block_forward.2} parent=11 // pred_check
        %p220 = pneg %p72
      $region14: #{conv_block_forward.2} parent=11 // pred_check_branch
        %222 = sbr.rel (%p220) target = $region16
      $region15: #{conv_block_forward.2} parent=11 // pred_region
        _
      $region16: #{conv_block_forward.2} parent=11 // pred_fallthru
        _
      // Predicated region
      $region17: #{conv_block_forward.2} parent=11 // pred_check
        %p223 = pneg %p93
      $region18: #{conv_block_forward.2} parent=11 // pred_check_branch
        %225 = sbr.rel (%p223) target = $region20
      $region19: #{conv_block_forward.2} parent=11 // pred_region
        _
      $region20: #{conv_block_forward.2} parent=11 // pred_fallthru
        _
    $region12: #{conv_block_forward.2} parent=5 // pred_fallthru
      _
    %p226 = scmp.lt.s32.totalorder %s13, 2
    // Predicated region
    $region21: #{conv_block_forward.2} parent=5 // pred_check
      %p227 = pneg %p226
    $region22: #{conv_block_forward.2} parent=5 // pred_check_branch
      %229 = sbr.rel (%p227) target = $region24
    $region23: #{conv_block_forward.2} parent=5 // pred_region
      // Predicated region
      $region25: #{conv_block_forward.2} parent=23 // pred_check
        %p230 = pneg %p45
      $region26: #{conv_block_forward.2} parent=23 // pred_check_branch
        %232 = sbr.rel (%p230) target = $region28
      $region27: #{conv_block_forward.2} parent=23 // pred_region
        %p233 = scmp.lt.s32.totalorder %s20, 1
        %s234 = scalar_select %p233, %s20, 1
        %s235 = smul.addr %s234, 54
        %s236 = smul.addr %s235, 4
        %s237 = scalar_lea.vmem %s0, %s236
      $region28: #{conv_block_forward.2} parent=23 // pred_fallthru
        _
    $region24: #{conv_block_forward.2} parent=5 // pred_fallthru
      _
    %p238 = scmp.le.s32.totalorder 1, %s13
    %p239 = scmp.lt.s32.totalorder %s13, 3
    %p240 = pnand %p238, %p239
    %p241 = pneg %p240
    // Predicated region
    $region29: #{conv_block_forward.2} parent=5 // pred_check
      _
    $region30: #{conv_block_forward.2} parent=5 // pred_check_branch
      %243 = sbr.rel (%p240) target = $region32
    $region31: #{conv_block_forward.2} parent=5 // pred_region
      %s244 = ssub.s32 %s13, 1
      %p245 = scmp.lt.s32.totalorder %s22, 1
      %s246 = scalar_select %p245, %s22, 1
      %s247 = smul.addr %s246, 54
      %s248 = smul.addr %s247, 4
      %s249 = scalar_lea.vmem %s0, %s248
      %p250 = pneg %p51
      %p251 = pneg %p48
      %p252 = pneg %p72
      %p253 = pneg %p69
      %p254 = pneg %p93
      %p255 = pneg %p90
      %p256 = pneg %p121
      %p257 = pneg %p118
      %s258 = smul.u32 8, %s23
      %p259 = scmp.lt.s32.totalorder %s22, 1
      %s260 = scalar_select %p259, %s22, 1
      %p261 = scmp.lt.s32.totalorder %s258, 7
      %s262 = scalar_select %p261, %s258, 7
      %s263 = smul.addr %s260, 8
      %s264 = sadd.s32 %s262, %s263
      %s265 = smul.addr %s264, 4
      %s266 = scalar_lea.vmem %s3, %s265
      %p267 = pneg %p149
      %p268 = pneg %p146
      %s269 = smul.u32 8, %s23
      %p270 = scmp.lt.s32.totalorder %s22, 1
      %s271 = scalar_select %p270, %s22, 1
      %p272 = scmp.lt.s32.totalorder %s269, 7
      %s273 = scalar_select %p272, %s269, 7
      %s274 = smul.addr %s271, 8
      %s275 = sadd.s32 %s273, %s274
      %s276 = smul.addr %s275, 4
      %s277 = scalar_lea.vmem %s4, %s276
      %p278 = pneg %p177
      %p279 = pneg %p174
      %p280 = scmp.lt.s32.totalorder %s22, 1
      %s281 = scalar_select %p280, %s22, 1
      %p282 = scmp.lt.s32.totalorder %s23, 0
      %s283 = scalar_select %p282, %s23, 0
      %s284 = sadd.s32 %s283, %s281
      %s285 = smul.addr %s284, 8
      %s286 = scalar_lea.vmem %s5, %s285
      %p287 = pneg %p205
      %p288 = pneg %p202
      %p289 = scmp.lt.s32.totalorder %s22, 1
      %s290 = scalar_select %p289, %s22, 1
      %p291 = scmp.lt.s32.totalorder %s23, 0
      %s292 = scalar_select %p291, %s23, 0
      %s293 = sadd.s32 %s292, %s290
      %s294 = smul.addr %s293, 8
      %s295 = scalar_lea.vmem %s6, %s294
      %p296 = scmp.lt.s32.totalorder %s22, 1
      %s297 = scalar_select %p296, %s22, 1
      %s298 = smul.addr %s297, 54
      %s299 = smul.addr %s298, 4
      %s300 = scalar_lea.vmem %s0, %s299
      %s301 = smul.u32 8, %s23
      %p302 = scmp.lt.s32.totalorder %s22, 1
      %s303 = scalar_select %p302, %s22, 1
      %p304 = scmp.lt.s32.totalorder %s301, 7
      %s305 = scalar_select %p304, %s301, 7
      %s306 = smul.addr %s303, 8
      %s307 = sadd.s32 %s305, %s306
      %s308 = smul.addr %s307, 4
      %s309 = scalar_lea.vmem %s3, %s308
      %s310 = smul.u32 8, %s23
      %s311 = smul.u32 8, %s23
      %p312 = scmp.lt.s32.totalorder %s22, 1
      %s313 = scalar_select %p312, %s22, 1
      %p314 = scmp.lt.s32.totalorder %s311, 7
      %s315 = scalar_select %p314, %s311, 7
      %s316 = smul.addr %s313, 8
      %s317 = sadd.s32 %s315, %s316
      %s318 = smul.addr %s317, 4
      %s319 = scalar_lea.vmem %s4, %s318
      %s320 = smul.u32 8, %s23
      %p321 = scmp.lt.s32.totalorder %s22, 1
      %s322 = scalar_select %p321, %s22, 1
      %p323 = scmp.lt.s32.totalorder %s23, 0
      %s324 = scalar_select %p323, %s23, 0
      %s325 = sadd.s32 %s324, %s322
      %s326 = smul.addr %s325, 8
      %s327 = scalar_lea.vmem %s5, %s326
      %p328 = scmp.lt.s32.totalorder %s22, 1
      %s329 = scalar_select %p328, %s22, 1
      %p330 = scmp.lt.s32.totalorder %s23, 0
      %s331 = scalar_select %p330, %s23, 0
      %s332 = sadd.s32 %s331, %s329
      %s333 = smul.addr %s332, 8
      %s334 = scalar_lea.vmem %s6, %s333
      %s336 = smul.u32 %s23, 16
      %s337 = smul.u32 %s336, 3
      %s338 = smul.addr %s337, 4
      %s339 = scalar_lea.vmem %s300, %s338
      %v340 = vld [vmem:[%s339] sm:$0xf]
      %v341 = vld [vmem:[%s339 + $0x4] sm:$0xf]
      %v342 = vld [vmem:[%s339 + $0x8] sm:$0x1]
      %v343 = vld [vmem:[%s339 + $0xc] sm:$0xf]
      %v344 = vld [vmem:[%s339 + $0x10] sm:$0xf]
      %v345 = vld [vmem:[%s339 + $0x14] sm:$0x1]
      %v346 = vld [vmem:[%s339 + $0x18] sm:$0xf]
      %v347 = vld [vmem:[%s339 + $0x1c] sm:$0xf]
      %v348 = vld [vmem:[%s339 + $0x20] sm:$0x1]
      %v349 = vld [vmem:[%s339 + $0x24] sm:$0xf]
      %v350 = vld [vmem:[%s339 + $0x28] sm:$0xf]
      %v351 = vld [vmem:[%s339 + $0x2c] sm:$0x1]
      %v352 = vld [vmem:[%s339 + $0x30] sm:$0xf]
      %v353 = vld [vmem:[%s339 + $0x34] sm:$0xf]
      %v354 = vld [vmem:[%s339 + $0x38] sm:$0x1]
      %v355 = vld [vmem:[%s339 + $0x3c] sm:$0xf]
      %v356 = vld [vmem:[%s339 + $0x40] sm:$0xf]
      %v357 = vld [vmem:[%s339 + $0x44] sm:$0x1]
      %v358 = vld [vmem:[%s339 + $0x48] sm:$0xf]
      %v359 = vld [vmem:[%s339 + $0x4c] sm:$0xf]
      %v360 = vld [vmem:[%s339 + $0x50] sm:$0x1]
      %v361 = vld [vmem:[%s339 + $0x54] sm:$0xf]
      %v362 = vld [vmem:[%s339 + $0x58] sm:$0xf]
      %v363 = vld [vmem:[%s339 + $0x5c] sm:$0x1]
      %v364 = vld [vmem:[%s339 + $0x60] sm:$0xf]
      %v365 = vld [vmem:[%s339 + $0x64] sm:$0xf]
      %v366 = vld [vmem:[%s339 + $0x68] sm:$0x1]
      %v367 = vld [vmem:[%s339 + $0x6c] sm:$0xf]
      %v368 = vld [vmem:[%s339 + $0x70] sm:$0xf]
      %v369 = vld [vmem:[%s339 + $0x74] sm:$0x1]
      %v370 = vld [vmem:[%s339 + $0x78] sm:$0xf]
      %v371 = vld [vmem:[%s339 + $0x7c] sm:$0xf]
      %v372 = vld [vmem:[%s339 + $0x80] sm:$0x1]
      %v373 = vld [vmem:[%s339 + $0x84] sm:$0xf]
      %v374 = vld [vmem:[%s339 + $0x88] sm:$0xf]
      %v375 = vld [vmem:[%s339 + $0x8c] sm:$0x1]
      %v376 = vld [vmem:[%s339 + $0x90] sm:$0xf]
      %v377 = vld [vmem:[%s339 + $0x94] sm:$0xf]
      %v378 = vld [vmem:[%s339 + $0x98] sm:$0x1]
      %v379 = vld [vmem:[%s339 + $0x9c] sm:$0xf]
      %v380 = vld [vmem:[%s339 + $0xa0] sm:$0xf]
      %v381 = vld [vmem:[%s339 + $0xa4] sm:$0x1]
      %v382 = vld [vmem:[%s339 + $0xa8] sm:$0xf]
      %v383 = vld [vmem:[%s339 + $0xac] sm:$0xf]
      %v384 = vld [vmem:[%s339 + $0xb0] sm:$0x1]
      %v385 = vld [vmem:[%s339 + $0xb4] sm:$0xf]
      %v386 = vld [vmem:[%s339 + $0xb8] sm:$0xf]
      %v387 = vld [vmem:[%s339 + $0xbc] sm:$0x1]
      %v388 = vunpack.c.l.bf16 %v340
      %v389 = vunpack.c.l.bf16 %v341
      %v390 = vunpack.c.l.bf16 %v342
      %v391 = vunpack.c.l.bf16 %v343
      %v392 = vunpack.c.l.bf16 %v344
      %v393 = vunpack.c.l.bf16 %v345
      %v394 = vunpack.c.l.bf16 %v346
      %v395 = vunpack.c.l.bf16 %v347
      %v396 = vunpack.c.l.bf16 %v348
      %v397 = vunpack.c.l.bf16 %v349
      %v398 = vunpack.c.l.bf16 %v350
      %v399 = vunpack.c.l.bf16 %v351
      %v400 = vunpack.c.l.bf16 %v352
      %v401 = vunpack.c.l.bf16 %v353
      %v402 = vunpack.c.l.bf16 %v354
      %v403 = vunpack.c.l.bf16 %v355
      %v404 = vunpack.c.l.bf16 %v356
      %v405 = vunpack.c.l.bf16 %v357
      %v406 = vunpack.c.l.bf16 %v358
      %v407 = vunpack.c.l.bf16 %v359
      %v408 = vunpack.c.l.bf16 %v360
      %v409 = vunpack.c.l.bf16 %v361
      %v410 = vunpack.c.l.bf16 %v362
      %v411 = vunpack.c.l.bf16 %v363
      %v412 = vunpack.c.l.bf16 %v364
      %v413 = vunpack.c.l.bf16 %v365
      %v414 = vunpack.c.l.bf16 %v366
      %v415 = vunpack.c.l.bf16 %v367
      %v416 = vunpack.c.l.bf16 %v368
      %v417 = vunpack.c.l.bf16 %v369
      %v418 = vunpack.c.l.bf16 %v370
      %v419 = vunpack.c.l.bf16 %v371
      %v420 = vunpack.c.l.bf16 %v372
      %v421 = vunpack.c.l.bf16 %v373
      %v422 = vunpack.c.l.bf16 %v374
      %v423 = vunpack.c.l.bf16 %v375
      %v424 = vunpack.c.l.bf16 %v376
      %v425 = vunpack.c.l.bf16 %v377
      %v426 = vunpack.c.l.bf16 %v378
      %v427 = vunpack.c.l.bf16 %v379
      %v428 = vunpack.c.l.bf16 %v380
      %v429 = vunpack.c.l.bf16 %v381
      %v430 = vunpack.c.l.bf16 %v382
      %v431 = vunpack.c.l.bf16 %v383
      %v432 = vunpack.c.l.bf16 %v384
      %v433 = vunpack.c.l.bf16 %v385
      %v434 = vunpack.c.l.bf16 %v386
      %v435 = vunpack.c.l.bf16 %v387
      %s436 = sadd.s32 %s336, 1
      %s437 = smul.u32 %s436, 3
      %s438 = smul.addr %s437, 4
      %s439 = scalar_lea.vmem %s300, %s438
      %v440 = vld [vmem:[%s439] sm:$0xf]
      %v441 = vld [vmem:[%s439 + $0x4] sm:$0xf]
      %v442 = vld [vmem:[%s439 + $0x8] sm:$0x1]
      %v443 = vld [vmem:[%s439 + $0xc] sm:$0xf]
      %v444 = vld [vmem:[%s439 + $0x10] sm:$0xf]
      %v445 = vld [vmem:[%s439 + $0x14] sm:$0x1]
      %v446 = vld [vmem:[%s439 + $0x18] sm:$0xf]
      %v447 = vld [vmem:[%s439 + $0x1c] sm:$0xf]
      %v448 = vld [vmem:[%s439 + $0x20] sm:$0x1]
      %v449 = vld [vmem:[%s439 + $0x24] sm:$0xf]
      %v450 = vld [vmem:[%s439 + $0x28] sm:$0xf]
      %v451 = vld [vmem:[%s439 + $0x2c] sm:$0x1]
      %v452 = vld [vmem:[%s439 + $0x30] sm:$0xf]
      %v453 = vld [vmem:[%s439 + $0x34] sm:$0xf]
      %v454 = vld [vmem:[%s439 + $0x38] sm:$0x1]
      %v455 = vld [vmem:[%s439 + $0x3c] sm:$0xf]
      %v456 = vld [vmem:[%s439 + $0x40] sm:$0xf]
      %v457 = vld [vmem:[%s439 + $0x44] sm:$0x1]
      %v458 = vld [vmem:[%s439 + $0x48] sm:$0xf]
      %v459 = vld [vmem:[%s439 + $0x4c] sm:$0xf]
      %v460 = vld [vmem:[%s439 + $0x50] sm:$0x1]
      %v461 = vld [vmem:[%s439 + $0x54] sm:$0xf]
      %v462 = vld [vmem:[%s439 + $0x58] sm:$0xf]
      %v463 = vld [vmem:[%s439 + $0x5c] sm:$0x1]
      %v464 = vld [vmem:[%s439 + $0x60] sm:$0xf]
      %v465 = vld [vmem:[%s439 + $0x64] sm:$0xf]
      %v466 = vld [vmem:[%s439 + $0x68] sm:$0x1]
      %v467 = vld [vmem:[%s439 + $0x6c] sm:$0xf]
      %v468 = vld [vmem:[%s439 + $0x70] sm:$0xf]
      %v469 = vld [vmem:[%s439 + $0x74] sm:$0x1]
      %v470 = vld [vmem:[%s439 + $0x78] sm:$0xf]
      %v471 = vld [vmem:[%s439 + $0x7c] sm:$0xf]
      %v472 = vld [vmem:[%s439 + $0x80] sm:$0x1]
      %v473 = vld [vmem:[%s439 + $0x84] sm:$0xf]
      %v474 = vld [vmem:[%s439 + $0x88] sm:$0xf]
      %v475 = vld [vmem:[%s439 + $0x8c] sm:$0x1]
      %v476 = vld [vmem:[%s439 + $0x90] sm:$0xf]
      %v477 = vld [vmem:[%s439 + $0x94] sm:$0xf]
      %v478 = vld [vmem:[%s439 + $0x98] sm:$0x1]
      %v479 = vld [vmem:[%s439 + $0x9c] sm:$0xf]
      %v480 = vld [vmem:[%s439 + $0xa0] sm:$0xf]
      %v481 = vld [vmem:[%s439 + $0xa4] sm:$0x1]
      %v482 = vld [vmem:[%s439 + $0xa8] sm:$0xf]
      %v483 = vld [vmem:[%s439 + $0xac] sm:$0xf]
      %v484 = vld [vmem:[%s439 + $0xb0] sm:$0x1]
      %v485 = vld [vmem:[%s439 + $0xb4] sm:$0xf]
      %v486 = vld [vmem:[%s439 + $0xb8] sm:$0xf]
      %v487 = vld [vmem:[%s439 + $0xbc] sm:$0x1]
      %v488 = vunpack.c.l.bf16 %v440
      %v489 = vunpack.c.l.bf16 %v441
      %v490 = vunpack.c.l.bf16 %v442
      %v491 = vunpack.c.l.bf16 %v443
      %v492 = vunpack.c.l.bf16 %v444
      %v493 = vunpack.c.l.bf16 %v445
      %v494 = vunpack.c.l.bf16 %v446
      %v495 = vunpack.c.l.bf16 %v447
      %v496 = vunpack.c.l.bf16 %v448
      %v497 = vunpack.c.l.bf16 %v449
      %v498 = vunpack.c.l.bf16 %v450
      %v499 = vunpack.c.l.bf16 %v451
      %v500 = vunpack.c.l.bf16 %v452
      %v501 = vunpack.c.l.bf16 %v453
      %v502 = vunpack.c.l.bf16 %v454
      %v503 = vunpack.c.l.bf16 %v455
      %v504 = vunpack.c.l.bf16 %v456
      %v505 = vunpack.c.l.bf16 %v457
      %v506 = vunpack.c.l.bf16 %v458
      %v507 = vunpack.c.l.bf16 %v459
      %v508 = vunpack.c.l.bf16 %v460
      %v509 = vunpack.c.l.bf16 %v461
      %v510 = vunpack.c.l.bf16 %v462
      %v511 = vunpack.c.l.bf16 %v463
      %v512 = vunpack.c.l.bf16 %v464
      %v513 = vunpack.c.l.bf16 %v465
      %v514 = vunpack.c.l.bf16 %v466
      %v515 = vunpack.c.l.bf16 %v467
      %v516 = vunpack.c.l.bf16 %v468
      %v517 = vunpack.c.l.bf16 %v469
      %v518 = vunpack.c.l.bf16 %v470
      %v519 = vunpack.c.l.bf16 %v471
      %v520 = vunpack.c.l.bf16 %v472
      %v521 = vunpack.c.l.bf16 %v473
      %v522 = vunpack.c.l.bf16 %v474
      %v523 = vunpack.c.l.bf16 %v475
      %v524 = vunpack.c.l.bf16 %v476
      %v525 = vunpack.c.l.bf16 %v477
      %v526 = vunpack.c.l.bf16 %v478
      %v527 = vunpack.c.l.bf16 %v479
      %v528 = vunpack.c.l.bf16 %v480
      %v529 = vunpack.c.l.bf16 %v481
      %v530 = vunpack.c.l.bf16 %v482
      %v531 = vunpack.c.l.bf16 %v483
      %v532 = vunpack.c.l.bf16 %v484
      %v533 = vunpack.c.l.bf16 %v485
      %v534 = vunpack.c.l.bf16 %v486
      %v535 = vunpack.c.l.bf16 %v487
      %s536 = sadd.s32 %s336, 2
      %s537 = smul.u32 %s536, 3
      %s538 = smul.addr %s537, 4
      %s539 = scalar_lea.vmem %s300, %s538
      %v540 = vld [vmem:[%s539] sm:$0xf]
      %v541 = vld [vmem:[%s539 + $0x4] sm:$0xf]
      %v542 = vld [vmem:[%s539 + $0x8] sm:$0x1]
      %v543 = vld [vmem:[%s539 + $0xc] sm:$0xf]
      %v544 = vld [vmem:[%s539 + $0x10] sm:$0xf]
      %v545 = vld [vmem:[%s539 + $0x14] sm:$0x1]
      %v546 = vld [vmem:[%s539 + $0x18] sm:$0xf]
      %v547 = vld [vmem:[%s539 + $0x1c] sm:$0xf]
      %v548 = vld [vmem:[%s539 + $0x20] sm:$0x1]
      %v549 = vld [vmem:[%s539 + $0x24] sm:$0xf]
      %v550 = vld [vmem:[%s539 + $0x28] sm:$0xf]
      %v551 = vld [vmem:[%s539 + $0x2c] sm:$0x1]
      %v552 = vld [vmem:[%s539 + $0x30] sm:$0xf]
      %v553 = vld [vmem:[%s539 + $0x34] sm:$0xf]
      %v554 = vld [vmem:[%s539 + $0x38] sm:$0x1]
      %v555 = vld [vmem:[%s539 + $0x3c] sm:$0xf]
      %v556 = vld [vmem:[%s539 + $0x40] sm:$0xf]
      %v557 = vld [vmem:[%s539 + $0x44] sm:$0x1]
      %v558 = vld [vmem:[%s539 + $0x48] sm:$0xf]
      %v559 = vld [vmem:[%s539 + $0x4c] sm:$0xf]
      %v560 = vld [vmem:[%s539 + $0x50] sm:$0x1]
      %v561 = vld [vmem:[%s539 + $0x54] sm:$0xf]
      %v562 = vld [vmem:[%s539 + $0x58] sm:$0xf]
      %v563 = vld [vmem:[%s539 + $0x5c] sm:$0x1]
      %v564 = vld [vmem:[%s539 + $0x60] sm:$0xf]
      %v565 = vld [vmem:[%s539 + $0x64] sm:$0xf]
      %v566 = vld [vmem:[%s539 + $0x68] sm:$0x1]
      %v567 = vld [vmem:[%s539 + $0x6c] sm:$0xf]
      %v568 = vld [vmem:[%s539 + $0x70] sm:$0xf]
      %v569 = vld [vmem:[%s539 + $0x74] sm:$0x1]
      %v570 = vld [vmem:[%s539 + $0x78] sm:$0xf]
      %v571 = vld [vmem:[%s539 + $0x7c] sm:$0xf]
      %v572 = vld [vmem:[%s539 + $0x80] sm:$0x1]
      %v573 = vld [vmem:[%s539 + $0x84] sm:$0xf]
      %v574 = vld [vmem:[%s539 + $0x88] sm:$0xf]
      %v575 = vld [vmem:[%s539 + $0x8c] sm:$0x1]
      %v576 = vld [vmem:[%s539 + $0x90] sm:$0xf]
      %v577 = vld [vmem:[%s539 + $0x94] sm:$0xf]
      %v578 = vld [vmem:[%s539 + $0x98] sm:$0x1]
      %v579 = vld [vmem:[%s539 + $0x9c] sm:$0xf]
      %v580 = vld [vmem:[%s539 + $0xa0] sm:$0xf]
      %v581 = vld [vmem:[%s539 + $0xa4] sm:$0x1]
      %v582 = vld [vmem:[%s539 + $0xa8] sm:$0xf]
      %v583 = vld [vmem:[%s539 + $0xac] sm:$0xf]
      %v584 = vld [vmem:[%s539 + $0xb0] sm:$0x1]
      %v585 = vld [vmem:[%s539 + $0xb4] sm:$0xf]
      %v586 = vld [vmem:[%s539 + $0xb8] sm:$0xf]
      %v587 = vld [vmem:[%s539 + $0xbc] sm:$0x1]
      %v588 = vunpack.c.l.bf16 %v540
      %v589 = vunpack.c.l.bf16 %v541
      %v590 = vunpack.c.l.bf16 %v542
      %v591 = vunpack.c.l.bf16 %v543
      %v592 = vunpack.c.l.bf16 %v544
      %v593 = vunpack.c.l.bf16 %v545
      %v594 = vunpack.c.l.bf16 %v546
      %v595 = vunpack.c.l.bf16 %v547
      %v596 = vunpack.c.l.bf16 %v548
      %v597 = vunpack.c.l.bf16 %v549
      %v598 = vunpack.c.l.bf16 %v550
      %v599 = vunpack.c.l.bf16 %v551
      %v600 = vunpack.c.l.bf16 %v552
      %v601 = vunpack.c.l.bf16 %v553
      %v602 = vunpack.c.l.bf16 %v554
      %v603 = vunpack.c.l.bf16 %v555
      %v604 = vunpack.c.l.bf16 %v556
      %v605 = vunpack.c.l.bf16 %v557
      %v606 = vunpack.c.l.bf16 %v558
      %v607 = vunpack.c.l.bf16 %v559
      %v608 = vunpack.c.l.bf16 %v560
      %v609 = vunpack.c.l.bf16 %v561
      %v610 = vunpack.c.l.bf16 %v562
      %v611 = vunpack.c.l.bf16 %v563
      %v612 = vunpack.c.l.bf16 %v564
      %v613 = vunpack.c.l.bf16 %v565
      %v614 = vunpack.c.l.bf16 %v566
      %v615 = vunpack.c.l.bf16 %v567
      %v616 = vunpack.c.l.bf16 %v568
      %v617 = vunpack.c.l.bf16 %v569
      %v618 = vunpack.c.l.bf16 %v570
      %v619 = vunpack.c.l.bf16 %v571
      %v620 = vunpack.c.l.bf16 %v572
      %v621 = vunpack.c.l.bf16 %v573
      %v622 = vunpack.c.l.bf16 %v574
      %v623 = vunpack.c.l.bf16 %v575
      %v624 = vunpack.c.l.bf16 %v576
      %v625 = vunpack.c.l.bf16 %v577
      %v626 = vunpack.c.l.bf16 %v578
      %v627 = vunpack.c.l.bf16 %v579
      %v628 = vunpack.c.l.bf16 %v580
      %v629 = vunpack.c.l.bf16 %v581
      %v630 = vunpack.c.l.bf16 %v582
      %v631 = vunpack.c.l.bf16 %v583
      %v632 = vunpack.c.l.bf16 %v584
      %v633 = vunpack.c.l.bf16 %v585
      %v634 = vunpack.c.l.bf16 %v586
      %v635 = vunpack.c.l.bf16 %v587
      %vm684 = vcmask 1046528
      %v685 = vrot.slane %v388, 1
      %v686 = vrot.slane %v389, 1
      %v687 = vsel %vm684, %v685, %v686
      %v688 = vrot.slane %v390, 1
      %v689 = vsel %vm684, %v686, %v688
      %v690 = vrot.slane %v391, 1
      %v691 = vrot.slane %v392, 1
      %v692 = vsel %vm684, %v690, %v691
      %v693 = vrot.slane %v393, 1
      %v694 = vsel %vm684, %v691, %v693
      %v695 = vrot.slane %v394, 1
      %v696 = vrot.slane %v395, 1
      %v697 = vsel %vm684, %v695, %v696
      %v698 = vrot.slane %v396, 1
      %v699 = vsel %vm684, %v696, %v698
      %v700 = vrot.slane %v397, 1
      %v701 = vrot.slane %v398, 1
      %v702 = vsel %vm684, %v700, %v701
      %v703 = vrot.slane %v399, 1
      %v704 = vsel %vm684, %v701, %v703
      %v705 = vrot.slane %v400, 1
      %v706 = vrot.slane %v401, 1
      %v707 = vsel %vm684, %v705, %v706
      %v708 = vrot.slane %v402, 1
      %v709 = vsel %vm684, %v706, %v708
      %v710 = vrot.slane %v403, 1
      %v711 = vrot.slane %v404, 1
      %v712 = vsel %vm684, %v710, %v711
      %v713 = vrot.slane %v405, 1
      %v714 = vsel %vm684, %v711, %v713
      %v715 = vrot.slane %v406, 1
      %v716 = vrot.slane %v407, 1
      %v717 = vsel %vm684, %v715, %v716
      %v718 = vrot.slane %v408, 1
      %v719 = vsel %vm684, %v716, %v718
      %v720 = vrot.slane %v409, 1
      %v721 = vrot.slane %v410, 1
      %v722 = vsel %vm684, %v720, %v721
      %v723 = vrot.slane %v411, 1
      %v724 = vsel %vm684, %v721, %v723
      %v725 = vrot.slane %v412, 1
      %v726 = vrot.slane %v413, 1
      %v727 = vsel %vm684, %v725, %v726
      %v728 = vrot.slane %v414, 1
      %v729 = vsel %vm684, %v726, %v728
      %v730 = vrot.slane %v415, 1
      %v731 = vrot.slane %v416, 1
      %v732 = vsel %vm684, %v730, %v731
      %v733 = vrot.slane %v417, 1
      %v734 = vsel %vm684, %v731, %v733
      %v735 = vrot.slane %v418, 1
      %v736 = vrot.slane %v419, 1
      %v737 = vsel %vm684, %v735, %v736
      %v738 = vrot.slane %v420, 1
      %v739 = vsel %vm684, %v736, %v738
      %v740 = vrot.slane %v421, 1
      %v741 = vrot.slane %v422, 1
      %v742 = vsel %vm684, %v740, %v741
      %v743 = vrot.slane %v423, 1
      %v744 = vsel %vm684, %v741, %v743
      %v745 = vrot.slane %v424, 1
      %v746 = vrot.slane %v425, 1
      %v747 = vsel %vm684, %v745, %v746
      %v748 = vrot.slane %v426, 1
      %v749 = vsel %vm684, %v746, %v748
      %v750 = vrot.slane %v427, 1
      %v751 = vrot.slane %v428, 1
      %v752 = vsel %vm684, %v750, %v751
      %v753 = vrot.slane %v429, 1
      %v754 = vsel %vm684, %v751, %v753
      %v755 = vrot.slane %v430, 1
      %v756 = vrot.slane %v431, 1
      %v757 = vsel %vm684, %v755, %v756
      %v758 = vrot.slane %v432, 1
      %v759 = vsel %vm684, %v756, %v758
      %v760 = vrot.slane %v433, 1
      %v761 = vrot.slane %v434, 1
      %v762 = vsel %vm684, %v760, %v761
      %v763 = vrot.slane %v435, 1
      %v764 = vsel %vm684, %v761, %v763
      %765 = vrot.lane.b32.xlu0 %v687, 4
      %v766 = vpop.permute.xlu0 %765
      %767 = vrot.lane.b32.xlu0 %v689, 4
      %v768 = vpop.permute.xlu0 %767
      %769 = vrot.lane.b32.xlu0 %v692, 4
      %v770 = vpop.permute.xlu0 %769
      %771 = vrot.lane.b32.xlu0 %v694, 4
      %v772 = vpop.permute.xlu0 %771
      %773 = vrot.lane.b32.xlu0 %v697, 4
      %v774 = vpop.permute.xlu0 %773
      %775 = vrot.lane.b32.xlu0 %v699, 4
      %v776 = vpop.permute.xlu0 %775
      %777 = vrot.lane.b32.xlu0 %v702, 4
      %v778 = vpop.permute.xlu0 %777
      %779 = vrot.lane.b32.xlu0 %v704, 4
      %v780 = vpop.permute.xlu0 %779
      %781 = vrot.lane.b32.xlu0 %v707, 4
      %v782 = vpop.permute.xlu0 %781
      %783 = vrot.lane.b32.xlu0 %v709, 4
      %v784 = vpop.permute.xlu0 %783
      %785 = vrot.lane.b32.xlu0 %v712, 4
      %v786 = vpop.permute.xlu0 %785
      %787 = vrot.lane.b32.xlu0 %v714, 4
      %v788 = vpop.permute.xlu0 %787
      %789 = vrot.lane.b32.xlu0 %v717, 4
      %v790 = vpop.permute.xlu0 %789
      %791 = vrot.lane.b32.xlu0 %v719, 4
      %v792 = vpop.permute.xlu0 %791
      %793 = vrot.lane.b32.xlu0 %v722, 4
      %v794 = vpop.permute.xlu0 %793
      %795 = vrot.lane.b32.xlu0 %v724, 4
      %v796 = vpop.permute.xlu0 %795
      %797 = vrot.lane.b32.xlu0 %v727, 4
      %v798 = vpop.permute.xlu0 %797
      %799 = vrot.lane.b32.xlu0 %v729, 4
      %v800 = vpop.permute.xlu0 %799
      %801 = vrot.lane.b32.xlu0 %v732, 4
      %v802 = vpop.permute.xlu0 %801
      %803 = vrot.lane.b32.xlu0 %v734, 4
      %v804 = vpop.permute.xlu0 %803
      %805 = vrot.lane.b32.xlu0 %v737, 4
      %v806 = vpop.permute.xlu0 %805
      %807 = vrot.lane.b32.xlu0 %v739, 4
      %v808 = vpop.permute.xlu0 %807
      %809 = vrot.lane.b32.xlu0 %v742, 4
      %v810 = vpop.permute.xlu0 %809
      %811 = vrot.lane.b32.xlu0 %v744, 4
      %v812 = vpop.permute.xlu0 %811
      %813 = vrot.lane.b32.xlu0 %v747, 4
      %v814 = vpop.permute.xlu0 %813
      %815 = vrot.lane.b32.xlu0 %v749, 4
      %v816 = vpop.permute.xlu0 %815
      %817 = vrot.lane.b32.xlu0 %v752, 4
      %v818 = vpop.permute.xlu0 %817
      %819 = vrot.lane.b32.xlu0 %v754, 4
      %v820 = vpop.permute.xlu0 %819
      %821 = vrot.lane.b32.xlu0 %v757, 4
      %v822 = vpop.permute.xlu0 %821
      %823 = vrot.lane.b32.xlu0 %v759, 4
      %v824 = vpop.permute.xlu0 %823
      %825 = vrot.lane.b32.xlu0 %v762, 4
      %v826 = vpop.permute.xlu0 %825
      %827 = vrot.lane.b32.xlu0 %v764, 4
      %v828 = vpop.permute.xlu0 %827
      %vm861 = vcmask 1045504
      %v862 = vrot.slane %v388, 2
      %v863 = vrot.slane %v389, 2
      %v864 = vsel %vm861, %v862, %v863
      %v865 = vrot.slane %v390, 2
      %v866 = vsel %vm861, %v863, %v865
      %v867 = vrot.slane %v391, 2
      %v868 = vrot.slane %v392, 2
      %v869 = vsel %vm861, %v867, %v868
      %v870 = vrot.slane %v393, 2
      %v871 = vsel %vm861, %v868, %v870
      %v872 = vrot.slane %v394, 2
      %v873 = vrot.slane %v395, 2
      %v874 = vsel %vm861, %v872, %v873
      %v875 = vrot.slane %v396, 2
      %v876 = vsel %vm861, %v873, %v875
      %v877 = vrot.slane %v397, 2
      %v878 = vrot.slane %v398, 2
      %v879 = vsel %vm861, %v877, %v878
      %v880 = vrot.slane %v399, 2
      %v881 = vsel %vm861, %v878, %v880
      %v882 = vrot.slane %v400, 2
      %v883 = vrot.slane %v401, 2
      %v884 = vsel %vm861, %v882, %v883
      %v885 = vrot.slane %v402, 2
      %v886 = vsel %vm861, %v883, %v885
      %v887 = vrot.slane %v403, 2
      %v888 = vrot.slane %v404, 2
      %v889 = vsel %vm861, %v887, %v888
      %v890 = vrot.slane %v405, 2
      %v891 = vsel %vm861, %v888, %v890
      %v892 = vrot.slane %v406, 2
      %v893 = vrot.slane %v407, 2
      %v894 = vsel %vm861, %v892, %v893
      %v895 = vrot.slane %v408, 2
      %v896 = vsel %vm861, %v893, %v895
      %v897 = vrot.slane %v409, 2
      %v898 = vrot.slane %v410, 2
      %v899 = vsel %vm861, %v897, %v898
      %v900 = vrot.slane %v411, 2
      %v901 = vsel %vm861, %v898, %v900
      %v902 = vrot.slane %v412, 2
      %v903 = vrot.slane %v413, 2
      %v904 = vsel %vm861, %v902, %v903
      %v905 = vrot.slane %v414, 2
      %v906 = vsel %vm861, %v903, %v905
      %v907 = vrot.slane %v415, 2
      %v908 = vrot.slane %v416, 2
      %v909 = vsel %vm861, %v907, %v908
      %v910 = vrot.slane %v417, 2
      %v911 = vsel %vm861, %v908, %v910
      %v912 = vrot.slane %v418, 2
      %v913 = vrot.slane %v419, 2
      %v914 = vsel %vm861, %v912, %v913
      %v915 = vrot.slane %v420, 2
      %v916 = vsel %vm861, %v913, %v915
      %v917 = vrot.slane %v421, 2
      %v918 = vrot.slane %v422, 2
      %v919 = vsel %vm861, %v917, %v918
      %v920 = vrot.slane %v423, 2
      %v921 = vsel %vm861, %v918, %v920
      %v922 = vrot.slane %v424, 2
      %v923 = vrot.slane %v425, 2
      %v924 = vsel %vm861, %v922, %v923
      %v925 = vrot.slane %v426, 2
      %v926 = vsel %vm861, %v923, %v925
      %v927 = vrot.slane %v427, 2
      %v928 = vrot.slane %v428, 2
      %v929 = vsel %vm861, %v927, %v928
      %v930 = vrot.slane %v429, 2
      %v931 = vsel %vm861, %v928, %v930
      %v932 = vrot.slane %v430, 2
      %v933 = vrot.slane %v431, 2
      %v934 = vsel %vm861, %v932, %v933
      %v935 = vrot.slane %v432, 2
      %v936 = vsel %vm861, %v933, %v935
      %v937 = vrot.slane %v433, 2
      %v938 = vrot.slane %v434, 2
      %v939 = vsel %vm861, %v937, %v938
      %v940 = vrot.slane %v435, 2
      %v941 = vsel %vm861, %v938, %v940
      %942 = vrot.lane.b32.xlu0 %v864, 8
      %v943 = vpop.permute.xlu0 %942
      %944 = vrot.lane.b32.xlu0 %v866, 8
      %v945 = vpop.permute.xlu0 %944
      %946 = vrot.lane.b32.xlu0 %v869, 8
      %v947 = vpop.permute.xlu0 %946
      %948 = vrot.lane.b32.xlu0 %v871, 8
      %v949 = vpop.permute.xlu0 %948
      %950 = vrot.lane.b32.xlu0 %v874, 8
      %v951 = vpop.permute.xlu0 %950
      %952 = vrot.lane.b32.xlu0 %v876, 8
      %v953 = vpop.permute.xlu0 %952
      %954 = vrot.lane.b32.xlu0 %v879, 8
      %v955 = vpop.permute.xlu0 %954
      %956 = vrot.lane.b32.xlu0 %v881, 8
      %v957 = vpop.permute.xlu0 %956
      %958 = vrot.lane.b32.xlu0 %v884, 8
      %v959 = vpop.permute.xlu0 %958
      %960 = vrot.lane.b32.xlu0 %v886, 8
      %v961 = vpop.permute.xlu0 %960
      %962 = vrot.lane.b32.xlu0 %v889, 8
      %v963 = vpop.permute.xlu0 %962
      %964 = vrot.lane.b32.xlu0 %v891, 8
      %v965 = vpop.permute.xlu0 %964
      %966 = vrot.lane.b32.xlu0 %v894, 8
      %v967 = vpop.permute.xlu0 %966
      %968 = vrot.lane.b32.xlu0 %v896, 8
      %v969 = vpop.permute.xlu0 %968
      %970 = vrot.lane.b32.xlu0 %v899, 8
      %v971 = vpop.permute.xlu0 %970
      %972 = vrot.lane.b32.xlu0 %v901, 8
      %v973 = vpop.permute.xlu0 %972
      %974 = vrot.lane.b32.xlu0 %v904, 8
      %v975 = vpop.permute.xlu0 %974
      %976 = vrot.lane.b32.xlu0 %v906, 8
      %v977 = vpop.permute.xlu0 %976
      %978 = vrot.lane.b32.xlu0 %v909, 8
      %v979 = vpop.permute.xlu0 %978
      %980 = vrot.lane.b32.xlu0 %v911, 8
      %v981 = vpop.permute.xlu0 %980
      %982 = vrot.lane.b32.xlu0 %v914, 8
      %v983 = vpop.permute.xlu0 %982
      %984 = vrot.lane.b32.xlu0 %v916, 8
      %v985 = vpop.permute.xlu0 %984
      %986 = vrot.lane.b32.xlu0 %v919, 8
      %v987 = vpop.permute.xlu0 %986
      %988 = vrot.lane.b32.xlu0 %v921, 8
      %v989 = vpop.permute.xlu0 %988
      %990 = vrot.lane.b32.xlu0 %v924, 8
      %v991 = vpop.permute.xlu0 %990
      %992 = vrot.lane.b32.xlu0 %v926, 8
      %v993 = vpop.permute.xlu0 %992
      %994 = vrot.lane.b32.xlu0 %v929, 8
      %v995 = vpop.permute.xlu0 %994
      %996 = vrot.lane.b32.xlu0 %v931, 8
      %v997 = vpop.permute.xlu0 %996
      %998 = vrot.lane.b32.xlu0 %v934, 8
      %v999 = vpop.permute.xlu0 %998
      %1000 = vrot.lane.b32.xlu0 %v936, 8
      %v1001 = vpop.permute.xlu0 %1000
      %1002 = vrot.lane.b32.xlu0 %v939, 8
      %v1003 = vpop.permute.xlu0 %1002
      %1004 = vrot.lane.b32.xlu0 %v941, 8
      %v1005 = vpop.permute.xlu0 %1004
      %1070 = vrot.lane.b32.xlu0 %v488, 12
      %v1071 = vpop.permute.xlu0 %1070
      %1072 = vrot.lane.b32.xlu0 %v489, 12
      %v1073 = vpop.permute.xlu0 %1072
      %1074 = vrot.lane.b32.xlu0 %v491, 12
      %v1075 = vpop.permute.xlu0 %1074
      %1076 = vrot.lane.b32.xlu0 %v492, 12
      %v1077 = vpop.permute.xlu0 %1076
      %1078 = vrot.lane.b32.xlu0 %v494, 12
      %v1079 = vpop.permute.xlu0 %1078
      %1080 = vrot.lane.b32.xlu0 %v495, 12
      %v1081 = vpop.permute.xlu0 %1080
      %1082 = vrot.lane.b32.xlu0 %v497, 12
      %v1083 = vpop.permute.xlu0 %1082
      %1084 = vrot.lane.b32.xlu0 %v498, 12
      %v1085 = vpop.permute.xlu0 %1084
      %1086 = vrot.lane.b32.xlu0 %v500, 12
      %v1087 = vpop.permute.xlu0 %1086
      %1088 = vrot.lane.b32.xlu0 %v501, 12
      %v1089 = vpop.permute.xlu0 %1088
      %1090 = vrot.lane.b32.xlu0 %v503, 12
      %v1091 = vpop.permute.xlu0 %1090
      %1092 = vrot.lane.b32.xlu0 %v504, 12
      %v1093 = vpop.permute.xlu0 %1092
      %1094 = vrot.lane.b32.xlu0 %v506, 12
      %v1095 = vpop.permute.xlu0 %1094
      %1096 = vrot.lane.b32.xlu0 %v507, 12
      %v1097 = vpop.permute.xlu0 %1096
      %1098 = vrot.lane.b32.xlu0 %v509, 12
      %v1099 = vpop.permute.xlu0 %1098
      %1100 = vrot.lane.b32.xlu0 %v510, 12
      %v1101 = vpop.permute.xlu0 %1100
      %1102 = vrot.lane.b32.xlu0 %v512, 12
      %v1103 = vpop.permute.xlu0 %1102
      %1104 = vrot.lane.b32.xlu0 %v513, 12
      %v1105 = vpop.permute.xlu0 %1104
      %1106 = vrot.lane.b32.xlu0 %v515, 12
      %v1107 = vpop.permute.xlu0 %1106
      %1108 = vrot.lane.b32.xlu0 %v516, 12
      %v1109 = vpop.permute.xlu0 %1108
      %1110 = vrot.lane.b32.xlu0 %v518, 12
      %v1111 = vpop.permute.xlu0 %1110
      %1112 = vrot.lane.b32.xlu0 %v519, 12
      %v1113 = vpop.permute.xlu0 %1112
      %1114 = vrot.lane.b32.xlu0 %v521, 12
      %v1115 = vpop.permute.xlu0 %1114
      %1116 = vrot.lane.b32.xlu0 %v522, 12
      %v1117 = vpop.permute.xlu0 %1116
      %1118 = vrot.lane.b32.xlu0 %v524, 12
      %v1119 = vpop.permute.xlu0 %1118
      %1120 = vrot.lane.b32.xlu0 %v525, 12
      %v1121 = vpop.permute.xlu0 %1120
      %1122 = vrot.lane.b32.xlu0 %v527, 12
      %v1123 = vpop.permute.xlu0 %1122
      %1124 = vrot.lane.b32.xlu0 %v528, 12
      %v1125 = vpop.permute.xlu0 %1124
      %1126 = vrot.lane.b32.xlu0 %v530, 12
      %v1127 = vpop.permute.xlu0 %1126
      %1128 = vrot.lane.b32.xlu0 %v531, 12
      %v1129 = vpop.permute.xlu0 %1128
      %1130 = vrot.lane.b32.xlu0 %v533, 12
      %v1131 = vpop.permute.xlu0 %1130
      %1132 = vrot.lane.b32.xlu0 %v534, 12
      %v1133 = vpop.permute.xlu0 %1132
      %v1182 = vrot.slane %v488, 1
      %v1183 = vrot.slane %v489, 1
      %v1184 = vsel %vm684, %v1182, %v1183
      %v1185 = vrot.slane %v490, 1
      %v1186 = vsel %vm684, %v1183, %v1185
      %v1187 = vrot.slane %v491, 1
      %v1188 = vrot.slane %v492, 1
      %v1189 = vsel %vm684, %v1187, %v1188
      %v1190 = vrot.slane %v493, 1
      %v1191 = vsel %vm684, %v1188, %v1190
      %v1192 = vrot.slane %v494, 1
      %v1193 = vrot.slane %v495, 1
      %v1194 = vsel %vm684, %v1192, %v1193
      %v1195 = vrot.slane %v496, 1
      %v1196 = vsel %vm684, %v1193, %v1195
      %v1197 = vrot.slane %v497, 1
      %v1198 = vrot.slane %v498, 1
      %v1199 = vsel %vm684, %v1197, %v1198
      %v1200 = vrot.slane %v499, 1
      %v1201 = vsel %vm684, %v1198, %v1200
      %v1202 = vrot.slane %v500, 1
      %v1203 = vrot.slane %v501, 1
      %v1204 = vsel %vm684, %v1202, %v1203
      %v1205 = vrot.slane %v502, 1
      %v1206 = vsel %vm684, %v1203, %v1205
      %v1207 = vrot.slane %v503, 1
      %v1208 = vrot.slane %v504, 1
      %v1209 = vsel %vm684, %v1207, %v1208
      %v1210 = vrot.slane %v505, 1
      %v1211 = vsel %vm684, %v1208, %v1210
      %v1212 = vrot.slane %v506, 1
      %v1213 = vrot.slane %v507, 1
      %v1214 = vsel %vm684, %v1212, %v1213
      %v1215 = vrot.slane %v508, 1
      %v1216 = vsel %vm684, %v1213, %v1215
      %v1217 = vrot.slane %v509, 1
      %v1218 = vrot.slane %v510, 1
      %v1219 = vsel %vm684, %v1217, %v1218
      %v1220 = vrot.slane %v511, 1
      %v1221 = vsel %vm684, %v1218, %v1220
      %v1222 = vrot.slane %v512, 1
      %v1223 = vrot.slane %v513, 1
      %v1224 = vsel %vm684, %v1222, %v1223
      %v1225 = vrot.slane %v514, 1
      %v1226 = vsel %vm684, %v1223, %v1225
      %v1227 = vrot.slane %v515, 1
      %v1228 = vrot.slane %v516, 1
      %v1229 = vsel %vm684, %v1227, %v1228
      %v1230 = vrot.slane %v517, 1
      %v1231 = vsel %vm684, %v1228, %v1230
      %v1232 = vrot.slane %v518, 1
      %v1233 = vrot.slane %v519, 1
      %v1234 = vsel %vm684, %v1232, %v1233
      %v1235 = vrot.slane %v520, 1
      %v1236 = vsel %vm684, %v1233, %v1235
      %v1237 = vrot.slane %v521, 1
      %v1238 = vrot.slane %v522, 1
      %v1239 = vsel %vm684, %v1237, %v1238
      %v1240 = vrot.slane %v523, 1
      %v1241 = vsel %vm684, %v1238, %v1240
      %v1242 = vrot.slane %v524, 1
      %v1243 = vrot.slane %v525, 1
      %v1244 = vsel %vm684, %v1242, %v1243
      %v1245 = vrot.slane %v526, 1
      %v1246 = vsel %vm684, %v1243, %v1245
      %v1247 = vrot.slane %v527, 1
      %v1248 = vrot.slane %v528, 1
      %v1249 = vsel %vm684, %v1247, %v1248
      %v1250 = vrot.slane %v529, 1
      %v1251 = vsel %vm684, %v1248, %v1250
      %v1252 = vrot.slane %v530, 1
      %v1253 = vrot.slane %v531, 1
      %v1254 = vsel %vm684, %v1252, %v1253
      %v1255 = vrot.slane %v532, 1
      %v1256 = vsel %vm684, %v1253, %v1255
      %v1257 = vrot.slane %v533, 1
      %v1258 = vrot.slane %v534, 1
      %v1259 = vsel %vm684, %v1257, %v1258
      %v1260 = vrot.slane %v535, 1
      %v1261 = vsel %vm684, %v1258, %v1260
      %1262 = vrot.lane.b32.xlu0 %v1184, 16
      %v1263 = vpop.permute.xlu0 %1262
      %1264 = vrot.lane.b32.xlu0 %v1186, 16
      %v1265 = vpop.permute.xlu0 %1264
      %1266 = vrot.lane.b32.xlu0 %v1189, 16
      %v1267 = vpop.permute.xlu0 %1266
      %1268 = vrot.lane.b32.xlu0 %v1191, 16
      %v1269 = vpop.permute.xlu0 %1268
      %1270 = vrot.lane.b32.xlu0 %v1194, 16
      %v1271 = vpop.permute.xlu0 %1270
      %1272 = vrot.lane.b32.xlu0 %v1196, 16
      %v1273 = vpop.permute.xlu0 %1272
      %1274 = vrot.lane.b32.xlu0 %v1199, 16
      %v1275 = vpop.permute.xlu0 %1274
      %1276 = vrot.lane.b32.xlu0 %v1201, 16
      %v1277 = vpop.permute.xlu0 %1276
      %1278 = vrot.lane.b32.xlu0 %v1204, 16
      %v1279 = vpop.permute.xlu0 %1278
      %1280 = vrot.lane.b32.xlu0 %v1206, 16
      %v1281 = vpop.permute.xlu0 %1280
      %1282 = vrot.lane.b32.xlu0 %v1209, 16
      %v1283 = vpop.permute.xlu0 %1282
      %1284 = vrot.lane.b32.xlu0 %v1211, 16
      %v1285 = vpop.permute.xlu0 %1284
      %1286 = vrot.lane.b32.xlu0 %v1214, 16
      %v1287 = vpop.permute.xlu0 %1286
      %1288 = vrot.lane.b32.xlu0 %v1216, 16
      %v1289 = vpop.permute.xlu0 %1288
      %1290 = vrot.lane.b32.xlu0 %v1219, 16
      %v1291 = vpop.permute.xlu0 %1290
      %1292 = vrot.lane.b32.xlu0 %v1221, 16
      %v1293 = vpop.permute.xlu0 %1292
      %1294 = vrot.lane.b32.xlu0 %v1224, 16
      %v1295 = vpop.permute.xlu0 %1294
      %1296 = vrot.lane.b32.xlu0 %v1226, 16
      %v1297 = vpop.permute.xlu0 %1296
      %1298 = vrot.lane.b32.xlu0 %v1229, 16
      %v1299 = vpop.permute.xlu0 %1298
      %1300 = vrot.lane.b32.xlu0 %v1231, 16
      %v1301 = vpop.permute.xlu0 %1300
      %1302 = vrot.lane.b32.xlu0 %v1234, 16
      %v1303 = vpop.permute.xlu0 %1302
      %1304 = vrot.lane.b32.xlu0 %v1236, 16
      %v1305 = vpop.permute.xlu0 %1304
      %1306 = vrot.lane.b32.xlu0 %v1239, 16
      %v1307 = vpop.permute.xlu0 %1306
      %1308 = vrot.lane.b32.xlu0 %v1241, 16
      %v1309 = vpop.permute.xlu0 %1308
      %1310 = vrot.lane.b32.xlu0 %v1244, 16
      %v1311 = vpop.permute.xlu0 %1310
      %1312 = vrot.lane.b32.xlu0 %v1246, 16
      %v1313 = vpop.permute.xlu0 %1312
      %1314 = vrot.lane.b32.xlu0 %v1249, 16
      %v1315 = vpop.permute.xlu0 %1314
      %1316 = vrot.lane.b32.xlu0 %v1251, 16
      %v1317 = vpop.permute.xlu0 %1316
      %1318 = vrot.lane.b32.xlu0 %v1254, 16
      %v1319 = vpop.permute.xlu0 %1318
      %1320 = vrot.lane.b32.xlu0 %v1256, 16
      %v1321 = vpop.permute.xlu0 %1320
      %1322 = vrot.lane.b32.xlu0 %v1259, 16
      %v1323 = vpop.permute.xlu0 %1322
      %1324 = vrot.lane.b32.xlu0 %v1261, 16
      %v1325 = vpop.permute.xlu0 %1324
      %v1358 = vrot.slane %v488, 2
      %v1359 = vrot.slane %v489, 2
      %v1360 = vsel %vm861, %v1358, %v1359
      %v1361 = vrot.slane %v490, 2
      %v1362 = vsel %vm861, %v1359, %v1361
      %v1363 = vrot.slane %v491, 2
      %v1364 = vrot.slane %v492, 2
      %v1365 = vsel %vm861, %v1363, %v1364
      %v1366 = vrot.slane %v493, 2
      %v1367 = vsel %vm861, %v1364, %v1366
      %v1368 = vrot.slane %v494, 2
      %v1369 = vrot.slane %v495, 2
      %v1370 = vsel %vm861, %v1368, %v1369
      %v1371 = vrot.slane %v496, 2
      %v1372 = vsel %vm861, %v1369, %v1371
      %v1373 = vrot.slane %v497, 2
      %v1374 = vrot.slane %v498, 2
      %v1375 = vsel %vm861, %v1373, %v1374
      %v1376 = vrot.slane %v499, 2
      %v1377 = vsel %vm861, %v1374, %v1376
      %v1378 = vrot.slane %v500, 2
      %v1379 = vrot.slane %v501, 2
      %v1380 = vsel %vm861, %v1378, %v1379
      %v1381 = vrot.slane %v502, 2
      %v1382 = vsel %vm861, %v1379, %v1381
      %v1383 = vrot.slane %v503, 2
      %v1384 = vrot.slane %v504, 2
      %v1385 = vsel %vm861, %v1383, %v1384
      %v1386 = vrot.slane %v505, 2
      %v1387 = vsel %vm861, %v1384, %v1386
      %v1388 = vrot.slane %v506, 2
      %v1389 = vrot.slane %v507, 2
      %v1390 = vsel %vm861, %v1388, %v1389
      %v1391 = vrot.slane %v508, 2
      %v1392 = vsel %vm861, %v1389, %v1391
      %v1393 = vrot.slane %v509, 2
      %v1394 = vrot.slane %v510, 2
      %v1395 = vsel %vm861, %v1393, %v1394
      %v1396 = vrot.slane %v511, 2
      %v1397 = vsel %vm861, %v1394, %v1396
      %v1398 = vrot.slane %v512, 2
      %v1399 = vrot.slane %v513, 2
      %v1400 = vsel %vm861, %v1398, %v1399
      %v1401 = vrot.slane %v514, 2
      %v1402 = vsel %vm861, %v1399, %v1401
      %v1403 = vrot.slane %v515, 2
      %v1404 = vrot.slane %v516, 2
      %v1405 = vsel %vm861, %v1403, %v1404
      %v1406 = vrot.slane %v517, 2
      %v1407 = vsel %vm861, %v1404, %v1406
      %v1408 = vrot.slane %v518, 2
      %v1409 = vrot.slane %v519, 2
      %v1410 = vsel %vm861, %v1408, %v1409
      %v1411 = vrot.slane %v520, 2
      %v1412 = vsel %vm861, %v1409, %v1411
      %v1413 = vrot.slane %v521, 2
      %v1414 = vrot.slane %v522, 2
      %v1415 = vsel %vm861, %v1413, %v1414
      %v1416 = vrot.slane %v523, 2
      %v1417 = vsel %vm861, %v1414, %v1416
      %v1418 = vrot.slane %v524, 2
      %v1419 = vrot.slane %v525, 2
      %v1420 = vsel %vm861, %v1418, %v1419
      %v1421 = vrot.slane %v526, 2
      %v1422 = vsel %vm861, %v1419, %v1421
      %v1423 = vrot.slane %v527, 2
      %v1424 = vrot.slane %v528, 2
      %v1425 = vsel %vm861, %v1423, %v1424
      %v1426 = vrot.slane %v529, 2
      %v1427 = vsel %vm861, %v1424, %v1426
      %v1428 = vrot.slane %v530, 2
      %v1429 = vrot.slane %v531, 2
      %v1430 = vsel %vm861, %v1428, %v1429
      %v1431 = vrot.slane %v532, 2
      %v1432 = vsel %vm861, %v1429, %v1431
      %v1433 = vrot.slane %v533, 2
      %v1434 = vrot.slane %v534, 2
      %v1435 = vsel %vm861, %v1433, %v1434
      %v1436 = vrot.slane %v535, 2
      %v1437 = vsel %vm861, %v1434, %v1436
      %1438 = vrot.lane.b32.xlu0 %v1360, 20
      %v1439 = vpop.permute.xlu0 %1438
      %1440 = vrot.lane.b32.xlu0 %v1362, 20
      %v1441 = vpop.permute.xlu0 %1440
      %1442 = vrot.lane.b32.xlu0 %v1365, 20
      %v1443 = vpop.permute.xlu0 %1442
      %1444 = vrot.lane.b32.xlu0 %v1367, 20
      %v1445 = vpop.permute.xlu0 %1444
      %1446 = vrot.lane.b32.xlu0 %v1370, 20
      %v1447 = vpop.permute.xlu0 %1446
      %1448 = vrot.lane.b32.xlu0 %v1372, 20
      %v1449 = vpop.permute.xlu0 %1448
      %1450 = vrot.lane.b32.xlu0 %v1375, 20
      %v1451 = vpop.permute.xlu0 %1450
      %1452 = vrot.lane.b32.xlu0 %v1377, 20
      %v1453 = vpop.permute.xlu0 %1452
      %1454 = vrot.lane.b32.xlu0 %v1380, 20
      %v1455 = vpop.permute.xlu0 %1454
      %1456 = vrot.lane.b32.xlu0 %v1382, 20
      %v1457 = vpop.permute.xlu0 %1456
      %1458 = vrot.lane.b32.xlu0 %v1385, 20
      %v1459 = vpop.permute.xlu0 %1458
      %1460 = vrot.lane.b32.xlu0 %v1387, 20
      %v1461 = vpop.permute.xlu0 %1460
      %1462 = vrot.lane.b32.xlu0 %v1390, 20
      %v1463 = vpop.permute.xlu0 %1462
      %1464 = vrot.lane.b32.xlu0 %v1392, 20
      %v1465 = vpop.permute.xlu0 %1464
      %1466 = vrot.lane.b32.xlu0 %v1395, 20
      %v1467 = vpop.permute.xlu0 %1466
      %1468 = vrot.lane.b32.xlu0 %v1397, 20
      %v1469 = vpop.permute.xlu0 %1468
      %1470 = vrot.lane.b32.xlu0 %v1400, 20
      %v1471 = vpop.permute.xlu0 %1470
      %1472 = vrot.lane.b32.xlu0 %v1402, 20
      %v1473 = vpop.permute.xlu0 %1472
      %1474 = vrot.lane.b32.xlu0 %v1405, 20
      %v1475 = vpop.permute.xlu0 %1474
      %1476 = vrot.lane.b32.xlu0 %v1407, 20
      %v1477 = vpop.permute.xlu0 %1476
      %1478 = vrot.lane.b32.xlu0 %v1410, 20
      %v1479 = vpop.permute.xlu0 %1478
      %1480 = vrot.lane.b32.xlu0 %v1412, 20
      %v1481 = vpop.permute.xlu0 %1480
      %1482 = vrot.lane.b32.xlu0 %v1415, 20
      %v1483 = vpop.permute.xlu0 %1482
      %1484 = vrot.lane.b32.xlu0 %v1417, 20
      %v1485 = vpop.permute.xlu0 %1484
      %1486 = vrot.lane.b32.xlu0 %v1420, 20
      %v1487 = vpop.permute.xlu0 %1486
      %1488 = vrot.lane.b32.xlu0 %v1422, 20
      %v1489 = vpop.permute.xlu0 %1488
      %1490 = vrot.lane.b32.xlu0 %v1425, 20
      %v1491 = vpop.permute.xlu0 %1490
      %1492 = vrot.lane.b32.xlu0 %v1427, 20
      %v1493 = vpop.permute.xlu0 %1492
      %1494 = vrot.lane.b32.xlu0 %v1430, 20
      %v1495 = vpop.permute.xlu0 %1494
      %1496 = vrot.lane.b32.xlu0 %v1432, 20
      %v1497 = vpop.permute.xlu0 %1496
      %1498 = vrot.lane.b32.xlu0 %v1435, 20
      %v1499 = vpop.permute.xlu0 %1498
      %1500 = vrot.lane.b32.xlu0 %v1437, 20
      %v1501 = vpop.permute.xlu0 %1500
      %1566 = vrot.lane.b32.xlu0 %v588, 24
      %v1567 = vpop.permute.xlu0 %1566
      %1568 = vrot.lane.b32.xlu0 %v589, 24
      %v1569 = vpop.permute.xlu0 %1568
      %1570 = vrot.lane.b32.xlu0 %v591, 24
      %v1571 = vpop.permute.xlu0 %1570
      %1572 = vrot.lane.b32.xlu0 %v592, 24
      %v1573 = vpop.permute.xlu0 %1572
      %1574 = vrot.lane.b32.xlu0 %v594, 24
      %v1575 = vpop.permute.xlu0 %1574
      %1576 = vrot.lane.b32.xlu0 %v595, 24
      %v1577 = vpop.permute.xlu0 %1576
      %1578 = vrot.lane.b32.xlu0 %v597, 24
      %v1579 = vpop.permute.xlu0 %1578
      %1580 = vrot.lane.b32.xlu0 %v598, 24
      %v1581 = vpop.permute.xlu0 %1580
      %1582 = vrot.lane.b32.xlu0 %v600, 24
      %v1583 = vpop.permute.xlu0 %1582
      %1584 = vrot.lane.b32.xlu0 %v601, 24
      %v1585 = vpop.permute.xlu0 %1584
      %1586 = vrot.lane.b32.xlu0 %v603, 24
      %v1587 = vpop.permute.xlu0 %1586
      %1588 = vrot.lane.b32.xlu0 %v604, 24
      %v1589 = vpop.permute.xlu0 %1588
      %1590 = vrot.lane.b32.xlu0 %v606, 24
      %v1591 = vpop.permute.xlu0 %1590
      %1592 = vrot.lane.b32.xlu0 %v607, 24
      %v1593 = vpop.permute.xlu0 %1592
      %1594 = vrot.lane.b32.xlu0 %v609, 24
      %v1595 = vpop.permute.xlu0 %1594
      %1596 = vrot.lane.b32.xlu0 %v610, 24
      %v1597 = vpop.permute.xlu0 %1596
      %1598 = vrot.lane.b32.xlu0 %v612, 24
      %v1599 = vpop.permute.xlu0 %1598
      %1600 = vrot.lane.b32.xlu0 %v613, 24
      %v1601 = vpop.permute.xlu0 %1600
      %1602 = vrot.lane.b32.xlu0 %v615, 24
      %v1603 = vpop.permute.xlu0 %1602
      %1604 = vrot.lane.b32.xlu0 %v616, 24
      %v1605 = vpop.permute.xlu0 %1604
      %1606 = vrot.lane.b32.xlu0 %v618, 24
      %v1607 = vpop.permute.xlu0 %1606
      %1608 = vrot.lane.b32.xlu0 %v619, 24
      %v1609 = vpop.permute.xlu0 %1608
      %1610 = vrot.lane.b32.xlu0 %v621, 24
      %v1611 = vpop.permute.xlu0 %1610
      %1612 = vrot.lane.b32.xlu0 %v622, 24
      %v1613 = vpop.permute.xlu0 %1612
      %1614 = vrot.lane.b32.xlu0 %v624, 24
      %v1615 = vpop.permute.xlu0 %1614
      %1616 = vrot.lane.b32.xlu0 %v625, 24
      %v1617 = vpop.permute.xlu0 %1616
      %1618 = vrot.lane.b32.xlu0 %v627, 24
      %v1619 = vpop.permute.xlu0 %1618
      %1620 = vrot.lane.b32.xlu0 %v628, 24
      %v1621 = vpop.permute.xlu0 %1620
      %1622 = vrot.lane.b32.xlu0 %v630, 24
      %v1623 = vpop.permute.xlu0 %1622
      %1624 = vrot.lane.b32.xlu0 %v631, 24
      %v1625 = vpop.permute.xlu0 %1624
      %1626 = vrot.lane.b32.xlu0 %v633, 24
      %v1627 = vpop.permute.xlu0 %1626
      %1628 = vrot.lane.b32.xlu0 %v634, 24
      %v1629 = vpop.permute.xlu0 %1628
      %v1678 = vrot.slane %v588, 1
      %v1679 = vrot.slane %v589, 1
      %v1680 = vsel %vm684, %v1678, %v1679
      %v1681 = vrot.slane %v590, 1
      %v1682 = vsel %vm684, %v1679, %v1681
      %v1683 = vrot.slane %v591, 1
      %v1684 = vrot.slane %v592, 1
      %v1685 = vsel %vm684, %v1683, %v1684
      %v1686 = vrot.slane %v593, 1
      %v1687 = vsel %vm684, %v1684, %v1686
      %v1688 = vrot.slane %v594, 1
      %v1689 = vrot.slane %v595, 1
      %v1690 = vsel %vm684, %v1688, %v1689
      %v1691 = vrot.slane %v596, 1
      %v1692 = vsel %vm684, %v1689, %v1691
      %v1693 = vrot.slane %v597, 1
      %v1694 = vrot.slane %v598, 1
      %v1695 = vsel %vm684, %v1693, %v1694
      %v1696 = vrot.slane %v599, 1
      %v1697 = vsel %vm684, %v1694, %v1696
      %v1698 = vrot.slane %v600, 1
      %v1699 = vrot.slane %v601, 1
      %v1700 = vsel %vm684, %v1698, %v1699
      %v1701 = vrot.slane %v602, 1
      %v1702 = vsel %vm684, %v1699, %v1701
      %v1703 = vrot.slane %v603, 1
      %v1704 = vrot.slane %v604, 1
      %v1705 = vsel %vm684, %v1703, %v1704
      %v1706 = vrot.slane %v605, 1
      %v1707 = vsel %vm684, %v1704, %v1706
      %v1708 = vrot.slane %v606, 1
      %v1709 = vrot.slane %v607, 1
      %v1710 = vsel %vm684, %v1708, %v1709
      %v1711 = vrot.slane %v608, 1
      %v1712 = vsel %vm684, %v1709, %v1711
      %v1713 = vrot.slane %v609, 1
      %v1714 = vrot.slane %v610, 1
      %v1715 = vsel %vm684, %v1713, %v1714
      %v1716 = vrot.slane %v611, 1
      %v1717 = vsel %vm684, %v1714, %v1716
      %v1718 = vrot.slane %v612, 1
      %v1719 = vrot.slane %v613, 1
      %v1720 = vsel %vm684, %v1718, %v1719
      %v1721 = vrot.slane %v614, 1
      %v1722 = vsel %vm684, %v1719, %v1721
      %v1723 = vrot.slane %v615, 1
      %v1724 = vrot.slane %v616, 1
      %v1725 = vsel %vm684, %v1723, %v1724
      %v1726 = vrot.slane %v617, 1
      %v1727 = vsel %vm684, %v1724, %v1726
      %v1728 = vrot.slane %v618, 1
      %v1729 = vrot.slane %v619, 1
      %v1730 = vsel %vm684, %v1728, %v1729
      %v1731 = vrot.slane %v620, 1
      %v1732 = vsel %vm684, %v1729, %v1731
      %v1733 = vrot.slane %v621, 1
      %v1734 = vrot.slane %v622, 1
      %v1735 = vsel %vm684, %v1733, %v1734
      %v1736 = vrot.slane %v623, 1
      %v1737 = vsel %vm684, %v1734, %v1736
      %v1738 = vrot.slane %v624, 1
      %v1739 = vrot.slane %v625, 1
      %v1740 = vsel %vm684, %v1738, %v1739
      %v1741 = vrot.slane %v626, 1
      %v1742 = vsel %vm684, %v1739, %v1741
      %v1743 = vrot.slane %v627, 1
      %v1744 = vrot.slane %v628, 1
      %v1745 = vsel %vm684, %v1743, %v1744
      %v1746 = vrot.slane %v629, 1
      %v1747 = vsel %vm684, %v1744, %v1746
      %v1748 = vrot.slane %v630, 1
      %v1749 = vrot.slane %v631, 1
      %v1750 = vsel %vm684, %v1748, %v1749
      %v1751 = vrot.slane %v632, 1
      %v1752 = vsel %vm684, %v1749, %v1751
      %v1753 = vrot.slane %v633, 1
      %v1754 = vrot.slane %v634, 1
      %v1755 = vsel %vm684, %v1753, %v1754
      %v1756 = vrot.slane %v635, 1
      %v1757 = vsel %vm684, %v1754, %v1756
      %1758 = vrot.lane.b32.xlu0 %v1680, 28
      %v1759 = vpop.permute.xlu0 %1758
      %1760 = vrot.lane.b32.xlu0 %v1682, 28
      %v1761 = vpop.permute.xlu0 %1760
      %1762 = vrot.lane.b32.xlu0 %v1685, 28
      %v1763 = vpop.permute.xlu0 %1762
      %1764 = vrot.lane.b32.xlu0 %v1687, 28
      %v1765 = vpop.permute.xlu0 %1764
      %1766 = vrot.lane.b32.xlu0 %v1690, 28
      %v1767 = vpop.permute.xlu0 %1766
      %1768 = vrot.lane.b32.xlu0 %v1692, 28
      %v1769 = vpop.permute.xlu0 %1768
      %1770 = vrot.lane.b32.xlu0 %v1695, 28
      %v1771 = vpop.permute.xlu0 %1770
      %1772 = vrot.lane.b32.xlu0 %v1697, 28
      %v1773 = vpop.permute.xlu0 %1772
      %1774 = vrot.lane.b32.xlu0 %v1700, 28
      %v1775 = vpop.permute.xlu0 %1774
      %1776 = vrot.lane.b32.xlu0 %v1702, 28
      %v1777 = vpop.permute.xlu0 %1776
      %1778 = vrot.lane.b32.xlu0 %v1705, 28
      %v1779 = vpop.permute.xlu0 %1778
      %1780 = vrot.lane.b32.xlu0 %v1707, 28
      %v1781 = vpop.permute.xlu0 %1780
      %1782 = vrot.lane.b32.xlu0 %v1710, 28
      %v1783 = vpop.permute.xlu0 %1782
      %1784 = vrot.lane.b32.xlu0 %v1712, 28
      %v1785 = vpop.permute.xlu0 %1784
      %1786 = vrot.lane.b32.xlu0 %v1715, 28
      %v1787 = vpop.permute.xlu0 %1786
      %1788 = vrot.lane.b32.xlu0 %v1717, 28
      %v1789 = vpop.permute.xlu0 %1788
      %1790 = vrot.lane.b32.xlu0 %v1720, 28
      %v1791 = vpop.permute.xlu0 %1790
      %1792 = vrot.lane.b32.xlu0 %v1722, 28
      %v1793 = vpop.permute.xlu0 %1792
      %1794 = vrot.lane.b32.xlu0 %v1725, 28
      %v1795 = vpop.permute.xlu0 %1794
      %1796 = vrot.lane.b32.xlu0 %v1727, 28
      %v1797 = vpop.permute.xlu0 %1796
      %1798 = vrot.lane.b32.xlu0 %v1730, 28
      %v1799 = vpop.permute.xlu0 %1798
      %1800 = vrot.lane.b32.xlu0 %v1732, 28
      %v1801 = vpop.permute.xlu0 %1800
      %1802 = vrot.lane.b32.xlu0 %v1735, 28
      %v1803 = vpop.permute.xlu0 %1802
      %1804 = vrot.lane.b32.xlu0 %v1737, 28
      %v1805 = vpop.permute.xlu0 %1804
      %1806 = vrot.lane.b32.xlu0 %v1740, 28
      %v1807 = vpop.permute.xlu0 %1806
      %1808 = vrot.lane.b32.xlu0 %v1742, 28
      %v1809 = vpop.permute.xlu0 %1808
      %1810 = vrot.lane.b32.xlu0 %v1745, 28
      %v1811 = vpop.permute.xlu0 %1810
      %1812 = vrot.lane.b32.xlu0 %v1747, 28
      %v1813 = vpop.permute.xlu0 %1812
      %1814 = vrot.lane.b32.xlu0 %v1750, 28
      %v1815 = vpop.permute.xlu0 %1814
      %1816 = vrot.lane.b32.xlu0 %v1752, 28
      %v1817 = vpop.permute.xlu0 %1816
      %1818 = vrot.lane.b32.xlu0 %v1755, 28
      %v1819 = vpop.permute.xlu0 %1818
      %1820 = vrot.lane.b32.xlu0 %v1757, 28
      %v1821 = vpop.permute.xlu0 %1820
      %v1854 = vrot.slane %v588, 2
      %v1855 = vrot.slane %v589, 2
      %v1856 = vsel %vm861, %v1854, %v1855
      %v1857 = vrot.slane %v590, 2
      %v1858 = vsel %vm861, %v1855, %v1857
      %v1859 = vrot.slane %v591, 2
      %v1860 = vrot.slane %v592, 2
      %v1861 = vsel %vm861, %v1859, %v1860
      %v1862 = vrot.slane %v593, 2
      %v1863 = vsel %vm861, %v1860, %v1862
      %v1864 = vrot.slane %v594, 2
      %v1865 = vrot.slane %v595, 2
      %v1866 = vsel %vm861, %v1864, %v1865
      %v1867 = vrot.slane %v596, 2
      %v1868 = vsel %vm861, %v1865, %v1867
      %v1869 = vrot.slane %v597, 2
      %v1870 = vrot.slane %v598, 2
      %v1871 = vsel %vm861, %v1869, %v1870
      %v1872 = vrot.slane %v599, 2
      %v1873 = vsel %vm861, %v1870, %v1872
      %v1874 = vrot.slane %v600, 2
      %v1875 = vrot.slane %v601, 2
      %v1876 = vsel %vm861, %v1874, %v1875
      %v1877 = vrot.slane %v602, 2
      %v1878 = vsel %vm861, %v1875, %v1877
      %v1879 = vrot.slane %v603, 2
      %v1880 = vrot.slane %v604, 2
      %v1881 = vsel %vm861, %v1879, %v1880
      %v1882 = vrot.slane %v605, 2
      %v1883 = vsel %vm861, %v1880, %v1882
      %v1884 = vrot.slane %v606, 2
      %v1885 = vrot.slane %v607, 2
      %v1886 = vsel %vm861, %v1884, %v1885
      %v1887 = vrot.slane %v608, 2
      %v1888 = vsel %vm861, %v1885, %v1887
      %v1889 = vrot.slane %v609, 2
      %v1890 = vrot.slane %v610, 2
      %v1891 = vsel %vm861, %v1889, %v1890
      %v1892 = vrot.slane %v611, 2
      %v1893 = vsel %vm861, %v1890, %v1892
      %v1894 = vrot.slane %v612, 2
      %v1895 = vrot.slane %v613, 2
      %v1896 = vsel %vm861, %v1894, %v1895
      %v1897 = vrot.slane %v614, 2
      %v1898 = vsel %vm861, %v1895, %v1897
      %v1899 = vrot.slane %v615, 2
      %v1900 = vrot.slane %v616, 2
      %v1901 = vsel %vm861, %v1899, %v1900
      %v1902 = vrot.slane %v617, 2
      %v1903 = vsel %vm861, %v1900, %v1902
      %v1904 = vrot.slane %v618, 2
      %v1905 = vrot.slane %v619, 2
      %v1906 = vsel %vm861, %v1904, %v1905
      %v1907 = vrot.slane %v620, 2
      %v1908 = vsel %vm861, %v1905, %v1907
      %v1909 = vrot.slane %v621, 2
      %v1910 = vrot.slane %v622, 2
      %v1911 = vsel %vm861, %v1909, %v1910
      %v1912 = vrot.slane %v623, 2
      %v1913 = vsel %vm861, %v1910, %v1912
      %v1914 = vrot.slane %v624, 2
      %v1915 = vrot.slane %v625, 2
      %v1916 = vsel %vm861, %v1914, %v1915
      %v1917 = vrot.slane %v626, 2
      %v1918 = vsel %vm861, %v1915, %v1917
      %v1919 = vrot.slane %v627, 2
      %v1920 = vrot.slane %v628, 2
      %v1921 = vsel %vm861, %v1919, %v1920
      %v1922 = vrot.slane %v629, 2
      %v1923 = vsel %vm861, %v1920, %v1922
      %v1924 = vrot.slane %v630, 2
      %v1925 = vrot.slane %v631, 2
      %v1926 = vsel %vm861, %v1924, %v1925
      %v1927 = vrot.slane %v632, 2
      %v1928 = vsel %vm861, %v1925, %v1927
      %v1929 = vrot.slane %v633, 2
      %v1930 = vrot.slane %v634, 2
      %v1931 = vsel %vm861, %v1929, %v1930
      %v1932 = vrot.slane %v635, 2
      %v1933 = vsel %vm861, %v1930, %v1932
      %1934 = vrot.lane.b32.xlu0 %v1856, 32
      %v1935 = vpop.permute.xlu0 %1934
      %1936 = vrot.lane.b32.xlu0 %v1858, 32
      %v1937 = vpop.permute.xlu0 %1936
      %1938 = vrot.lane.b32.xlu0 %v1861, 32
      %v1939 = vpop.permute.xlu0 %1938
      %1940 = vrot.lane.b32.xlu0 %v1863, 32
      %v1941 = vpop.permute.xlu0 %1940
      %1942 = vrot.lane.b32.xlu0 %v1866, 32
      %v1943 = vpop.permute.xlu0 %1942
      %1944 = vrot.lane.b32.xlu0 %v1868, 32
      %v1945 = vpop.permute.xlu0 %1944
      %1946 = vrot.lane.b32.xlu0 %v1871, 32
      %v1947 = vpop.permute.xlu0 %1946
      %1948 = vrot.lane.b32.xlu0 %v1873, 32
      %v1949 = vpop.permute.xlu0 %1948
      %1950 = vrot.lane.b32.xlu0 %v1876, 32
      %v1951 = vpop.permute.xlu0 %1950
      %1952 = vrot.lane.b32.xlu0 %v1878, 32
      %v1953 = vpop.permute.xlu0 %1952
      %1954 = vrot.lane.b32.xlu0 %v1881, 32
      %v1955 = vpop.permute.xlu0 %1954
      %1956 = vrot.lane.b32.xlu0 %v1883, 32
      %v1957 = vpop.permute.xlu0 %1956
      %1958 = vrot.lane.b32.xlu0 %v1886, 32
      %v1959 = vpop.permute.xlu0 %1958
      %1960 = vrot.lane.b32.xlu0 %v1888, 32
      %v1961 = vpop.permute.xlu0 %1960
      %1962 = vrot.lane.b32.xlu0 %v1891, 32
      %v1963 = vpop.permute.xlu0 %1962
      %1964 = vrot.lane.b32.xlu0 %v1893, 32
      %v1965 = vpop.permute.xlu0 %1964
      %1966 = vrot.lane.b32.xlu0 %v1896, 32
      %v1967 = vpop.permute.xlu0 %1966
      %1968 = vrot.lane.b32.xlu0 %v1898, 32
      %v1969 = vpop.permute.xlu0 %1968
      %1970 = vrot.lane.b32.xlu0 %v1901, 32
      %v1971 = vpop.permute.xlu0 %1970
      %1972 = vrot.lane.b32.xlu0 %v1903, 32
      %v1973 = vpop.permute.xlu0 %1972
      %1974 = vrot.lane.b32.xlu0 %v1906, 32
      %v1975 = vpop.permute.xlu0 %1974
      %1976 = vrot.lane.b32.xlu0 %v1908, 32
      %v1977 = vpop.permute.xlu0 %1976
      %1978 = vrot.lane.b32.xlu0 %v1911, 32
      %v1979 = vpop.permute.xlu0 %1978
      %1980 = vrot.lane.b32.xlu0 %v1913, 32
      %v1981 = vpop.permute.xlu0 %1980
      %1982 = vrot.lane.b32.xlu0 %v1916, 32
      %v1983 = vpop.permute.xlu0 %1982
      %1984 = vrot.lane.b32.xlu0 %v1918, 32
      %v1985 = vpop.permute.xlu0 %1984
      %1986 = vrot.lane.b32.xlu0 %v1921, 32
      %v1987 = vpop.permute.xlu0 %1986
      %1988 = vrot.lane.b32.xlu0 %v1923, 32
      %v1989 = vpop.permute.xlu0 %1988
      %1990 = vrot.lane.b32.xlu0 %v1926, 32
      %v1991 = vpop.permute.xlu0 %1990
      %1992 = vrot.lane.b32.xlu0 %v1928, 32
      %v1993 = vpop.permute.xlu0 %1992
      %1994 = vrot.lane.b32.xlu0 %v1931, 32
      %v1995 = vpop.permute.xlu0 %1994
      %1996 = vrot.lane.b32.xlu0 %v1933, 32
      %v1997 = vpop.permute.xlu0 %1996
      %vm2030 = vcmask 31744
      %v2031 = vsel %vm2030, %v388, %v766
      %v2032 = vsel %vm2030, %v389, %v768
      %v2033 = vsel %vm2030, %v391, %v770
      %v2034 = vsel %vm2030, %v392, %v772
      %v2035 = vsel %vm2030, %v394, %v774
      %v2036 = vsel %vm2030, %v395, %v776
      %v2037 = vsel %vm2030, %v397, %v778
      %v2038 = vsel %vm2030, %v398, %v780
      %v2039 = vsel %vm2030, %v400, %v782
      %v2040 = vsel %vm2030, %v401, %v784
      %v2041 = vsel %vm2030, %v403, %v786
      %v2042 = vsel %vm2030, %v404, %v788
      %v2043 = vsel %vm2030, %v406, %v790
      %v2044 = vsel %vm2030, %v407, %v792
      %v2045 = vsel %vm2030, %v409, %v794
      %v2046 = vsel %vm2030, %v410, %v796
      %v2047 = vsel %vm2030, %v412, %v798
      %v2048 = vsel %vm2030, %v413, %v800
      %v2049 = vsel %vm2030, %v415, %v802
      %v2050 = vsel %vm2030, %v416, %v804
      %v2051 = vsel %vm2030, %v418, %v806
      %v2052 = vsel %vm2030, %v419, %v808
      %v2053 = vsel %vm2030, %v421, %v810
      %v2054 = vsel %vm2030, %v422, %v812
      %v2055 = vsel %vm2030, %v424, %v814
      %v2056 = vsel %vm2030, %v425, %v816
      %v2057 = vsel %vm2030, %v427, %v818
      %v2058 = vsel %vm2030, %v428, %v820
      %v2059 = vsel %vm2030, %v430, %v822
      %v2060 = vsel %vm2030, %v431, %v824
      %v2061 = vsel %vm2030, %v433, %v826
      %v2062 = vsel %vm2030, %v434, %v828
      %vm2063 = vcmask 64512
      %v2064 = vsel %vm2063, %v2031, %v943
      %v2065 = vsel %vm2063, %v2032, %v945
      %v2066 = vsel %vm2063, %v2033, %v947
      %v2067 = vsel %vm2063, %v2034, %v949
      %v2068 = vsel %vm2063, %v2035, %v951
      %v2069 = vsel %vm2063, %v2036, %v953
      %v2070 = vsel %vm2063, %v2037, %v955
      %v2071 = vsel %vm2063, %v2038, %v957
      %v2072 = vsel %vm2063, %v2039, %v959
      %v2073 = vsel %vm2063, %v2040, %v961
      %v2074 = vsel %vm2063, %v2041, %v963
      %v2075 = vsel %vm2063, %v2042, %v965
      %v2076 = vsel %vm2063, %v2043, %v967
      %v2077 = vsel %vm2063, %v2044, %v969
      %v2078 = vsel %vm2063, %v2045, %v971
      %v2079 = vsel %vm2063, %v2046, %v973
      %v2080 = vsel %vm2063, %v2047, %v975
      %v2081 = vsel %vm2063, %v2048, %v977
      %v2082 = vsel %vm2063, %v2049, %v979
      %v2083 = vsel %vm2063, %v2050, %v981
      %v2084 = vsel %vm2063, %v2051, %v983
      %v2085 = vsel %vm2063, %v2052, %v985
      %v2086 = vsel %vm2063, %v2053, %v987
      %v2087 = vsel %vm2063, %v2054, %v989
      %v2088 = vsel %vm2063, %v2055, %v991
      %v2089 = vsel %vm2063, %v2056, %v993
      %v2090 = vsel %vm2063, %v2057, %v995
      %v2091 = vsel %vm2063, %v2058, %v997
      %v2092 = vsel %vm2063, %v2059, %v999
      %v2093 = vsel %vm2063, %v2060, %v1001
      %v2094 = vsel %vm2063, %v2061, %v1003
      %v2095 = vsel %vm2063, %v2062, %v1005
      %vm2096 = vcmask 97280
      %v2097 = vsel %vm2096, %v2064, %v1071
      %v2098 = vsel %vm2096, %v2065, %v1073
      %v2099 = vsel %vm2096, %v2066, %v1075
      %v2100 = vsel %vm2096, %v2067, %v1077
      %v2101 = vsel %vm2096, %v2068, %v1079
      %v2102 = vsel %vm2096, %v2069, %v1081
      %v2103 = vsel %vm2096, %v2070, %v1083
      %v2104 = vsel %vm2096, %v2071, %v1085
      %v2105 = vsel %vm2096, %v2072, %v1087
      %v2106 = vsel %vm2096, %v2073, %v1089
      %v2107 = vsel %vm2096, %v2074, %v1091
      %v2108 = vsel %vm2096, %v2075, %v1093
      %v2109 = vsel %vm2096, %v2076, %v1095
      %v2110 = vsel %vm2096, %v2077, %v1097
      %v2111 = vsel %vm2096, %v2078, %v1099
      %v2112 = vsel %vm2096, %v2079, %v1101
      %v2113 = vsel %vm2096, %v2080, %v1103
      %v2114 = vsel %vm2096, %v2081, %v1105
      %v2115 = vsel %vm2096, %v2082, %v1107
      %v2116 = vsel %vm2096, %v2083, %v1109
      %v2117 = vsel %vm2096, %v2084, %v1111
      %v2118 = vsel %vm2096, %v2085, %v1113
      %v2119 = vsel %vm2096, %v2086, %v1115
      %v2120 = vsel %vm2096, %v2087, %v1117
      %v2121 = vsel %vm2096, %v2088, %v1119
      %v2122 = vsel %vm2096, %v2089, %v1121
      %v2123 = vsel %vm2096, %v2090, %v1123
      %v2124 = vsel %vm2096, %v2091, %v1125
      %v2125 = vsel %vm2096, %v2092, %v1127
      %v2126 = vsel %vm2096, %v2093, %v1129
      %v2127 = vsel %vm2096, %v2094, %v1131
      %v2128 = vsel %vm2096, %v2095, %v1133
      %vm2129 = vcmask 130048
      %v2130 = vsel %vm2129, %v2097, %v1263
      %v2131 = vsel %vm2129, %v2098, %v1265
      %v2132 = vsel %vm2129, %v2099, %v1267
      %v2133 = vsel %vm2129, %v2100, %v1269
      %v2134 = vsel %vm2129, %v2101, %v1271
      %v2135 = vsel %vm2129, %v2102, %v1273
      %v2136 = vsel %vm2129, %v2103, %v1275
      %v2137 = vsel %vm2129, %v2104, %v1277
      %v2138 = vsel %vm2129, %v2105, %v1279
      %v2139 = vsel %vm2129, %v2106, %v1281
      %v2140 = vsel %vm2129, %v2107, %v1283
      %v2141 = vsel %vm2129, %v2108, %v1285
      %v2142 = vsel %vm2129, %v2109, %v1287
      %v2143 = vsel %vm2129, %v2110, %v1289
      %v2144 = vsel %vm2129, %v2111, %v1291
      %v2145 = vsel %vm2129, %v2112, %v1293
      %v2146 = vsel %vm2129, %v2113, %v1295
      %v2147 = vsel %vm2129, %v2114, %v1297
      %v2148 = vsel %vm2129, %v2115, %v1299
      %v2149 = vsel %vm2129, %v2116, %v1301
      %v2150 = vsel %vm2129, %v2117, %v1303
      %v2151 = vsel %vm2129, %v2118, %v1305
      %v2152 = vsel %vm2129, %v2119, %v1307
      %v2153 = vsel %vm2129, %v2120, %v1309
      %v2154 = vsel %vm2129, %v2121, %v1311
      %v2155 = vsel %vm2129, %v2122, %v1313
      %v2156 = vsel %vm2129, %v2123, %v1315
      %v2157 = vsel %vm2129, %v2124, %v1317
      %v2158 = vsel %vm2129, %v2125, %v1319
      %v2159 = vsel %vm2129, %v2126, %v1321
      %v2160 = vsel %vm2129, %v2127, %v1323
      %v2161 = vsel %vm2129, %v2128, %v1325
      %vm2162 = vcmask 162816
      %v2163 = vsel %vm2162, %v2130, %v1439
      %v2164 = vsel %vm2162, %v2131, %v1441
      %v2165 = vsel %vm2162, %v2132, %v1443
      %v2166 = vsel %vm2162, %v2133, %v1445
      %v2167 = vsel %vm2162, %v2134, %v1447
      %v2168 = vsel %vm2162, %v2135, %v1449
      %v2169 = vsel %vm2162, %v2136, %v1451
      %v2170 = vsel %vm2162, %v2137, %v1453
      %v2171 = vsel %vm2162, %v2138, %v1455
      %v2172 = vsel %vm2162, %v2139, %v1457
      %v2173 = vsel %vm2162, %v2140, %v1459
      %v2174 = vsel %vm2162, %v2141, %v1461
      %v2175 = vsel %vm2162, %v2142, %v1463
      %v2176 = vsel %vm2162, %v2143, %v1465
      %v2177 = vsel %vm2162, %v2144, %v1467
      %v2178 = vsel %vm2162, %v2145, %v1469
      %v2179 = vsel %vm2162, %v2146, %v1471
      %v2180 = vsel %vm2162, %v2147, %v1473
      %v2181 = vsel %vm2162, %v2148, %v1475
      %v2182 = vsel %vm2162, %v2149, %v1477
      %v2183 = vsel %vm2162, %v2150, %v1479
      %v2184 = vsel %vm2162, %v2151, %v1481
      %v2185 = vsel %vm2162, %v2152, %v1483
      %v2186 = vsel %vm2162, %v2153, %v1485
      %v2187 = vsel %vm2162, %v2154, %v1487
      %v2188 = vsel %vm2162, %v2155, %v1489
      %v2189 = vsel %vm2162, %v2156, %v1491
      %v2190 = vsel %vm2162, %v2157, %v1493
      %v2191 = vsel %vm2162, %v2158, %v1495
      %v2192 = vsel %vm2162, %v2159, %v1497
      %v2193 = vsel %vm2162, %v2160, %v1499
      %v2194 = vsel %vm2162, %v2161, %v1501
      %vm2195 = vcmask 195584
      %v2196 = vsel %vm2195, %v2163, %v1567
      %v2197 = vsel %vm2195, %v2164, %v1569
      %v2198 = vsel %vm2195, %v2165, %v1571
      %v2199 = vsel %vm2195, %v2166, %v1573
      %v2200 = vsel %vm2195, %v2167, %v1575
      %v2201 = vsel %vm2195, %v2168, %v1577
      %v2202 = vsel %vm2195, %v2169, %v1579
      %v2203 = vsel %vm2195, %v2170, %v1581
      %v2204 = vsel %vm2195, %v2171, %v1583
      %v2205 = vsel %vm2195, %v2172, %v1585
      %v2206 = vsel %vm2195, %v2173, %v1587
      %v2207 = vsel %vm2195, %v2174, %v1589
      %v2208 = vsel %vm2195, %v2175, %v1591
      %v2209 = vsel %vm2195, %v2176, %v1593
      %v2210 = vsel %vm2195, %v2177, %v1595
      %v2211 = vsel %vm2195, %v2178, %v1597
      %v2212 = vsel %vm2195, %v2179, %v1599
      %v2213 = vsel %vm2195, %v2180, %v1601
      %v2214 = vsel %vm2195, %v2181, %v1603
      %v2215 = vsel %vm2195, %v2182, %v1605
      %v2216 = vsel %vm2195, %v2183, %v1607
      %v2217 = vsel %vm2195, %v2184, %v1609
      %v2218 = vsel %vm2195, %v2185, %v1611
      %v2219 = vsel %vm2195, %v2186, %v1613
      %v2220 = vsel %vm2195, %v2187, %v1615
      %v2221 = vsel %vm2195, %v2188, %v1617
      %v2222 = vsel %vm2195, %v2189, %v1619
      %v2223 = vsel %vm2195, %v2190, %v1621
      %v2224 = vsel %vm2195, %v2191, %v1623
      %v2225 = vsel %vm2195, %v2192, %v1625
      %v2226 = vsel %vm2195, %v2193, %v1627
      %v2227 = vsel %vm2195, %v2194, %v1629
      %vm2228 = vcmask 228352
      %v2229 = vsel %vm2228, %v2196, %v1759
      %v2230 = vsel %vm2228, %v2197, %v1761
      %v2231 = vsel %vm2228, %v2198, %v1763
      %v2232 = vsel %vm2228, %v2199, %v1765
      %v2233 = vsel %vm2228, %v2200, %v1767
      %v2234 = vsel %vm2228, %v2201, %v1769
      %v2235 = vsel %vm2228, %v2202, %v1771
      %v2236 = vsel %vm2228, %v2203, %v1773
      %v2237 = vsel %vm2228, %v2204, %v1775
      %v2238 = vsel %vm2228, %v2205, %v1777
      %v2239 = vsel %vm2228, %v2206, %v1779
      %v2240 = vsel %vm2228, %v2207, %v1781
      %v2241 = vsel %vm2228, %v2208, %v1783
      %v2242 = vsel %vm2228, %v2209, %v1785
      %v2243 = vsel %vm2228, %v2210, %v1787
      %v2244 = vsel %vm2228, %v2211, %v1789
      %v2245 = vsel %vm2228, %v2212, %v1791
      %v2246 = vsel %vm2228, %v2213, %v1793
      %v2247 = vsel %vm2228, %v2214, %v1795
      %v2248 = vsel %vm2228, %v2215, %v1797
      %v2249 = vsel %vm2228, %v2216, %v1799
      %v2250 = vsel %vm2228, %v2217, %v1801
      %v2251 = vsel %vm2228, %v2218, %v1803
      %v2252 = vsel %vm2228, %v2219, %v1805
      %v2253 = vsel %vm2228, %v2220, %v1807
      %v2254 = vsel %vm2228, %v2221, %v1809
      %v2255 = vsel %vm2228, %v2222, %v1811
      %v2256 = vsel %vm2228, %v2223, %v1813
      %v2257 = vsel %vm2228, %v2224, %v1815
      %v2258 = vsel %vm2228, %v2225, %v1817
      %v2259 = vsel %vm2228, %v2226, %v1819
      %v2260 = vsel %vm2228, %v2227, %v1821
      %vm2261 = vcmask 261120
      %v2262 = vsel %vm2261, %v2229, %v1935
      %v2263 = vsel %vm2261, %v2230, %v1937
      %v2264 = vsel %vm2261, %v2231, %v1939
      %v2265 = vsel %vm2261, %v2232, %v1941
      %v2266 = vsel %vm2261, %v2233, %v1943
      %v2267 = vsel %vm2261, %v2234, %v1945
      %v2268 = vsel %vm2261, %v2235, %v1947
      %v2269 = vsel %vm2261, %v2236, %v1949
      %v2270 = vsel %vm2261, %v2237, %v1951
      %v2271 = vsel %vm2261, %v2238, %v1953
      %v2272 = vsel %vm2261, %v2239, %v1955
      %v2273 = vsel %vm2261, %v2240, %v1957
      %v2274 = vsel %vm2261, %v2241, %v1959
      %v2275 = vsel %vm2261, %v2242, %v1961
      %v2276 = vsel %vm2261, %v2243, %v1963
      %v2277 = vsel %vm2261, %v2244, %v1965
      %v2278 = vsel %vm2261, %v2245, %v1967
      %v2279 = vsel %vm2261, %v2246, %v1969
      %v2280 = vsel %vm2261, %v2247, %v1971
      %v2281 = vsel %vm2261, %v2248, %v1973
      %v2282 = vsel %vm2261, %v2249, %v1975
      %v2283 = vsel %vm2261, %v2250, %v1977
      %v2284 = vsel %vm2261, %v2251, %v1979
      %v2285 = vsel %vm2261, %v2252, %v1981
      %v2286 = vsel %vm2261, %v2253, %v1983
      %v2287 = vsel %vm2261, %v2254, %v1985
      %v2288 = vsel %vm2261, %v2255, %v1987
      %v2289 = vsel %vm2261, %v2256, %v1989
      %v2290 = vsel %vm2261, %v2257, %v1991
      %v2291 = vsel %vm2261, %v2258, %v1993
      %v2292 = vsel %vm2261, %v2259, %v1995
      %v2293 = vsel %vm2261, %v2260, %v1997
      %v2294 = vpack.c.bf16 %v2263, %v2262
      %v2295 = vpack.c.bf16 %v2265, %v2264
      %v2296 = vpack.c.bf16 %v2267, %v2266
      %v2297 = vpack.c.bf16 %v2269, %v2268
      %v2298 = vpack.c.bf16 %v2271, %v2270
      %v2299 = vpack.c.bf16 %v2273, %v2272
      %v2300 = vpack.c.bf16 %v2275, %v2274
      %v2301 = vpack.c.bf16 %v2277, %v2276
      %v2302 = vpack.c.bf16 %v2279, %v2278
      %v2303 = vpack.c.bf16 %v2281, %v2280
      %v2304 = vpack.c.bf16 %v2283, %v2282
      %v2305 = vpack.c.bf16 %v2285, %v2284
      %v2306 = vpack.c.bf16 %v2287, %v2286
      %v2307 = vpack.c.bf16 %v2289, %v2288
      %v2308 = vpack.c.bf16 %v2291, %v2290
      %v2309 = vpack.c.bf16 %v2293, %v2292
      %v2310 = vld [vmem:[%s1] sm:$0xf]
      %v2311 = vld [vmem:[%s1 + $0x4] sm:$0xf]
      %v2312 = vld [vmem:[%s1 + $0x8] sm:$0xf]
      %v2313 = vld [vmem:[%s1 + $0xc] sm:$0xf]
      %v2314 = vld [vmem:[%s1 + $0x10] sm:$0x3]
      %v2315 = vld [vmem:[%s2] sm:$0x1]
      %v2317 = vperm.slane %v2315, 0
      %v2324 = vunpack.c.l.b16 %v2310
      %v2325 = vunpack.c.l.b16 %v2311
      %v2326 = vunpack.c.l.b16 %v2312
      %v2327 = vunpack.c.l.b16 %v2313
      %v2328 = vunpack.c.l.b16 %v2314
      %v2329 = vpack.c.b16 %v2325, %v2324
      %v2330 = vpack.c.b16 %v2327, %v2326
      %v2331 = vpack.c.b16 %v2328, %v2328
      %vm2334 = vcmask 293888
      %v2336 = vsel %vm2334, %v2294, 0
      %v2339 = vsel %vm2334, %v2295, 0
      %v2342 = vsel %vm2334, %v2296, 0
      %v2345 = vsel %vm2334, %v2297, 0
      %v2348 = vsel %vm2334, %v2298, 0
      %v2351 = vsel %vm2334, %v2299, 0
      %v2354 = vsel %vm2334, %v2300, 0
      %v2357 = vsel %vm2334, %v2301, 0
      %v2360 = vsel %vm2334, %v2302, 0
      %v2363 = vsel %vm2334, %v2303, 0
      %v2366 = vsel %vm2334, %v2304, 0
      %v2369 = vsel %vm2334, %v2305, 0
      %v2372 = vsel %vm2334, %v2306, 0
      %v2375 = vsel %vm2334, %v2307, 0
      %v2378 = vsel %vm2334, %v2308, 0
      %v2381 = vsel %vm2334, %v2309, 0
      %vm2383 = vcmask 1041408
      %v2385 = vsel %vm2383, %v2331, 0
      %2387 = vmatpush.bf16.msra.mxu0 0
      %2388 = vmatpush.bf16.msra.mxu0 0
      %2389 = vmatpush.bf16.msra.mxu0 0
      %2390 = vmatpush.bf16.msra.mxu0 0
      %2391 = vmatpush.bf16.msra.mxu0 0
      %2392 = vmatpush.bf16.msra.mxu0 %v2385
      %2393 = vmatpush.bf16.msra.mxu0 %v2330
      %2394 = vmatpush.bf16.msra.mxu0 %v2329
      %2395 = vmatmul.bf16.gmra.mxu0 %v2336
      %v2396 = vpop.f32.mrf.mxu0
      %v2397 = vadd.f32 %v2317, %v2396
      %v2398 = vpop.f32.mrf.mxu0
      %v2399 = vadd.f32 %v2317, %v2398
      %2400 = vmatmul.bf16.gmra.mxu0 %v2339
      %v2401 = vpop.f32.mrf.mxu0
      %v2402 = vadd.f32 %v2317, %v2401
      %v2403 = vpop.f32.mrf.mxu0
      %v2404 = vadd.f32 %v2317, %v2403
      %2405 = vmatmul.bf16.gmra.mxu0 %v2342
      %v2406 = vpop.f32.mrf.mxu0
      %v2407 = vadd.f32 %v2317, %v2406
      %v2408 = vpop.f32.mrf.mxu0
      %v2409 = vadd.f32 %v2317, %v2408
      %2410 = vmatmul.bf16.gmra.mxu0 %v2345
      %v2411 = vpop.f32.mrf.mxu0
      %v2412 = vadd.f32 %v2317, %v2411
      %v2413 = vpop.f32.mrf.mxu0
      %v2414 = vadd.f32 %v2317, %v2413
      %2415 = vmatmul.bf16.gmra.mxu0 %v2348
      %v2416 = vpop.f32.mrf.mxu0
      %v2417 = vadd.f32 %v2317, %v2416
      %v2418 = vpop.f32.mrf.mxu0
      %v2419 = vadd.f32 %v2317, %v2418
      %2420 = vmatmul.bf16.gmra.mxu0 %v2351
      %v2421 = vpop.f32.mrf.mxu0
      %v2422 = vadd.f32 %v2317, %v2421
      %v2423 = vpop.f32.mrf.mxu0
      %v2424 = vadd.f32 %v2317, %v2423
      %2425 = vmatmul.bf16.gmra.mxu0 %v2354
      %v2426 = vpop.f32.mrf.mxu0
      %v2427 = vadd.f32 %v2317, %v2426
      %v2428 = vpop.f32.mrf.mxu0
      %v2429 = vadd.f32 %v2317, %v2428
      %2430 = vmatmul.bf16.gmra.mxu0 %v2357
      %v2431 = vpop.f32.mrf.mxu0
      %v2432 = vadd.f32 %v2317, %v2431
      %v2433 = vpop.f32.mrf.mxu0
      %v2434 = vadd.f32 %v2317, %v2433
      %2435 = vmatmul.bf16.gmra.mxu0 %v2360
      %v2436 = vpop.f32.mrf.mxu0
      %v2437 = vadd.f32 %v2317, %v2436
      %v2438 = vpop.f32.mrf.mxu0
      %v2439 = vadd.f32 %v2317, %v2438
      %2440 = vmatmul.bf16.gmra.mxu0 %v2363
      %v2441 = vpop.f32.mrf.mxu0
      %v2442 = vadd.f32 %v2317, %v2441
      %v2443 = vpop.f32.mrf.mxu0
      %v2444 = vadd.f32 %v2317, %v2443
      %2445 = vmatmul.bf16.gmra.mxu0 %v2366
      %v2446 = vpop.f32.mrf.mxu0
      %v2447 = vadd.f32 %v2317, %v2446
      %v2448 = vpop.f32.mrf.mxu0
      %v2449 = vadd.f32 %v2317, %v2448
      %2450 = vmatmul.bf16.gmra.mxu0 %v2369
      %v2451 = vpop.f32.mrf.mxu0
      %v2452 = vadd.f32 %v2317, %v2451
      %v2453 = vpop.f32.mrf.mxu0
      %v2454 = vadd.f32 %v2317, %v2453
      %2455 = vmatmul.bf16.gmra.mxu0 %v2372
      %v2456 = vpop.f32.mrf.mxu0
      %v2457 = vadd.f32 %v2317, %v2456
      %v2458 = vpop.f32.mrf.mxu0
      %v2459 = vadd.f32 %v2317, %v2458
      %2460 = vmatmul.bf16.gmra.mxu0 %v2375
      %v2461 = vpop.f32.mrf.mxu0
      %v2462 = vadd.f32 %v2317, %v2461
      %v2463 = vpop.f32.mrf.mxu0
      %v2464 = vadd.f32 %v2317, %v2463
      %2465 = vmatmul.bf16.gmra.mxu0 %v2378
      %v2466 = vpop.f32.mrf.mxu0
      %v2467 = vadd.f32 %v2317, %v2466
      %v2468 = vpop.f32.mrf.mxu0
      %v2469 = vadd.f32 %v2317, %v2468
      %2470 = vmatmul.bf16.gmra.mxu0 %v2381
      %v2471 = vpop.f32.mrf.mxu0
      %v2472 = vadd.f32 %v2317, %v2471
      %v2473 = vpop.f32.mrf.mxu0
      %v2474 = vadd.f32 %v2317, %v2473
      %2475 = vdwg.mxu0
      %v2476 = vmax.f32 %v2397, 0.0
      %v2477 = vmax.f32 %v2399, 0.0
      %v2478 = vmax.f32 %v2402, 0.0
      %v2479 = vmax.f32 %v2404, 0.0
      %v2480 = vmax.f32 %v2407, 0.0
      %v2481 = vmax.f32 %v2409, 0.0
      %v2482 = vmax.f32 %v2412, 0.0
      %v2483 = vmax.f32 %v2414, 0.0
      %v2484 = vmax.f32 %v2417, 0.0
      %v2485 = vmax.f32 %v2419, 0.0
      %v2486 = vmax.f32 %v2422, 0.0
      %v2487 = vmax.f32 %v2424, 0.0
      %v2488 = vmax.f32 %v2427, 0.0
      %v2489 = vmax.f32 %v2429, 0.0
      %v2490 = vmax.f32 %v2432, 0.0
      %v2491 = vmax.f32 %v2434, 0.0
      %v2492 = vmax.f32 %v2437, 0.0
      %v2493 = vmax.f32 %v2439, 0.0
      %v2494 = vmax.f32 %v2442, 0.0
      %v2495 = vmax.f32 %v2444, 0.0
      %v2496 = vmax.f32 %v2447, 0.0
      %v2497 = vmax.f32 %v2449, 0.0
      %v2498 = vmax.f32 %v2452, 0.0
      %v2499 = vmax.f32 %v2454, 0.0
      %v2500 = vmax.f32 %v2457, 0.0
      %v2501 = vmax.f32 %v2459, 0.0
      %v2502 = vmax.f32 %v2462, 0.0
      %v2503 = vmax.f32 %v2464, 0.0
      %v2504 = vmax.f32 %v2467, 0.0
      %v2505 = vmax.f32 %v2469, 0.0
      %v2506 = vmax.f32 %v2472, 0.0
      %v2507 = vmax.f32 %v2474, 0.0
      %v2508 = vadd.f32 %v2476, %v2477
      %v2509 = vadd.f32 %v2508, %v2478
      %v2510 = vadd.f32 %v2509, %v2479
      %v2511 = vadd.f32 %v2510, %v2480
      %v2512 = vadd.f32 %v2511, %v2481
      %v2513 = vadd.f32 %v2512, %v2482
      %v2514 = vadd.f32 %v2513, %v2483
      %v2515 = vadd.f32 %v2514, %v2484
      %v2516 = vadd.f32 %v2515, %v2485
      %v2517 = vadd.f32 %v2516, %v2486
      %v2518 = vadd.f32 %v2517, %v2487
      %v2519 = vadd.f32 %v2518, %v2488
      %v2520 = vadd.f32 %v2519, %v2489
      %v2521 = vadd.f32 %v2520, %v2490
      %v2522 = vadd.f32 %v2521, %v2491
      %v2523 = vadd.f32 %v2522, %v2492
      %v2524 = vadd.f32 %v2523, %v2493
      %v2525 = vadd.f32 %v2524, %v2494
      %v2526 = vadd.f32 %v2525, %v2495
      %v2527 = vadd.f32 %v2526, %v2496
      %v2528 = vadd.f32 %v2527, %v2497
      %v2529 = vadd.f32 %v2528, %v2498
      %v2530 = vadd.f32 %v2529, %v2499
      %v2531 = vadd.f32 %v2530, %v2500
      %v2532 = vadd.f32 %v2531, %v2501
      %v2533 = vadd.f32 %v2532, %v2502
      %v2534 = vadd.f32 %v2533, %v2503
      %v2535 = vadd.f32 %v2534, %v2504
      %v2536 = vadd.f32 %v2535, %v2505
      %v2537 = vadd.f32 %v2536, %v2506
      %v2538 = vadd.f32 %v2537, %v2507
      %2539 = vst [vmem:[%s327] sm:$0xff] %v2538
      %v2540 = vmul.f32 %v2476, %v2476
      %v2541 = vmul.f32 %v2477, %v2477
      %v2542 = vmul.f32 %v2478, %v2478
      %v2543 = vmul.f32 %v2479, %v2479
      %v2544 = vmul.f32 %v2480, %v2480
      %v2545 = vmul.f32 %v2481, %v2481
      %v2546 = vmul.f32 %v2482, %v2482
      %v2547 = vmul.f32 %v2483, %v2483
      %v2548 = vmul.f32 %v2484, %v2484
      %v2549 = vmul.f32 %v2485, %v2485
      %v2550 = vmul.f32 %v2486, %v2486
      %v2551 = vmul.f32 %v2487, %v2487
      %v2552 = vmul.f32 %v2488, %v2488
      %v2553 = vmul.f32 %v2489, %v2489
      %v2554 = vmul.f32 %v2490, %v2490
      %v2555 = vmul.f32 %v2491, %v2491
      %v2556 = vmul.f32 %v2492, %v2492
      %v2557 = vmul.f32 %v2493, %v2493
      %v2558 = vmul.f32 %v2494, %v2494
      %v2559 = vmul.f32 %v2495, %v2495
      %v2560 = vmul.f32 %v2496, %v2496
      %v2561 = vmul.f32 %v2497, %v2497
      %v2562 = vmul.f32 %v2498, %v2498
      %v2563 = vmul.f32 %v2499, %v2499
      %v2564 = vmul.f32 %v2500, %v2500
      %v2565 = vmul.f32 %v2501, %v2501
      %v2566 = vmul.f32 %v2502, %v2502
      %v2567 = vmul.f32 %v2503, %v2503
      %v2568 = vmul.f32 %v2504, %v2504
      %v2569 = vmul.f32 %v2505, %v2505
      %v2570 = vmul.f32 %v2506, %v2506
      %v2571 = vmul.f32 %v2507, %v2507
      %v2572 = vadd.f32 %v2540, %v2541
      %v2573 = vadd.f32 %v2572, %v2542
      %v2574 = vadd.f32 %v2573, %v2543
      %v2575 = vadd.f32 %v2574, %v2544
      %v2576 = vadd.f32 %v2575, %v2545
      %v2577 = vadd.f32 %v2576, %v2546
      %v2578 = vadd.f32 %v2577, %v2547
      %v2579 = vadd.f32 %v2578, %v2548
      %v2580 = vadd.f32 %v2579, %v2549
      %v2581 = vadd.f32 %v2580, %v2550
      %v2582 = vadd.f32 %v2581, %v2551
      %v2583 = vadd.f32 %v2582, %v2552
      %v2584 = vadd.f32 %v2583, %v2553
      %v2585 = vadd.f32 %v2584, %v2554
      %v2586 = vadd.f32 %v2585, %v2555
      %v2587 = vadd.f32 %v2586, %v2556
      %v2588 = vadd.f32 %v2587, %v2557
      %v2589 = vadd.f32 %v2588, %v2558
      %v2590 = vadd.f32 %v2589, %v2559
      %v2591 = vadd.f32 %v2590, %v2560
      %v2592 = vadd.f32 %v2591, %v2561
      %v2593 = vadd.f32 %v2592, %v2562
      %v2594 = vadd.f32 %v2593, %v2563
      %v2595 = vadd.f32 %v2594, %v2564
      %v2596 = vadd.f32 %v2595, %v2565
      %v2597 = vadd.f32 %v2596, %v2566
      %v2598 = vadd.f32 %v2597, %v2567
      %v2599 = vadd.f32 %v2598, %v2568
      %v2600 = vadd.f32 %v2599, %v2569
      %v2601 = vadd.f32 %v2600, %v2570
      %v2602 = vadd.f32 %v2601, %v2571
      %2603 = vst [vmem:[%s334] sm:$0xff] %v2602
      %v2636 = vrot.slane %v2476, 2
      %v2637 = vrot.slane %v2476, 4
      %v2638 = vrot.slane %v2476, 6
      %v2639 = vrot.slane %v2477, 2
      %v2640 = vrot.slane %v2477, 4
      %v2641 = vrot.slane %v2477, 6
      %v2642 = vrot.slane %v2478, 2
      %v2643 = vrot.slane %v2478, 4
      %v2644 = vrot.slane %v2478, 6
      %v2645 = vrot.slane %v2479, 2
      %v2646 = vrot.slane %v2479, 4
      %v2647 = vrot.slane %v2479, 6
      %v2648 = vrot.slane %v2480, 2
      %v2649 = vrot.slane %v2480, 4
      %v2650 = vrot.slane %v2480, 6
      %v2651 = vrot.slane %v2481, 2
      %v2652 = vrot.slane %v2481, 4
      %v2653 = vrot.slane %v2481, 6
      %v2654 = vrot.slane %v2482, 2
      %v2655 = vrot.slane %v2482, 4
      %v2656 = vrot.slane %v2482, 6
      %v2657 = vrot.slane %v2483, 2
      %v2658 = vrot.slane %v2483, 4
      %v2659 = vrot.slane %v2483, 6
      %v2660 = vrot.slane %v2484, 2
      %v2661 = vrot.slane %v2484, 4
      %v2662 = vrot.slane %v2484, 6
      %v2663 = vrot.slane %v2485, 2
      %v2664 = vrot.slane %v2485, 4
      %v2665 = vrot.slane %v2485, 6
      %v2666 = vrot.slane %v2486, 2
      %v2667 = vrot.slane %v2486, 4
      %v2668 = vrot.slane %v2486, 6
      %v2669 = vrot.slane %v2487, 2
      %v2670 = vrot.slane %v2487, 4
      %v2671 = vrot.slane %v2487, 6
      %v2672 = vrot.slane %v2488, 2
      %v2673 = vrot.slane %v2488, 4
      %v2674 = vrot.slane %v2488, 6
      %v2675 = vrot.slane %v2489, 2
      %v2676 = vrot.slane %v2489, 4
      %v2677 = vrot.slane %v2489, 6
      %v2678 = vrot.slane %v2490, 2
      %v2679 = vrot.slane %v2490, 4
      %v2680 = vrot.slane %v2490, 6
      %v2681 = vrot.slane %v2491, 2
      %v2682 = vrot.slane %v2491, 4
      %v2683 = vrot.slane %v2491, 6
      %v2684 = vrot.slane %v2492, 2
      %v2685 = vrot.slane %v2492, 4
      %v2686 = vrot.slane %v2492, 6
      %v2687 = vrot.slane %v2493, 2
      %v2688 = vrot.slane %v2493, 4
      %v2689 = vrot.slane %v2493, 6
      %v2690 = vrot.slane %v2494, 2
      %v2691 = vrot.slane %v2494, 4
      %v2692 = vrot.slane %v2494, 6
      %v2693 = vrot.slane %v2495, 2
      %v2694 = vrot.slane %v2495, 4
      %v2695 = vrot.slane %v2495, 6
      %v2696 = vrot.slane %v2496, 2
      %v2697 = vrot.slane %v2496, 4
      %v2698 = vrot.slane %v2496, 6
      %v2699 = vrot.slane %v2497, 2
      %v2700 = vrot.slane %v2497, 4
      %v2701 = vrot.slane %v2497, 6
      %v2702 = vrot.slane %v2498, 2
      %v2703 = vrot.slane %v2498, 4
      %v2704 = vrot.slane %v2498, 6
      %v2705 = vrot.slane %v2499, 2
      %v2706 = vrot.slane %v2499, 4
      %v2707 = vrot.slane %v2499, 6
      %v2708 = vrot.slane %v2500, 2
      %v2709 = vrot.slane %v2500, 4
      %v2710 = vrot.slane %v2500, 6
      %v2711 = vrot.slane %v2501, 2
      %v2712 = vrot.slane %v2501, 4
      %v2713 = vrot.slane %v2501, 6
      %v2714 = vrot.slane %v2502, 2
      %v2715 = vrot.slane %v2502, 4
      %v2716 = vrot.slane %v2502, 6
      %v2717 = vrot.slane %v2503, 2
      %v2718 = vrot.slane %v2503, 4
      %v2719 = vrot.slane %v2503, 6
      %v2720 = vrot.slane %v2504, 2
      %v2721 = vrot.slane %v2504, 4
      %v2722 = vrot.slane %v2504, 6
      %v2723 = vrot.slane %v2505, 2
      %v2724 = vrot.slane %v2505, 4
      %v2725 = vrot.slane %v2505, 6
      %v2726 = vrot.slane %v2506, 2
      %v2727 = vrot.slane %v2506, 4
      %v2728 = vrot.slane %v2506, 6
      %v2729 = vrot.slane %v2507, 2
      %v2730 = vrot.slane %v2507, 4
      %v2731 = vrot.slane %v2507, 6
      %v2828 = vsel %vm2383, %v2476, -inf
      %v2829 = vrot.slane %v2828, 4
      %v2830 = vmax.f32 %v2828, %v2829
      %v2831 = vrot.slane %v2830, 2
      %v2832 = vmax.f32 %v2830, %v2831
      %v2833 = vrot.slane %v2832, 1
      %v2834 = vmax.f32 %v2832, %v2833
      %v2835 = vsel %vm2383, %v2636, -inf
      %v2836 = vrot.slane %v2835, 4
      %v2837 = vmax.f32 %v2835, %v2836
      %v2838 = vrot.slane %v2837, 2
      %v2839 = vmax.f32 %v2837, %v2838
      %v2840 = vrot.slane %v2839, 1
      %v2841 = vmax.f32 %v2839, %v2840
      %v2842 = vsel %vm2383, %v2637, -inf
      %v2843 = vrot.slane %v2842, 4
      %v2844 = vmax.f32 %v2842, %v2843
      %v2845 = vrot.slane %v2844, 2
      %v2846 = vmax.f32 %v2844, %v2845
      %v2847 = vrot.slane %v2846, 1
      %v2848 = vmax.f32 %v2846, %v2847
      %v2849 = vsel %vm2383, %v2638, -inf
      %v2850 = vrot.slane %v2849, 4
      %v2851 = vmax.f32 %v2849, %v2850
      %v2852 = vrot.slane %v2851, 2
      %v2853 = vmax.f32 %v2851, %v2852
      %v2854 = vrot.slane %v2853, 1
      %v2855 = vmax.f32 %v2853, %v2854
      %v2856 = vsel %vm2383, %v2477, -inf
      %v2857 = vrot.slane %v2856, 4
      %v2858 = vmax.f32 %v2856, %v2857
      %v2859 = vrot.slane %v2858, 2
      %v2860 = vmax.f32 %v2858, %v2859
      %v2861 = vrot.slane %v2860, 1
      %v2862 = vmax.f32 %v2860, %v2861
      %v2863 = vsel %vm2383, %v2639, -inf
      %v2864 = vrot.slane %v2863, 4
      %v2865 = vmax.f32 %v2863, %v2864
      %v2866 = vrot.slane %v2865, 2
      %v2867 = vmax.f32 %v2865, %v2866
      %v2868 = vrot.slane %v2867, 1
      %v2869 = vmax.f32 %v2867, %v2868
      %v2870 = vsel %vm2383, %v2640, -inf
      %v2871 = vrot.slane %v2870, 4
      %v2872 = vmax.f32 %v2870, %v2871
      %v2873 = vrot.slane %v2872, 2
      %v2874 = vmax.f32 %v2872, %v2873
      %v2875 = vrot.slane %v2874, 1
      %v2876 = vmax.f32 %v2874, %v2875
      %v2877 = vsel %vm2383, %v2641, -inf
      %v2878 = vrot.slane %v2877, 4
      %v2879 = vmax.f32 %v2877, %v2878
      %v2880 = vrot.slane %v2879, 2
      %v2881 = vmax.f32 %v2879, %v2880
      %v2882 = vrot.slane %v2881, 1
      %v2883 = vmax.f32 %v2881, %v2882
      %v2884 = vsel %vm2383, %v2478, -inf
      %v2885 = vrot.slane %v2884, 4
      %v2886 = vmax.f32 %v2884, %v2885
      %v2887 = vrot.slane %v2886, 2
      %v2888 = vmax.f32 %v2886, %v2887
      %v2889 = vrot.slane %v2888, 1
      %v2890 = vmax.f32 %v2888, %v2889
      %v2891 = vsel %vm2383, %v2642, -inf
      %v2892 = vrot.slane %v2891, 4
      %v2893 = vmax.f32 %v2891, %v2892
      %v2894 = vrot.slane %v2893, 2
      %v2895 = vmax.f32 %v2893, %v2894
      %v2896 = vrot.slane %v2895, 1
      %v2897 = vmax.f32 %v2895, %v2896
      %v2898 = vsel %vm2383, %v2643, -inf
      %v2899 = vrot.slane %v2898, 4
      %v2900 = vmax.f32 %v2898, %v2899
      %v2901 = vrot.slane %v2900, 2
      %v2902 = vmax.f32 %v2900, %v2901
      %v2903 = vrot.slane %v2902, 1
      %v2904 = vmax.f32 %v2902, %v2903
      %v2905 = vsel %vm2383, %v2644, -inf
      %v2906 = vrot.slane %v2905, 4
      %v2907 = vmax.f32 %v2905, %v2906
      %v2908 = vrot.slane %v2907, 2
      %v2909 = vmax.f32 %v2907, %v2908
      %v2910 = vrot.slane %v2909, 1
      %v2911 = vmax.f32 %v2909, %v2910
      %v2912 = vsel %vm2383, %v2479, -inf
      %v2913 = vrot.slane %v2912, 4
      %v2914 = vmax.f32 %v2912, %v2913
      %v2915 = vrot.slane %v2914, 2
      %v2916 = vmax.f32 %v2914, %v2915
      %v2917 = vrot.slane %v2916, 1
      %v2918 = vmax.f32 %v2916, %v2917
      %v2919 = vsel %vm2383, %v2645, -inf
      %v2920 = vrot.slane %v2919, 4
      %v2921 = vmax.f32 %v2919, %v2920
      %v2922 = vrot.slane %v2921, 2
      %v2923 = vmax.f32 %v2921, %v2922
      %v2924 = vrot.slane %v2923, 1
      %v2925 = vmax.f32 %v2923, %v2924
      %v2926 = vsel %vm2383, %v2646, -inf
      %v2927 = vrot.slane %v2926, 4
      %v2928 = vmax.f32 %v2926, %v2927
      %v2929 = vrot.slane %v2928, 2
      %v2930 = vmax.f32 %v2928, %v2929
      %v2931 = vrot.slane %v2930, 1
      %v2932 = vmax.f32 %v2930, %v2931
      %v2933 = vsel %vm2383, %v2647, -inf
      %v2934 = vrot.slane %v2933, 4
      %v2935 = vmax.f32 %v2933, %v2934
      %v2936 = vrot.slane %v2935, 2
      %v2937 = vmax.f32 %v2935, %v2936
      %v2938 = vrot.slane %v2937, 1
      %v2939 = vmax.f32 %v2937, %v2938
      %v2940 = vsel %vm2383, %v2480, -inf
      %v2941 = vrot.slane %v2940, 4
      %v2942 = vmax.f32 %v2940, %v2941
      %v2943 = vrot.slane %v2942, 2
      %v2944 = vmax.f32 %v2942, %v2943
      %v2945 = vrot.slane %v2944, 1
      %v2946 = vmax.f32 %v2944, %v2945
      %v2947 = vsel %vm2383, %v2648, -inf
      %v2948 = vrot.slane %v2947, 4
      %v2949 = vmax.f32 %v2947, %v2948
      %v2950 = vrot.slane %v2949, 2
      %v2951 = vmax.f32 %v2949, %v2950
      %v2952 = vrot.slane %v2951, 1
      %v2953 = vmax.f32 %v2951, %v2952
      %v2954 = vsel %vm2383, %v2649, -inf
      %v2955 = vrot.slane %v2954, 4
      %v2956 = vmax.f32 %v2954, %v2955
      %v2957 = vrot.slane %v2956, 2
      %v2958 = vmax.f32 %v2956, %v2957
      %v2959 = vrot.slane %v2958, 1
      %v2960 = vmax.f32 %v2958, %v2959
      %v2961 = vsel %vm2383, %v2650, -inf
      %v2962 = vrot.slane %v2961, 4
      %v2963 = vmax.f32 %v2961, %v2962
      %v2964 = vrot.slane %v2963, 2
      %v2965 = vmax.f32 %v2963, %v2964
      %v2966 = vrot.slane %v2965, 1
      %v2967 = vmax.f32 %v2965, %v2966
      %v2968 = vsel %vm2383, %v2481, -inf
      %v2969 = vrot.slane %v2968, 4
      %v2970 = vmax.f32 %v2968, %v2969
      %v2971 = vrot.slane %v2970, 2
      %v2972 = vmax.f32 %v2970, %v2971
      %v2973 = vrot.slane %v2972, 1
      %v2974 = vmax.f32 %v2972, %v2973
      %v2975 = vsel %vm2383, %v2651, -inf
      %v2976 = vrot.slane %v2975, 4
      %v2977 = vmax.f32 %v2975, %v2976
      %v2978 = vrot.slane %v2977, 2
      %v2979 = vmax.f32 %v2977, %v2978
      %v2980 = vrot.slane %v2979, 1
      %v2981 = vmax.f32 %v2979, %v2980
      %v2982 = vsel %vm2383, %v2652, -inf
      %v2983 = vrot.slane %v2982, 4
      %v2984 = vmax.f32 %v2982, %v2983
      %v2985 = vrot.slane %v2984, 2
      %v2986 = vmax.f32 %v2984, %v2985
      %v2987 = vrot.slane %v2986, 1
      %v2988 = vmax.f32 %v2986, %v2987
      %v2989 = vsel %vm2383, %v2653, -inf
      %v2990 = vrot.slane %v2989, 4
      %v2991 = vmax.f32 %v2989, %v2990
      %v2992 = vrot.slane %v2991, 2
      %v2993 = vmax.f32 %v2991, %v2992
      %v2994 = vrot.slane %v2993, 1
      %v2995 = vmax.f32 %v2993, %v2994
      %v2996 = vsel %vm2383, %v2482, -inf
      %v2997 = vrot.slane %v2996, 4
      %v2998 = vmax.f32 %v2996, %v2997
      %v2999 = vrot.slane %v2998, 2
      %v3000 = vmax.f32 %v2998, %v2999
      %v3001 = vrot.slane %v3000, 1
      %v3002 = vmax.f32 %v3000, %v3001
      %v3003 = vsel %vm2383, %v2654, -inf
      %v3004 = vrot.slane %v3003, 4
      %v3005 = vmax.f32 %v3003, %v3004
      %v3006 = vrot.slane %v3005, 2
      %v3007 = vmax.f32 %v3005, %v3006
      %v3008 = vrot.slane %v3007, 1
      %v3009 = vmax.f32 %v3007, %v3008
      %v3010 = vsel %vm2383, %v2655, -inf
      %v3011 = vrot.slane %v3010, 4
      %v3012 = vmax.f32 %v3010, %v3011
      %v3013 = vrot.slane %v3012, 2
      %v3014 = vmax.f32 %v3012, %v3013
      %v3015 = vrot.slane %v3014, 1
      %v3016 = vmax.f32 %v3014, %v3015
      %v3017 = vsel %vm2383, %v2656, -inf
      %v3018 = vrot.slane %v3017, 4
      %v3019 = vmax.f32 %v3017, %v3018
      %v3020 = vrot.slane %v3019, 2
      %v3021 = vmax.f32 %v3019, %v3020
      %v3022 = vrot.slane %v3021, 1
      %v3023 = vmax.f32 %v3021, %v3022
      %v3024 = vsel %vm2383, %v2483, -inf
      %v3025 = vrot.slane %v3024, 4
      %v3026 = vmax.f32 %v3024, %v3025
      %v3027 = vrot.slane %v3026, 2
      %v3028 = vmax.f32 %v3026, %v3027
      %v3029 = vrot.slane %v3028, 1
      %v3030 = vmax.f32 %v3028, %v3029
      %v3031 = vsel %vm2383, %v2657, -inf
      %v3032 = vrot.slane %v3031, 4
      %v3033 = vmax.f32 %v3031, %v3032
      %v3034 = vrot.slane %v3033, 2
      %v3035 = vmax.f32 %v3033, %v3034
      %v3036 = vrot.slane %v3035, 1
      %v3037 = vmax.f32 %v3035, %v3036
      %v3038 = vsel %vm2383, %v2658, -inf
      %v3039 = vrot.slane %v3038, 4
      %v3040 = vmax.f32 %v3038, %v3039
      %v3041 = vrot.slane %v3040, 2
      %v3042 = vmax.f32 %v3040, %v3041
      %v3043 = vrot.slane %v3042, 1
      %v3044 = vmax.f32 %v3042, %v3043
      %v3045 = vsel %vm2383, %v2659, -inf
      %v3046 = vrot.slane %v3045, 4
      %v3047 = vmax.f32 %v3045, %v3046
      %v3048 = vrot.slane %v3047, 2
      %v3049 = vmax.f32 %v3047, %v3048
      %v3050 = vrot.slane %v3049, 1
      %v3051 = vmax.f32 %v3049, %v3050
      %v3052 = vsel %vm2383, %v2484, -inf
      %v3053 = vrot.slane %v3052, 4
      %v3054 = vmax.f32 %v3052, %v3053
      %v3055 = vrot.slane %v3054, 2
      %v3056 = vmax.f32 %v3054, %v3055
      %v3057 = vrot.slane %v3056, 1
      %v3058 = vmax.f32 %v3056, %v3057
      %v3059 = vsel %vm2383, %v2660, -inf
      %v3060 = vrot.slane %v3059, 4
      %v3061 = vmax.f32 %v3059, %v3060
      %v3062 = vrot.slane %v3061, 2
      %v3063 = vmax.f32 %v3061, %v3062
      %v3064 = vrot.slane %v3063, 1
      %v3065 = vmax.f32 %v3063, %v3064
      %v3066 = vsel %vm2383, %v2661, -inf
      %v3067 = vrot.slane %v3066, 4
      %v3068 = vmax.f32 %v3066, %v3067
      %v3069 = vrot.slane %v3068, 2
      %v3070 = vmax.f32 %v3068, %v3069
      %v3071 = vrot.slane %v3070, 1
      %v3072 = vmax.f32 %v3070, %v3071
      %v3073 = vsel %vm2383, %v2662, -inf
      %v3074 = vrot.slane %v3073, 4
      %v3075 = vmax.f32 %v3073, %v3074
      %v3076 = vrot.slane %v3075, 2
      %v3077 = vmax.f32 %v3075, %v3076
      %v3078 = vrot.slane %v3077, 1
      %v3079 = vmax.f32 %v3077, %v3078
      %v3080 = vsel %vm2383, %v2485, -inf
      %v3081 = vrot.slane %v3080, 4
      %v3082 = vmax.f32 %v3080, %v3081
      %v3083 = vrot.slane %v3082, 2
      %v3084 = vmax.f32 %v3082, %v3083
      %v3085 = vrot.slane %v3084, 1
      %v3086 = vmax.f32 %v3084, %v3085
      %v3087 = vsel %vm2383, %v2663, -inf
      %v3088 = vrot.slane %v3087, 4
      %v3089 = vmax.f32 %v3087, %v3088
      %v3090 = vrot.slane %v3089, 2
      %v3091 = vmax.f32 %v3089, %v3090
      %v3092 = vrot.slane %v3091, 1
      %v3093 = vmax.f32 %v3091, %v3092
      %v3094 = vsel %vm2383, %v2664, -inf
      %v3095 = vrot.slane %v3094, 4
      %v3096 = vmax.f32 %v3094, %v3095
      %v3097 = vrot.slane %v3096, 2
      %v3098 = vmax.f32 %v3096, %v3097
      %v3099 = vrot.slane %v3098, 1
      %v3100 = vmax.f32 %v3098, %v3099
      %v3101 = vsel %vm2383, %v2665, -inf
      %v3102 = vrot.slane %v3101, 4
      %v3103 = vmax.f32 %v3101, %v3102
      %v3104 = vrot.slane %v3103, 2
      %v3105 = vmax.f32 %v3103, %v3104
      %v3106 = vrot.slane %v3105, 1
      %v3107 = vmax.f32 %v3105, %v3106
      %v3108 = vsel %vm2383, %v2486, -inf
      %v3109 = vrot.slane %v3108, 4
      %v3110 = vmax.f32 %v3108, %v3109
      %v3111 = vrot.slane %v3110, 2
      %v3112 = vmax.f32 %v3110, %v3111
      %v3113 = vrot.slane %v3112, 1
      %v3114 = vmax.f32 %v3112, %v3113
      %v3115 = vsel %vm2383, %v2666, -inf
      %v3116 = vrot.slane %v3115, 4
      %v3117 = vmax.f32 %v3115, %v3116
      %v3118 = vrot.slane %v3117, 2
      %v3119 = vmax.f32 %v3117, %v3118
      %v3120 = vrot.slane %v3119, 1
      %v3121 = vmax.f32 %v3119, %v3120
      %v3122 = vsel %vm2383, %v2667, -inf
      %v3123 = vrot.slane %v3122, 4
      %v3124 = vmax.f32 %v3122, %v3123
      %v3125 = vrot.slane %v3124, 2
      %v3126 = vmax.f32 %v3124, %v3125
      %v3127 = vrot.slane %v3126, 1
      %v3128 = vmax.f32 %v3126, %v3127
      %v3129 = vsel %vm2383, %v2668, -inf
      %v3130 = vrot.slane %v3129, 4
      %v3131 = vmax.f32 %v3129, %v3130
      %v3132 = vrot.slane %v3131, 2
      %v3133 = vmax.f32 %v3131, %v3132
      %v3134 = vrot.slane %v3133, 1
      %v3135 = vmax.f32 %v3133, %v3134
      %v3136 = vsel %vm2383, %v2487, -inf
      %v3137 = vrot.slane %v3136, 4
      %v3138 = vmax.f32 %v3136, %v3137
      %v3139 = vrot.slane %v3138, 2
      %v3140 = vmax.f32 %v3138, %v3139
      %v3141 = vrot.slane %v3140, 1
      %v3142 = vmax.f32 %v3140, %v3141
      %v3143 = vsel %vm2383, %v2669, -inf
      %v3144 = vrot.slane %v3143, 4
      %v3145 = vmax.f32 %v3143, %v3144
      %v3146 = vrot.slane %v3145, 2
      %v3147 = vmax.f32 %v3145, %v3146
      %v3148 = vrot.slane %v3147, 1
      %v3149 = vmax.f32 %v3147, %v3148
      %v3150 = vsel %vm2383, %v2670, -inf
      %v3151 = vrot.slane %v3150, 4
      %v3152 = vmax.f32 %v3150, %v3151
      %v3153 = vrot.slane %v3152, 2
      %v3154 = vmax.f32 %v3152, %v3153
      %v3155 = vrot.slane %v3154, 1
      %v3156 = vmax.f32 %v3154, %v3155
      %v3157 = vsel %vm2383, %v2671, -inf
      %v3158 = vrot.slane %v3157, 4
      %v3159 = vmax.f32 %v3157, %v3158
      %v3160 = vrot.slane %v3159, 2
      %v3161 = vmax.f32 %v3159, %v3160
      %v3162 = vrot.slane %v3161, 1
      %v3163 = vmax.f32 %v3161, %v3162
      %v3164 = vsel %vm2383, %v2488, -inf
      %v3165 = vrot.slane %v3164, 4
      %v3166 = vmax.f32 %v3164, %v3165
      %v3167 = vrot.slane %v3166, 2
      %v3168 = vmax.f32 %v3166, %v3167
      %v3169 = vrot.slane %v3168, 1
      %v3170 = vmax.f32 %v3168, %v3169
      %v3171 = vsel %vm2383, %v2672, -inf
      %v3172 = vrot.slane %v3171, 4
      %v3173 = vmax.f32 %v3171, %v3172
      %v3174 = vrot.slane %v3173, 2
      %v3175 = vmax.f32 %v3173, %v3174
      %v3176 = vrot.slane %v3175, 1
      %v3177 = vmax.f32 %v3175, %v3176
      %v3178 = vsel %vm2383, %v2673, -inf
      %v3179 = vrot.slane %v3178, 4
      %v3180 = vmax.f32 %v3178, %v3179
      %v3181 = vrot.slane %v3180, 2
      %v3182 = vmax.f32 %v3180, %v3181
      %v3183 = vrot.slane %v3182, 1
      %v3184 = vmax.f32 %v3182, %v3183
      %v3185 = vsel %vm2383, %v2674, -inf
      %v3186 = vrot.slane %v3185, 4
      %v3187 = vmax.f32 %v3185, %v3186
      %v3188 = vrot.slane %v3187, 2
      %v3189 = vmax.f32 %v3187, %v3188
      %v3190 = vrot.slane %v3189, 1
      %v3191 = vmax.f32 %v3189, %v3190
      %v3192 = vsel %vm2383, %v2489, -inf
      %v3193 = vrot.slane %v3192, 4
      %v3194 = vmax.f32 %v3192, %v3193
      %v3195 = vrot.slane %v3194, 2
      %v3196 = vmax.f32 %v3194, %v3195
      %v3197 = vrot.slane %v3196, 1
      %v3198 = vmax.f32 %v3196, %v3197
      %v3199 = vsel %vm2383, %v2675, -inf
      %v3200 = vrot.slane %v3199, 4
      %v3201 = vmax.f32 %v3199, %v3200
      %v3202 = vrot.slane %v3201, 2
      %v3203 = vmax.f32 %v3201, %v3202
      %v3204 = vrot.slane %v3203, 1
      %v3205 = vmax.f32 %v3203, %v3204
      %v3206 = vsel %vm2383, %v2676, -inf
      %v3207 = vrot.slane %v3206, 4
      %v3208 = vmax.f32 %v3206, %v3207
      %v3209 = vrot.slane %v3208, 2
      %v3210 = vmax.f32 %v3208, %v3209
      %v3211 = vrot.slane %v3210, 1
      %v3212 = vmax.f32 %v3210, %v3211
      %v3213 = vsel %vm2383, %v2677, -inf
      %v3214 = vrot.slane %v3213, 4
      %v3215 = vmax.f32 %v3213, %v3214
      %v3216 = vrot.slane %v3215, 2
      %v3217 = vmax.f32 %v3215, %v3216
      %v3218 = vrot.slane %v3217, 1
      %v3219 = vmax.f32 %v3217, %v3218
      %v3220 = vsel %vm2383, %v2490, -inf
      %v3221 = vrot.slane %v3220, 4
      %v3222 = vmax.f32 %v3220, %v3221
      %v3223 = vrot.slane %v3222, 2
      %v3224 = vmax.f32 %v3222, %v3223
      %v3225 = vrot.slane %v3224, 1
      %v3226 = vmax.f32 %v3224, %v3225
      %v3227 = vsel %vm2383, %v2678, -inf
      %v3228 = vrot.slane %v3227, 4
      %v3229 = vmax.f32 %v3227, %v3228
      %v3230 = vrot.slane %v3229, 2
      %v3231 = vmax.f32 %v3229, %v3230
      %v3232 = vrot.slane %v3231, 1
      %v3233 = vmax.f32 %v3231, %v3232
      %v3234 = vsel %vm2383, %v2679, -inf
      %v3235 = vrot.slane %v3234, 4
      %v3236 = vmax.f32 %v3234, %v3235
      %v3237 = vrot.slane %v3236, 2
      %v3238 = vmax.f32 %v3236, %v3237
      %v3239 = vrot.slane %v3238, 1
      %v3240 = vmax.f32 %v3238, %v3239
      %v3241 = vsel %vm2383, %v2680, -inf
      %v3242 = vrot.slane %v3241, 4
      %v3243 = vmax.f32 %v3241, %v3242
      %v3244 = vrot.slane %v3243, 2
      %v3245 = vmax.f32 %v3243, %v3244
      %v3246 = vrot.slane %v3245, 1
      %v3247 = vmax.f32 %v3245, %v3246
      %v3248 = vsel %vm2383, %v2491, -inf
      %v3249 = vrot.slane %v3248, 4
      %v3250 = vmax.f32 %v3248, %v3249
      %v3251 = vrot.slane %v3250, 2
      %v3252 = vmax.f32 %v3250, %v3251
      %v3253 = vrot.slane %v3252, 1
      %v3254 = vmax.f32 %v3252, %v3253
      %v3255 = vsel %vm2383, %v2681, -inf
      %v3256 = vrot.slane %v3255, 4
      %v3257 = vmax.f32 %v3255, %v3256
      %v3258 = vrot.slane %v3257, 2
      %v3259 = vmax.f32 %v3257, %v3258
      %v3260 = vrot.slane %v3259, 1
      %v3261 = vmax.f32 %v3259, %v3260
      %v3262 = vsel %vm2383, %v2682, -inf
      %v3263 = vrot.slane %v3262, 4
      %v3264 = vmax.f32 %v3262, %v3263
      %v3265 = vrot.slane %v3264, 2
      %v3266 = vmax.f32 %v3264, %v3265
      %v3267 = vrot.slane %v3266, 1
      %v3268 = vmax.f32 %v3266, %v3267
      %v3269 = vsel %vm2383, %v2683, -inf
      %v3270 = vrot.slane %v3269, 4
      %v3271 = vmax.f32 %v3269, %v3270
      %v3272 = vrot.slane %v3271, 2
      %v3273 = vmax.f32 %v3271, %v3272
      %v3274 = vrot.slane %v3273, 1
      %v3275 = vmax.f32 %v3273, %v3274
      %v3276 = vsel %vm2383, %v2492, -inf
      %v3277 = vrot.slane %v3276, 4
      %v3278 = vmax.f32 %v3276, %v3277
      %v3279 = vrot.slane %v3278, 2
      %v3280 = vmax.f32 %v3278, %v3279
      %v3281 = vrot.slane %v3280, 1
      %v3282 = vmax.f32 %v3280, %v3281
      %v3283 = vsel %vm2383, %v2684, -inf
      %v3284 = vrot.slane %v3283, 4
      %v3285 = vmax.f32 %v3283, %v3284
      %v3286 = vrot.slane %v3285, 2
      %v3287 = vmax.f32 %v3285, %v3286
      %v3288 = vrot.slane %v3287, 1
      %v3289 = vmax.f32 %v3287, %v3288
      %v3290 = vsel %vm2383, %v2685, -inf
      %v3291 = vrot.slane %v3290, 4
      %v3292 = vmax.f32 %v3290, %v3291
      %v3293 = vrot.slane %v3292, 2
      %v3294 = vmax.f32 %v3292, %v3293
      %v3295 = vrot.slane %v3294, 1
      %v3296 = vmax.f32 %v3294, %v3295
      %v3297 = vsel %vm2383, %v2686, -inf
      %v3298 = vrot.slane %v3297, 4
      %v3299 = vmax.f32 %v3297, %v3298
      %v3300 = vrot.slane %v3299, 2
      %v3301 = vmax.f32 %v3299, %v3300
      %v3302 = vrot.slane %v3301, 1
      %v3303 = vmax.f32 %v3301, %v3302
      %v3304 = vsel %vm2383, %v2493, -inf
      %v3305 = vrot.slane %v3304, 4
      %v3306 = vmax.f32 %v3304, %v3305
      %v3307 = vrot.slane %v3306, 2
      %v3308 = vmax.f32 %v3306, %v3307
      %v3309 = vrot.slane %v3308, 1
      %v3310 = vmax.f32 %v3308, %v3309
      %v3311 = vsel %vm2383, %v2687, -inf
      %v3312 = vrot.slane %v3311, 4
      %v3313 = vmax.f32 %v3311, %v3312
      %v3314 = vrot.slane %v3313, 2
      %v3315 = vmax.f32 %v3313, %v3314
      %v3316 = vrot.slane %v3315, 1
      %v3317 = vmax.f32 %v3315, %v3316
      %v3318 = vsel %vm2383, %v2688, -inf
      %v3319 = vrot.slane %v3318, 4
      %v3320 = vmax.f32 %v3318, %v3319
      %v3321 = vrot.slane %v3320, 2
      %v3322 = vmax.f32 %v3320, %v3321
      %v3323 = vrot.slane %v3322, 1
      %v3324 = vmax.f32 %v3322, %v3323
      %v3325 = vsel %vm2383, %v2689, -inf
      %v3326 = vrot.slane %v3325, 4
      %v3327 = vmax.f32 %v3325, %v3326
      %v3328 = vrot.slane %v3327, 2
      %v3329 = vmax.f32 %v3327, %v3328
      %v3330 = vrot.slane %v3329, 1
      %v3331 = vmax.f32 %v3329, %v3330
      %v3332 = vsel %vm2383, %v2494, -inf
      %v3333 = vrot.slane %v3332, 4
      %v3334 = vmax.f32 %v3332, %v3333
      %v3335 = vrot.slane %v3334, 2
      %v3336 = vmax.f32 %v3334, %v3335
      %v3337 = vrot.slane %v3336, 1
      %v3338 = vmax.f32 %v3336, %v3337
      %v3339 = vsel %vm2383, %v2690, -inf
      %v3340 = vrot.slane %v3339, 4
      %v3341 = vmax.f32 %v3339, %v3340
      %v3342 = vrot.slane %v3341, 2
      %v3343 = vmax.f32 %v3341, %v3342
      %v3344 = vrot.slane %v3343, 1
      %v3345 = vmax.f32 %v3343, %v3344
      %v3346 = vsel %vm2383, %v2691, -inf
      %v3347 = vrot.slane %v3346, 4
      %v3348 = vmax.f32 %v3346, %v3347
      %v3349 = vrot.slane %v3348, 2
      %v3350 = vmax.f32 %v3348, %v3349
      %v3351 = vrot.slane %v3350, 1
      %v3352 = vmax.f32 %v3350, %v3351
      %v3353 = vsel %vm2383, %v2692, -inf
      %v3354 = vrot.slane %v3353, 4
      %v3355 = vmax.f32 %v3353, %v3354
      %v3356 = vrot.slane %v3355, 2
      %v3357 = vmax.f32 %v3355, %v3356
      %v3358 = vrot.slane %v3357, 1
      %v3359 = vmax.f32 %v3357, %v3358
      %v3360 = vsel %vm2383, %v2495, -inf
      %v3361 = vrot.slane %v3360, 4
      %v3362 = vmax.f32 %v3360, %v3361
      %v3363 = vrot.slane %v3362, 2
      %v3364 = vmax.f32 %v3362, %v3363
      %v3365 = vrot.slane %v3364, 1
      %v3366 = vmax.f32 %v3364, %v3365
      %v3367 = vsel %vm2383, %v2693, -inf
      %v3368 = vrot.slane %v3367, 4
      %v3369 = vmax.f32 %v3367, %v3368
      %v3370 = vrot.slane %v3369, 2
      %v3371 = vmax.f32 %v3369, %v3370
      %v3372 = vrot.slane %v3371, 1
      %v3373 = vmax.f32 %v3371, %v3372
      %v3374 = vsel %vm2383, %v2694, -inf
      %v3375 = vrot.slane %v3374, 4
      %v3376 = vmax.f32 %v3374, %v3375
      %v3377 = vrot.slane %v3376, 2
      %v3378 = vmax.f32 %v3376, %v3377
      %v3379 = vrot.slane %v3378, 1
      %v3380 = vmax.f32 %v3378, %v3379
      %v3381 = vsel %vm2383, %v2695, -inf
      %v3382 = vrot.slane %v3381, 4
      %v3383 = vmax.f32 %v3381, %v3382
      %v3384 = vrot.slane %v3383, 2
      %v3385 = vmax.f32 %v3383, %v3384
      %v3386 = vrot.slane %v3385, 1
      %v3387 = vmax.f32 %v3385, %v3386
      %v3388 = vsel %vm2383, %v2496, -inf
      %v3389 = vrot.slane %v3388, 4
      %v3390 = vmax.f32 %v3388, %v3389
      %v3391 = vrot.slane %v3390, 2
      %v3392 = vmax.f32 %v3390, %v3391
      %v3393 = vrot.slane %v3392, 1
      %v3394 = vmax.f32 %v3392, %v3393
      %v3395 = vsel %vm2383, %v2696, -inf
      %v3396 = vrot.slane %v3395, 4
      %v3397 = vmax.f32 %v3395, %v3396
      %v3398 = vrot.slane %v3397, 2
      %v3399 = vmax.f32 %v3397, %v3398
      %v3400 = vrot.slane %v3399, 1
      %v3401 = vmax.f32 %v3399, %v3400
      %v3402 = vsel %vm2383, %v2697, -inf
      %v3403 = vrot.slane %v3402, 4
      %v3404 = vmax.f32 %v3402, %v3403
      %v3405 = vrot.slane %v3404, 2
      %v3406 = vmax.f32 %v3404, %v3405
      %v3407 = vrot.slane %v3406, 1
      %v3408 = vmax.f32 %v3406, %v3407
      %v3409 = vsel %vm2383, %v2698, -inf
      %v3410 = vrot.slane %v3409, 4
      %v3411 = vmax.f32 %v3409, %v3410
      %v3412 = vrot.slane %v3411, 2
      %v3413 = vmax.f32 %v3411, %v3412
      %v3414 = vrot.slane %v3413, 1
      %v3415 = vmax.f32 %v3413, %v3414
      %v3416 = vsel %vm2383, %v2497, -inf
      %v3417 = vrot.slane %v3416, 4
      %v3418 = vmax.f32 %v3416, %v3417
      %v3419 = vrot.slane %v3418, 2
      %v3420 = vmax.f32 %v3418, %v3419
      %v3421 = vrot.slane %v3420, 1
      %v3422 = vmax.f32 %v3420, %v3421
      %v3423 = vsel %vm2383, %v2699, -inf
      %v3424 = vrot.slane %v3423, 4
      %v3425 = vmax.f32 %v3423, %v3424
      %v3426 = vrot.slane %v3425, 2
      %v3427 = vmax.f32 %v3425, %v3426
      %v3428 = vrot.slane %v3427, 1
      %v3429 = vmax.f32 %v3427, %v3428
      %v3430 = vsel %vm2383, %v2700, -inf
      %v3431 = vrot.slane %v3430, 4
      %v3432 = vmax.f32 %v3430, %v3431
      %v3433 = vrot.slane %v3432, 2
      %v3434 = vmax.f32 %v3432, %v3433
      %v3435 = vrot.slane %v3434, 1
      %v3436 = vmax.f32 %v3434, %v3435
      %v3437 = vsel %vm2383, %v2701, -inf
      %v3438 = vrot.slane %v3437, 4
      %v3439 = vmax.f32 %v3437, %v3438
      %v3440 = vrot.slane %v3439, 2
      %v3441 = vmax.f32 %v3439, %v3440
      %v3442 = vrot.slane %v3441, 1
      %v3443 = vmax.f32 %v3441, %v3442
      %v3444 = vsel %vm2383, %v2498, -inf
      %v3445 = vrot.slane %v3444, 4
      %v3446 = vmax.f32 %v3444, %v3445
      %v3447 = vrot.slane %v3446, 2
      %v3448 = vmax.f32 %v3446, %v3447
      %v3449 = vrot.slane %v3448, 1
      %v3450 = vmax.f32 %v3448, %v3449
      %v3451 = vsel %vm2383, %v2702, -inf
      %v3452 = vrot.slane %v3451, 4
      %v3453 = vmax.f32 %v3451, %v3452
      %v3454 = vrot.slane %v3453, 2
      %v3455 = vmax.f32 %v3453, %v3454
      %v3456 = vrot.slane %v3455, 1
      %v3457 = vmax.f32 %v3455, %v3456
      %v3458 = vsel %vm2383, %v2703, -inf
      %v3459 = vrot.slane %v3458, 4
      %v3460 = vmax.f32 %v3458, %v3459
      %v3461 = vrot.slane %v3460, 2
      %v3462 = vmax.f32 %v3460, %v3461
      %v3463 = vrot.slane %v3462, 1
      %v3464 = vmax.f32 %v3462, %v3463
      %v3465 = vsel %vm2383, %v2704, -inf
      %v3466 = vrot.slane %v3465, 4
      %v3467 = vmax.f32 %v3465, %v3466
      %v3468 = vrot.slane %v3467, 2
      %v3469 = vmax.f32 %v3467, %v3468
      %v3470 = vrot.slane %v3469, 1
      %v3471 = vmax.f32 %v3469, %v3470
      %v3472 = vsel %vm2383, %v2499, -inf
      %v3473 = vrot.slane %v3472, 4
      %v3474 = vmax.f32 %v3472, %v3473
      %v3475 = vrot.slane %v3474, 2
      %v3476 = vmax.f32 %v3474, %v3475
      %v3477 = vrot.slane %v3476, 1
      %v3478 = vmax.f32 %v3476, %v3477
      %v3479 = vsel %vm2383, %v2705, -inf
      %v3480 = vrot.slane %v3479, 4
      %v3481 = vmax.f32 %v3479, %v3480
      %v3482 = vrot.slane %v3481, 2
      %v3483 = vmax.f32 %v3481, %v3482
      %v3484 = vrot.slane %v3483, 1
      %v3485 = vmax.f32 %v3483, %v3484
      %v3486 = vsel %vm2383, %v2706, -inf
      %v3487 = vrot.slane %v3486, 4
      %v3488 = vmax.f32 %v3486, %v3487
      %v3489 = vrot.slane %v3488, 2
      %v3490 = vmax.f32 %v3488, %v3489
      %v3491 = vrot.slane %v3490, 1
      %v3492 = vmax.f32 %v3490, %v3491
      %v3493 = vsel %vm2383, %v2707, -inf
      %v3494 = vrot.slane %v3493, 4
      %v3495 = vmax.f32 %v3493, %v3494
      %v3496 = vrot.slane %v3495, 2
      %v3497 = vmax.f32 %v3495, %v3496
      %v3498 = vrot.slane %v3497, 1
      %v3499 = vmax.f32 %v3497, %v3498
      %v3500 = vsel %vm2383, %v2500, -inf
      %v3501 = vrot.slane %v3500, 4
      %v3502 = vmax.f32 %v3500, %v3501
      %v3503 = vrot.slane %v3502, 2
      %v3504 = vmax.f32 %v3502, %v3503
      %v3505 = vrot.slane %v3504, 1
      %v3506 = vmax.f32 %v3504, %v3505
      %v3507 = vsel %vm2383, %v2708, -inf
      %v3508 = vrot.slane %v3507, 4
      %v3509 = vmax.f32 %v3507, %v3508
      %v3510 = vrot.slane %v3509, 2
      %v3511 = vmax.f32 %v3509, %v3510
      %v3512 = vrot.slane %v3511, 1
      %v3513 = vmax.f32 %v3511, %v3512
      %v3514 = vsel %vm2383, %v2709, -inf
      %v3515 = vrot.slane %v3514, 4
      %v3516 = vmax.f32 %v3514, %v3515
      %v3517 = vrot.slane %v3516, 2
      %v3518 = vmax.f32 %v3516, %v3517
      %v3519 = vrot.slane %v3518, 1
      %v3520 = vmax.f32 %v3518, %v3519
      %v3521 = vsel %vm2383, %v2710, -inf
      %v3522 = vrot.slane %v3521, 4
      %v3523 = vmax.f32 %v3521, %v3522
      %v3524 = vrot.slane %v3523, 2
      %v3525 = vmax.f32 %v3523, %v3524
      %v3526 = vrot.slane %v3525, 1
      %v3527 = vmax.f32 %v3525, %v3526
      %v3528 = vsel %vm2383, %v2501, -inf
      %v3529 = vrot.slane %v3528, 4
      %v3530 = vmax.f32 %v3528, %v3529
      %v3531 = vrot.slane %v3530, 2
      %v3532 = vmax.f32 %v3530, %v3531
      %v3533 = vrot.slane %v3532, 1
      %v3534 = vmax.f32 %v3532, %v3533
      %v3535 = vsel %vm2383, %v2711, -inf
      %v3536 = vrot.slane %v3535, 4
      %v3537 = vmax.f32 %v3535, %v3536
      %v3538 = vrot.slane %v3537, 2
      %v3539 = vmax.f32 %v3537, %v3538
      %v3540 = vrot.slane %v3539, 1
      %v3541 = vmax.f32 %v3539, %v3540
      %v3542 = vsel %vm2383, %v2712, -inf
      %v3543 = vrot.slane %v3542, 4
      %v3544 = vmax.f32 %v3542, %v3543
      %v3545 = vrot.slane %v3544, 2
      %v3546 = vmax.f32 %v3544, %v3545
      %v3547 = vrot.slane %v3546, 1
      %v3548 = vmax.f32 %v3546, %v3547
      %v3549 = vsel %vm2383, %v2713, -inf
      %v3550 = vrot.slane %v3549, 4
      %v3551 = vmax.f32 %v3549, %v3550
      %v3552 = vrot.slane %v3551, 2
      %v3553 = vmax.f32 %v3551, %v3552
      %v3554 = vrot.slane %v3553, 1
      %v3555 = vmax.f32 %v3553, %v3554
      %v3556 = vsel %vm2383, %v2502, -inf
      %v3557 = vrot.slane %v3556, 4
      %v3558 = vmax.f32 %v3556, %v3557
      %v3559 = vrot.slane %v3558, 2
      %v3560 = vmax.f32 %v3558, %v3559
      %v3561 = vrot.slane %v3560, 1
      %v3562 = vmax.f32 %v3560, %v3561
      %v3563 = vsel %vm2383, %v2714, -inf
      %v3564 = vrot.slane %v3563, 4
      %v3565 = vmax.f32 %v3563, %v3564
      %v3566 = vrot.slane %v3565, 2
      %v3567 = vmax.f32 %v3565, %v3566
      %v3568 = vrot.slane %v3567, 1
      %v3569 = vmax.f32 %v3567, %v3568
      %v3570 = vsel %vm2383, %v2715, -inf
      %v3571 = vrot.slane %v3570, 4
      %v3572 = vmax.f32 %v3570, %v3571
      %v3573 = vrot.slane %v3572, 2
      %v3574 = vmax.f32 %v3572, %v3573
      %v3575 = vrot.slane %v3574, 1
      %v3576 = vmax.f32 %v3574, %v3575
      %v3577 = vsel %vm2383, %v2716, -inf
      %v3578 = vrot.slane %v3577, 4
      %v3579 = vmax.f32 %v3577, %v3578
      %v3580 = vrot.slane %v3579, 2
      %v3581 = vmax.f32 %v3579, %v3580
      %v3582 = vrot.slane %v3581, 1
      %v3583 = vmax.f32 %v3581, %v3582
      %v3584 = vsel %vm2383, %v2503, -inf
      %v3585 = vrot.slane %v3584, 4
      %v3586 = vmax.f32 %v3584, %v3585
      %v3587 = vrot.slane %v3586, 2
      %v3588 = vmax.f32 %v3586, %v3587
      %v3589 = vrot.slane %v3588, 1
      %v3590 = vmax.f32 %v3588, %v3589
      %v3591 = vsel %vm2383, %v2717, -inf
      %v3592 = vrot.slane %v3591, 4
      %v3593 = vmax.f32 %v3591, %v3592
      %v3594 = vrot.slane %v3593, 2
      %v3595 = vmax.f32 %v3593, %v3594
      %v3596 = vrot.slane %v3595, 1
      %v3597 = vmax.f32 %v3595, %v3596
      %v3598 = vsel %vm2383, %v2718, -inf
      %v3599 = vrot.slane %v3598, 4
      %v3600 = vmax.f32 %v3598, %v3599
      %v3601 = vrot.slane %v3600, 2
      %v3602 = vmax.f32 %v3600, %v3601
      %v3603 = vrot.slane %v3602, 1
      %v3604 = vmax.f32 %v3602, %v3603
      %v3605 = vsel %vm2383, %v2719, -inf
      %v3606 = vrot.slane %v3605, 4
      %v3607 = vmax.f32 %v3605, %v3606
      %v3608 = vrot.slane %v3607, 2
      %v3609 = vmax.f32 %v3607, %v3608
      %v3610 = vrot.slane %v3609, 1
      %v3611 = vmax.f32 %v3609, %v3610
      %v3612 = vsel %vm2383, %v2504, -inf
      %v3613 = vrot.slane %v3612, 4
      %v3614 = vmax.f32 %v3612, %v3613
      %v3615 = vrot.slane %v3614, 2
      %v3616 = vmax.f32 %v3614, %v3615
      %v3617 = vrot.slane %v3616, 1
      %v3618 = vmax.f32 %v3616, %v3617
      %v3619 = vsel %vm2383, %v2720, -inf
      %v3620 = vrot.slane %v3619, 4
      %v3621 = vmax.f32 %v3619, %v3620
      %v3622 = vrot.slane %v3621, 2
      %v3623 = vmax.f32 %v3621, %v3622
      %v3624 = vrot.slane %v3623, 1
      %v3625 = vmax.f32 %v3623, %v3624
      %v3626 = vsel %vm2383, %v2721, -inf
      %v3627 = vrot.slane %v3626, 4
      %v3628 = vmax.f32 %v3626, %v3627
      %v3629 = vrot.slane %v3628, 2
      %v3630 = vmax.f32 %v3628, %v3629
      %v3631 = vrot.slane %v3630, 1
      %v3632 = vmax.f32 %v3630, %v3631
      %v3633 = vsel %vm2383, %v2722, -inf
      %v3634 = vrot.slane %v3633, 4
      %v3635 = vmax.f32 %v3633, %v3634
      %v3636 = vrot.slane %v3635, 2
      %v3637 = vmax.f32 %v3635, %v3636
      %v3638 = vrot.slane %v3637, 1
      %v3639 = vmax.f32 %v3637, %v3638
      %v3640 = vsel %vm2383, %v2505, -inf
      %v3641 = vrot.slane %v3640, 4
      %v3642 = vmax.f32 %v3640, %v3641
      %v3643 = vrot.slane %v3642, 2
      %v3644 = vmax.f32 %v3642, %v3643
      %v3645 = vrot.slane %v3644, 1
      %v3646 = vmax.f32 %v3644, %v3645
      %v3647 = vsel %vm2383, %v2723, -inf
      %v3648 = vrot.slane %v3647, 4
      %v3649 = vmax.f32 %v3647, %v3648
      %v3650 = vrot.slane %v3649, 2
      %v3651 = vmax.f32 %v3649, %v3650
      %v3652 = vrot.slane %v3651, 1
      %v3653 = vmax.f32 %v3651, %v3652
      %v3654 = vsel %vm2383, %v2724, -inf
      %v3655 = vrot.slane %v3654, 4
      %v3656 = vmax.f32 %v3654, %v3655
      %v3657 = vrot.slane %v3656, 2
      %v3658 = vmax.f32 %v3656, %v3657
      %v3659 = vrot.slane %v3658, 1
      %v3660 = vmax.f32 %v3658, %v3659
      %v3661 = vsel %vm2383, %v2725, -inf
      %v3662 = vrot.slane %v3661, 4
      %v3663 = vmax.f32 %v3661, %v3662
      %v3664 = vrot.slane %v3663, 2
      %v3665 = vmax.f32 %v3663, %v3664
      %v3666 = vrot.slane %v3665, 1
      %v3667 = vmax.f32 %v3665, %v3666
      %v3668 = vsel %vm2383, %v2506, -inf
      %v3669 = vrot.slane %v3668, 4
      %v3670 = vmax.f32 %v3668, %v3669
      %v3671 = vrot.slane %v3670, 2
      %v3672 = vmax.f32 %v3670, %v3671
      %v3673 = vrot.slane %v3672, 1
      %v3674 = vmax.f32 %v3672, %v3673
      %v3675 = vsel %vm2383, %v2726, -inf
      %v3676 = vrot.slane %v3675, 4
      %v3677 = vmax.f32 %v3675, %v3676
      %v3678 = vrot.slane %v3677, 2
      %v3679 = vmax.f32 %v3677, %v3678
      %v3680 = vrot.slane %v3679, 1
      %v3681 = vmax.f32 %v3679, %v3680
      %v3682 = vsel %vm2383, %v2727, -inf
      %v3683 = vrot.slane %v3682, 4
      %v3684 = vmax.f32 %v3682, %v3683
      %v3685 = vrot.slane %v3684, 2
      %v3686 = vmax.f32 %v3684, %v3685
      %v3687 = vrot.slane %v3686, 1
      %v3688 = vmax.f32 %v3686, %v3687
      %v3689 = vsel %vm2383, %v2728, -inf
      %v3690 = vrot.slane %v3689, 4
      %v3691 = vmax.f32 %v3689, %v3690
      %v3692 = vrot.slane %v3691, 2
      %v3693 = vmax.f32 %v3691, %v3692
      %v3694 = vrot.slane %v3693, 1
      %v3695 = vmax.f32 %v3693, %v3694
      %v3696 = vsel %vm2383, %v2507, -inf
      %v3697 = vrot.slane %v3696, 4
      %v3698 = vmax.f32 %v3696, %v3697
      %v3699 = vrot.slane %v3698, 2
      %v3700 = vmax.f32 %v3698, %v3699
      %v3701 = vrot.slane %v3700, 1
      %v3702 = vmax.f32 %v3700, %v3701
      %v3703 = vsel %vm2383, %v2729, -inf
      %v3704 = vrot.slane %v3703, 4
      %v3705 = vmax.f32 %v3703, %v3704
      %v3706 = vrot.slane %v3705, 2
      %v3707 = vmax.f32 %v3705, %v3706
      %v3708 = vrot.slane %v3707, 1
      %v3709 = vmax.f32 %v3707, %v3708
      %v3710 = vsel %vm2383, %v2730, -inf
      %v3711 = vrot.slane %v3710, 4
      %v3712 = vmax.f32 %v3710, %v3711
      %v3713 = vrot.slane %v3712, 2
      %v3714 = vmax.f32 %v3712, %v3713
      %v3715 = vrot.slane %v3714, 1
      %v3716 = vmax.f32 %v3714, %v3715
      %v3717 = vsel %vm2383, %v2731, -inf
      %v3718 = vrot.slane %v3717, 4
      %v3719 = vmax.f32 %v3717, %v3718
      %v3720 = vrot.slane %v3719, 2
      %v3721 = vmax.f32 %v3719, %v3720
      %v3722 = vrot.slane %v3721, 1
      %v3723 = vmax.f32 %v3721, %v3722
      %v3724 = vmax.f32 %v2834, %v2890
      %v3725 = vmax.f32 %v2841, %v2897
      %v3726 = vmax.f32 %v2848, %v2904
      %v3727 = vmax.f32 %v2855, %v2911
      %v3728 = vmax.f32 %v2862, %v2918
      %v3729 = vmax.f32 %v2869, %v2925
      %v3730 = vmax.f32 %v2876, %v2932
      %v3731 = vmax.f32 %v2883, %v2939
      %v3732 = vmax.f32 %v2946, %v3002
      %v3733 = vmax.f32 %v2953, %v3009
      %v3734 = vmax.f32 %v2960, %v3016
      %v3735 = vmax.f32 %v2967, %v3023
      %v3736 = vmax.f32 %v2974, %v3030
      %v3737 = vmax.f32 %v2981, %v3037
      %v3738 = vmax.f32 %v2988, %v3044
      %v3739 = vmax.f32 %v2995, %v3051
      %v3740 = vmax.f32 %v3058, %v3114
      %v3741 = vmax.f32 %v3065, %v3121
      %v3742 = vmax.f32 %v3072, %v3128
      %v3743 = vmax.f32 %v3079, %v3135
      %v3744 = vmax.f32 %v3086, %v3142
      %v3745 = vmax.f32 %v3093, %v3149
      %v3746 = vmax.f32 %v3100, %v3156
      %v3747 = vmax.f32 %v3107, %v3163
      %v3748 = vmax.f32 %v3170, %v3226
      %v3749 = vmax.f32 %v3177, %v3233
      %v3750 = vmax.f32 %v3184, %v3240
      %v3751 = vmax.f32 %v3191, %v3247
      %v3752 = vmax.f32 %v3198, %v3254
      %v3753 = vmax.f32 %v3205, %v3261
      %v3754 = vmax.f32 %v3212, %v3268
      %v3755 = vmax.f32 %v3219, %v3275
      %v3756 = vmax.f32 %v3282, %v3338
      %v3757 = vmax.f32 %v3289, %v3345
      %v3758 = vmax.f32 %v3296, %v3352
      %v3759 = vmax.f32 %v3303, %v3359
      %v3760 = vmax.f32 %v3310, %v3366
      %v3761 = vmax.f32 %v3317, %v3373
      %v3762 = vmax.f32 %v3324, %v3380
      %v3763 = vmax.f32 %v3331, %v3387
      %v3764 = vmax.f32 %v3394, %v3450
      %v3765 = vmax.f32 %v3401, %v3457
      %v3766 = vmax.f32 %v3408, %v3464
      %v3767 = vmax.f32 %v3415, %v3471
      %v3768 = vmax.f32 %v3422, %v3478
      %v3769 = vmax.f32 %v3429, %v3485
      %v3770 = vmax.f32 %v3436, %v3492
      %v3771 = vmax.f32 %v3443, %v3499
      %v3772 = vmax.f32 %v3506, %v3562
      %v3773 = vmax.f32 %v3513, %v3569
      %v3774 = vmax.f32 %v3520, %v3576
      %v3775 = vmax.f32 %v3527, %v3583
      %v3776 = vmax.f32 %v3534, %v3590
      %v3777 = vmax.f32 %v3541, %v3597
      %v3778 = vmax.f32 %v3548, %v3604
      %v3779 = vmax.f32 %v3555, %v3611
      %v3780 = vmax.f32 %v3618, %v3674
      %v3781 = vmax.f32 %v3625, %v3681
      %v3782 = vmax.f32 %v3632, %v3688
      %v3783 = vmax.f32 %v3639, %v3695
      %v3784 = vmax.f32 %v3646, %v3702
      %v3785 = vmax.f32 %v3653, %v3709
      %v3786 = vmax.f32 %v3660, %v3716
      %v3787 = vmax.f32 %v3667, %v3723
      %v3788 = vsel %vm2383, %v2476, inf
      %v3789 = vrot.slane %v3788, 4
      %v3790 = vmin.f32 %v3788, %v3789
      %v3791 = vrot.slane %v3790, 2
      %v3792 = vmin.f32 %v3790, %v3791
      %v3793 = vrot.slane %v3792, 1
      %v3794 = vmin.f32 %v3792, %v3793
      %v3795 = vsel %vm2383, %v2636, inf
      %v3796 = vrot.slane %v3795, 4
      %v3797 = vmin.f32 %v3795, %v3796
      %v3798 = vrot.slane %v3797, 2
      %v3799 = vmin.f32 %v3797, %v3798
      %v3800 = vrot.slane %v3799, 1
      %v3801 = vmin.f32 %v3799, %v3800
      %v3802 = vsel %vm2383, %v2637, inf
      %v3803 = vrot.slane %v3802, 4
      %v3804 = vmin.f32 %v3802, %v3803
      %v3805 = vrot.slane %v3804, 2
      %v3806 = vmin.f32 %v3804, %v3805
      %v3807 = vrot.slane %v3806, 1
      %v3808 = vmin.f32 %v3806, %v3807
      %v3809 = vsel %vm2383, %v2638, inf
      %v3810 = vrot.slane %v3809, 4
      %v3811 = vmin.f32 %v3809, %v3810
      %v3812 = vrot.slane %v3811, 2
      %v3813 = vmin.f32 %v3811, %v3812
      %v3814 = vrot.slane %v3813, 1
      %v3815 = vmin.f32 %v3813, %v3814
      %v3816 = vsel %vm2383, %v2477, inf
      %v3817 = vrot.slane %v3816, 4
      %v3818 = vmin.f32 %v3816, %v3817
      %v3819 = vrot.slane %v3818, 2
      %v3820 = vmin.f32 %v3818, %v3819
      %v3821 = vrot.slane %v3820, 1
      %v3822 = vmin.f32 %v3820, %v3821
      %v3823 = vsel %vm2383, %v2639, inf
      %v3824 = vrot.slane %v3823, 4
      %v3825 = vmin.f32 %v3823, %v3824
      %v3826 = vrot.slane %v3825, 2
      %v3827 = vmin.f32 %v3825, %v3826
      %v3828 = vrot.slane %v3827, 1
      %v3829 = vmin.f32 %v3827, %v3828
      %v3830 = vsel %vm2383, %v2640, inf
      %v3831 = vrot.slane %v3830, 4
      %v3832 = vmin.f32 %v3830, %v3831
      %v3833 = vrot.slane %v3832, 2
      %v3834 = vmin.f32 %v3832, %v3833
      %v3835 = vrot.slane %v3834, 1
      %v3836 = vmin.f32 %v3834, %v3835
      %v3837 = vsel %vm2383, %v2641, inf
      %v3838 = vrot.slane %v3837, 4
      %v3839 = vmin.f32 %v3837, %v3838
      %v3840 = vrot.slane %v3839, 2
      %v3841 = vmin.f32 %v3839, %v3840
      %v3842 = vrot.slane %v3841, 1
      %v3843 = vmin.f32 %v3841, %v3842
      %v3844 = vsel %vm2383, %v2478, inf
      %v3845 = vrot.slane %v3844, 4
      %v3846 = vmin.f32 %v3844, %v3845
      %v3847 = vrot.slane %v3846, 2
      %v3848 = vmin.f32 %v3846, %v3847
      %v3849 = vrot.slane %v3848, 1
      %v3850 = vmin.f32 %v3848, %v3849
      %v3851 = vsel %vm2383, %v2642, inf
      %v3852 = vrot.slane %v3851, 4
      %v3853 = vmin.f32 %v3851, %v3852
      %v3854 = vrot.slane %v3853, 2
      %v3855 = vmin.f32 %v3853, %v3854
      %v3856 = vrot.slane %v3855, 1
      %v3857 = vmin.f32 %v3855, %v3856
      %v3858 = vsel %vm2383, %v2643, inf
      %v3859 = vrot.slane %v3858, 4
      %v3860 = vmin.f32 %v3858, %v3859
      %v3861 = vrot.slane %v3860, 2
      %v3862 = vmin.f32 %v3860, %v3861
      %v3863 = vrot.slane %v3862, 1
      %v3864 = vmin.f32 %v3862, %v3863
      %v3865 = vsel %vm2383, %v2644, inf
      %v3866 = vrot.slane %v3865, 4
      %v3867 = vmin.f32 %v3865, %v3866
      %v3868 = vrot.slane %v3867, 2
      %v3869 = vmin.f32 %v3867, %v3868
      %v3870 = vrot.slane %v3869, 1
      %v3871 = vmin.f32 %v3869, %v3870
      %v3872 = vsel %vm2383, %v2479, inf
      %v3873 = vrot.slane %v3872, 4
      %v3874 = vmin.f32 %v3872, %v3873
      %v3875 = vrot.slane %v3874, 2
      %v3876 = vmin.f32 %v3874, %v3875
      %v3877 = vrot.slane %v3876, 1
      %v3878 = vmin.f32 %v3876, %v3877
      %v3879 = vsel %vm2383, %v2645, inf
      %v3880 = vrot.slane %v3879, 4
      %v3881 = vmin.f32 %v3879, %v3880
      %v3882 = vrot.slane %v3881, 2
      %v3883 = vmin.f32 %v3881, %v3882
      %v3884 = vrot.slane %v3883, 1
      %v3885 = vmin.f32 %v3883, %v3884
      %v3886 = vsel %vm2383, %v2646, inf
      %v3887 = vrot.slane %v3886, 4
      %v3888 = vmin.f32 %v3886, %v3887
      %v3889 = vrot.slane %v3888, 2
      %v3890 = vmin.f32 %v3888, %v3889
      %v3891 = vrot.slane %v3890, 1
      %v3892 = vmin.f32 %v3890, %v3891
      %v3893 = vsel %vm2383, %v2647, inf
      %v3894 = vrot.slane %v3893, 4
      %v3895 = vmin.f32 %v3893, %v3894
      %v3896 = vrot.slane %v3895, 2
      %v3897 = vmin.f32 %v3895, %v3896
      %v3898 = vrot.slane %v3897, 1
      %v3899 = vmin.f32 %v3897, %v3898
      %v3900 = vsel %vm2383, %v2480, inf
      %v3901 = vrot.slane %v3900, 4
      %v3902 = vmin.f32 %v3900, %v3901
      %v3903 = vrot.slane %v3902, 2
      %v3904 = vmin.f32 %v3902, %v3903
      %v3905 = vrot.slane %v3904, 1
      %v3906 = vmin.f32 %v3904, %v3905
      %v3907 = vsel %vm2383, %v2648, inf
      %v3908 = vrot.slane %v3907, 4
      %v3909 = vmin.f32 %v3907, %v3908
      %v3910 = vrot.slane %v3909, 2
      %v3911 = vmin.f32 %v3909, %v3910
      %v3912 = vrot.slane %v3911, 1
      %v3913 = vmin.f32 %v3911, %v3912
      %v3914 = vsel %vm2383, %v2649, inf
      %v3915 = vrot.slane %v3914, 4
      %v3916 = vmin.f32 %v3914, %v3915
      %v3917 = vrot.slane %v3916, 2
      %v3918 = vmin.f32 %v3916, %v3917
      %v3919 = vrot.slane %v3918, 1
      %v3920 = vmin.f32 %v3918, %v3919
      %v3921 = vsel %vm2383, %v2650, inf
      %v3922 = vrot.slane %v3921, 4
      %v3923 = vmin.f32 %v3921, %v3922
      %v3924 = vrot.slane %v3923, 2
      %v3925 = vmin.f32 %v3923, %v3924
      %v3926 = vrot.slane %v3925, 1
      %v3927 = vmin.f32 %v3925, %v3926
      %v3928 = vsel %vm2383, %v2481, inf
      %v3929 = vrot.slane %v3928, 4
      %v3930 = vmin.f32 %v3928, %v3929
      %v3931 = vrot.slane %v3930, 2
      %v3932 = vmin.f32 %v3930, %v3931
      %v3933 = vrot.slane %v3932, 1
      %v3934 = vmin.f32 %v3932, %v3933
      %v3935 = vsel %vm2383, %v2651, inf
      %v3936 = vrot.slane %v3935, 4
      %v3937 = vmin.f32 %v3935, %v3936
      %v3938 = vrot.slane %v3937, 2
      %v3939 = vmin.f32 %v3937, %v3938
      %v3940 = vrot.slane %v3939, 1
      %v3941 = vmin.f32 %v3939, %v3940
      %v3942 = vsel %vm2383, %v2652, inf
      %v3943 = vrot.slane %v3942, 4
      %v3944 = vmin.f32 %v3942, %v3943
      %v3945 = vrot.slane %v3944, 2
      %v3946 = vmin.f32 %v3944, %v3945
      %v3947 = vrot.slane %v3946, 1
      %v3948 = vmin.f32 %v3946, %v3947
      %v3949 = vsel %vm2383, %v2653, inf
      %v3950 = vrot.slane %v3949, 4
      %v3951 = vmin.f32 %v3949, %v3950
      %v3952 = vrot.slane %v3951, 2
      %v3953 = vmin.f32 %v3951, %v3952
      %v3954 = vrot.slane %v3953, 1
      %v3955 = vmin.f32 %v3953, %v3954
      %v3956 = vsel %vm2383, %v2482, inf
      %v3957 = vrot.slane %v3956, 4
      %v3958 = vmin.f32 %v3956, %v3957
      %v3959 = vrot.slane %v3958, 2
      %v3960 = vmin.f32 %v3958, %v3959
      %v3961 = vrot.slane %v3960, 1
      %v3962 = vmin.f32 %v3960, %v3961
      %v3963 = vsel %vm2383, %v2654, inf
      %v3964 = vrot.slane %v3963, 4
      %v3965 = vmin.f32 %v3963, %v3964
      %v3966 = vrot.slane %v3965, 2
      %v3967 = vmin.f32 %v3965, %v3966
      %v3968 = vrot.slane %v3967, 1
      %v3969 = vmin.f32 %v3967, %v3968
      %v3970 = vsel %vm2383, %v2655, inf
      %v3971 = vrot.slane %v3970, 4
      %v3972 = vmin.f32 %v3970, %v3971
      %v3973 = vrot.slane %v3972, 2
      %v3974 = vmin.f32 %v3972, %v3973
      %v3975 = vrot.slane %v3974, 1
      %v3976 = vmin.f32 %v3974, %v3975
      %v3977 = vsel %vm2383, %v2656, inf
      %v3978 = vrot.slane %v3977, 4
      %v3979 = vmin.f32 %v3977, %v3978
      %v3980 = vrot.slane %v3979, 2
      %v3981 = vmin.f32 %v3979, %v3980
      %v3982 = vrot.slane %v3981, 1
      %v3983 = vmin.f32 %v3981, %v3982
      %v3984 = vsel %vm2383, %v2483, inf
      %v3985 = vrot.slane %v3984, 4
      %v3986 = vmin.f32 %v3984, %v3985
      %v3987 = vrot.slane %v3986, 2
      %v3988 = vmin.f32 %v3986, %v3987
      %v3989 = vrot.slane %v3988, 1
      %v3990 = vmin.f32 %v3988, %v3989
      %v3991 = vsel %vm2383, %v2657, inf
      %v3992 = vrot.slane %v3991, 4
      %v3993 = vmin.f32 %v3991, %v3992
      %v3994 = vrot.slane %v3993, 2
      %v3995 = vmin.f32 %v3993, %v3994
      %v3996 = vrot.slane %v3995, 1
      %v3997 = vmin.f32 %v3995, %v3996
      %v3998 = vsel %vm2383, %v2658, inf
      %v3999 = vrot.slane %v3998, 4
      %v4000 = vmin.f32 %v3998, %v3999
      %v4001 = vrot.slane %v4000, 2
      %v4002 = vmin.f32 %v4000, %v4001
      %v4003 = vrot.slane %v4002, 1
      %v4004 = vmin.f32 %v4002, %v4003
      %v4005 = vsel %vm2383, %v2659, inf
      %v4006 = vrot.slane %v4005, 4
      %v4007 = vmin.f32 %v4005, %v4006
      %v4008 = vrot.slane %v4007, 2
      %v4009 = vmin.f32 %v4007, %v4008
      %v4010 = vrot.slane %v4009, 1
      %v4011 = vmin.f32 %v4009, %v4010
      %v4012 = vsel %vm2383, %v2484, inf
      %v4013 = vrot.slane %v4012, 4
      %v4014 = vmin.f32 %v4012, %v4013
      %v4015 = vrot.slane %v4014, 2
      %v4016 = vmin.f32 %v4014, %v4015
      %v4017 = vrot.slane %v4016, 1
      %v4018 = vmin.f32 %v4016, %v4017
      %v4019 = vsel %vm2383, %v2660, inf
      %v4020 = vrot.slane %v4019, 4
      %v4021 = vmin.f32 %v4019, %v4020
      %v4022 = vrot.slane %v4021, 2
      %v4023 = vmin.f32 %v4021, %v4022
      %v4024 = vrot.slane %v4023, 1
      %v4025 = vmin.f32 %v4023, %v4024
      %v4026 = vsel %vm2383, %v2661, inf
      %v4027 = vrot.slane %v4026, 4
      %v4028 = vmin.f32 %v4026, %v4027
      %v4029 = vrot.slane %v4028, 2
      %v4030 = vmin.f32 %v4028, %v4029
      %v4031 = vrot.slane %v4030, 1
      %v4032 = vmin.f32 %v4030, %v4031
      %v4033 = vsel %vm2383, %v2662, inf
      %v4034 = vrot.slane %v4033, 4
      %v4035 = vmin.f32 %v4033, %v4034
      %v4036 = vrot.slane %v4035, 2
      %v4037 = vmin.f32 %v4035, %v4036
      %v4038 = vrot.slane %v4037, 1
      %v4039 = vmin.f32 %v4037, %v4038
      %v4040 = vsel %vm2383, %v2485, inf
      %v4041 = vrot.slane %v4040, 4
      %v4042 = vmin.f32 %v4040, %v4041
      %v4043 = vrot.slane %v4042, 2
      %v4044 = vmin.f32 %v4042, %v4043
      %v4045 = vrot.slane %v4044, 1
      %v4046 = vmin.f32 %v4044, %v4045
      %v4047 = vsel %vm2383, %v2663, inf
      %v4048 = vrot.slane %v4047, 4
      %v4049 = vmin.f32 %v4047, %v4048
      %v4050 = vrot.slane %v4049, 2
      %v4051 = vmin.f32 %v4049, %v4050
      %v4052 = vrot.slane %v4051, 1
      %v4053 = vmin.f32 %v4051, %v4052
      %v4054 = vsel %vm2383, %v2664, inf
      %v4055 = vrot.slane %v4054, 4
      %v4056 = vmin.f32 %v4054, %v4055
      %v4057 = vrot.slane %v4056, 2
      %v4058 = vmin.f32 %v4056, %v4057
      %v4059 = vrot.slane %v4058, 1
      %v4060 = vmin.f32 %v4058, %v4059
      %v4061 = vsel %vm2383, %v2665, inf
      %v4062 = vrot.slane %v4061, 4
      %v4063 = vmin.f32 %v4061, %v4062
      %v4064 = vrot.slane %v4063, 2
      %v4065 = vmin.f32 %v4063, %v4064
      %v4066 = vrot.slane %v4065, 1
      %v4067 = vmin.f32 %v4065, %v4066
      %v4068 = vsel %vm2383, %v2486, inf
      %v4069 = vrot.slane %v4068, 4
      %v4070 = vmin.f32 %v4068, %v4069
      %v4071 = vrot.slane %v4070, 2
      %v4072 = vmin.f32 %v4070, %v4071
      %v4073 = vrot.slane %v4072, 1
      %v4074 = vmin.f32 %v4072, %v4073
      %v4075 = vsel %vm2383, %v2666, inf
      %v4076 = vrot.slane %v4075, 4
      %v4077 = vmin.f32 %v4075, %v4076
      %v4078 = vrot.slane %v4077, 2
      %v4079 = vmin.f32 %v4077, %v4078
      %v4080 = vrot.slane %v4079, 1
      %v4081 = vmin.f32 %v4079, %v4080
      %v4082 = vsel %vm2383, %v2667, inf
      %v4083 = vrot.slane %v4082, 4
      %v4084 = vmin.f32 %v4082, %v4083
      %v4085 = vrot.slane %v4084, 2
      %v4086 = vmin.f32 %v4084, %v4085
      %v4087 = vrot.slane %v4086, 1
      %v4088 = vmin.f32 %v4086, %v4087
      %v4089 = vsel %vm2383, %v2668, inf
      %v4090 = vrot.slane %v4089, 4
      %v4091 = vmin.f32 %v4089, %v4090
      %v4092 = vrot.slane %v4091, 2
      %v4093 = vmin.f32 %v4091, %v4092
      %v4094 = vrot.slane %v4093, 1
      %v4095 = vmin.f32 %v4093, %v4094
      %v4096 = vsel %vm2383, %v2487, inf
      %v4097 = vrot.slane %v4096, 4
      %v4098 = vmin.f32 %v4096, %v4097
      %v4099 = vrot.slane %v4098, 2
      %v4100 = vmin.f32 %v4098, %v4099
      %v4101 = vrot.slane %v4100, 1
      %v4102 = vmin.f32 %v4100, %v4101
      %v4103 = vsel %vm2383, %v2669, inf
      %v4104 = vrot.slane %v4103, 4
      %v4105 = vmin.f32 %v4103, %v4104
      %v4106 = vrot.slane %v4105, 2
      %v4107 = vmin.f32 %v4105, %v4106
      %v4108 = vrot.slane %v4107, 1
      %v4109 = vmin.f32 %v4107, %v4108
      %v4110 = vsel %vm2383, %v2670, inf
      %v4111 = vrot.slane %v4110, 4
      %v4112 = vmin.f32 %v4110, %v4111
      %v4113 = vrot.slane %v4112, 2
      %v4114 = vmin.f32 %v4112, %v4113
      %v4115 = vrot.slane %v4114, 1
      %v4116 = vmin.f32 %v4114, %v4115
      %v4117 = vsel %vm2383, %v2671, inf
      %v4118 = vrot.slane %v4117, 4
      %v4119 = vmin.f32 %v4117, %v4118
      %v4120 = vrot.slane %v4119, 2
      %v4121 = vmin.f32 %v4119, %v4120
      %v4122 = vrot.slane %v4121, 1
      %v4123 = vmin.f32 %v4121, %v4122
      %v4124 = vsel %vm2383, %v2488, inf
      %v4125 = vrot.slane %v4124, 4
      %v4126 = vmin.f32 %v4124, %v4125
      %v4127 = vrot.slane %v4126, 2
      %v4128 = vmin.f32 %v4126, %v4127
      %v4129 = vrot.slane %v4128, 1
      %v4130 = vmin.f32 %v4128, %v4129
      %v4131 = vsel %vm2383, %v2672, inf
      %v4132 = vrot.slane %v4131, 4
      %v4133 = vmin.f32 %v4131, %v4132
      %v4134 = vrot.slane %v4133, 2
      %v4135 = vmin.f32 %v4133, %v4134
      %v4136 = vrot.slane %v4135, 1
      %v4137 = vmin.f32 %v4135, %v4136
      %v4138 = vsel %vm2383, %v2673, inf
      %v4139 = vrot.slane %v4138, 4
      %v4140 = vmin.f32 %v4138, %v4139
      %v4141 = vrot.slane %v4140, 2
      %v4142 = vmin.f32 %v4140, %v4141
      %v4143 = vrot.slane %v4142, 1
      %v4144 = vmin.f32 %v4142, %v4143
      %v4145 = vsel %vm2383, %v2674, inf
      %v4146 = vrot.slane %v4145, 4
      %v4147 = vmin.f32 %v4145, %v4146
      %v4148 = vrot.slane %v4147, 2
      %v4149 = vmin.f32 %v4147, %v4148
      %v4150 = vrot.slane %v4149, 1
      %v4151 = vmin.f32 %v4149, %v4150
      %v4152 = vsel %vm2383, %v2489, inf
      %v4153 = vrot.slane %v4152, 4
      %v4154 = vmin.f32 %v4152, %v4153
      %v4155 = vrot.slane %v4154, 2
      %v4156 = vmin.f32 %v4154, %v4155
      %v4157 = vrot.slane %v4156, 1
      %v4158 = vmin.f32 %v4156, %v4157
      %v4159 = vsel %vm2383, %v2675, inf
      %v4160 = vrot.slane %v4159, 4
      %v4161 = vmin.f32 %v4159, %v4160
      %v4162 = vrot.slane %v4161, 2
      %v4163 = vmin.f32 %v4161, %v4162
      %v4164 = vrot.slane %v4163, 1
      %v4165 = vmin.f32 %v4163, %v4164
      %v4166 = vsel %vm2383, %v2676, inf
      %v4167 = vrot.slane %v4166, 4
      %v4168 = vmin.f32 %v4166, %v4167
      %v4169 = vrot.slane %v4168, 2
      %v4170 = vmin.f32 %v4168, %v4169
      %v4171 = vrot.slane %v4170, 1
      %v4172 = vmin.f32 %v4170, %v4171
      %v4173 = vsel %vm2383, %v2677, inf
      %v4174 = vrot.slane %v4173, 4
      %v4175 = vmin.f32 %v4173, %v4174
      %v4176 = vrot.slane %v4175, 2
      %v4177 = vmin.f32 %v4175, %v4176
      %v4178 = vrot.slane %v4177, 1
      %v4179 = vmin.f32 %v4177, %v4178
      %v4180 = vsel %vm2383, %v2490, inf
      %v4181 = vrot.slane %v4180, 4
      %v4182 = vmin.f32 %v4180, %v4181
      %v4183 = vrot.slane %v4182, 2
      %v4184 = vmin.f32 %v4182, %v4183
      %v4185 = vrot.slane %v4184, 1
      %v4186 = vmin.f32 %v4184, %v4185
      %v4187 = vsel %vm2383, %v2678, inf
      %v4188 = vrot.slane %v4187, 4
      %v4189 = vmin.f32 %v4187, %v4188
      %v4190 = vrot.slane %v4189, 2
      %v4191 = vmin.f32 %v4189, %v4190
      %v4192 = vrot.slane %v4191, 1
      %v4193 = vmin.f32 %v4191, %v4192
      %v4194 = vsel %vm2383, %v2679, inf
      %v4195 = vrot.slane %v4194, 4
      %v4196 = vmin.f32 %v4194, %v4195
      %v4197 = vrot.slane %v4196, 2
      %v4198 = vmin.f32 %v4196, %v4197
      %v4199 = vrot.slane %v4198, 1
      %v4200 = vmin.f32 %v4198, %v4199
      %v4201 = vsel %vm2383, %v2680, inf
      %v4202 = vrot.slane %v4201, 4
      %v4203 = vmin.f32 %v4201, %v4202
      %v4204 = vrot.slane %v4203, 2
      %v4205 = vmin.f32 %v4203, %v4204
      %v4206 = vrot.slane %v4205, 1
      %v4207 = vmin.f32 %v4205, %v4206
      %v4208 = vsel %vm2383, %v2491, inf
      %v4209 = vrot.slane %v4208, 4
      %v4210 = vmin.f32 %v4208, %v4209
      %v4211 = vrot.slane %v4210, 2
      %v4212 = vmin.f32 %v4210, %v4211
      %v4213 = vrot.slane %v4212, 1
      %v4214 = vmin.f32 %v4212, %v4213
      %v4215 = vsel %vm2383, %v2681, inf
      %v4216 = vrot.slane %v4215, 4
      %v4217 = vmin.f32 %v4215, %v4216
      %v4218 = vrot.slane %v4217, 2
      %v4219 = vmin.f32 %v4217, %v4218
      %v4220 = vrot.slane %v4219, 1
      %v4221 = vmin.f32 %v4219, %v4220
      %v4222 = vsel %vm2383, %v2682, inf
      %v4223 = vrot.slane %v4222, 4
      %v4224 = vmin.f32 %v4222, %v4223
      %v4225 = vrot.slane %v4224, 2
      %v4226 = vmin.f32 %v4224, %v4225
      %v4227 = vrot.slane %v4226, 1
      %v4228 = vmin.f32 %v4226, %v4227
      %v4229 = vsel %vm2383, %v2683, inf
      %v4230 = vrot.slane %v4229, 4
      %v4231 = vmin.f32 %v4229, %v4230
      %v4232 = vrot.slane %v4231, 2
      %v4233 = vmin.f32 %v4231, %v4232
      %v4234 = vrot.slane %v4233, 1
      %v4235 = vmin.f32 %v4233, %v4234
      %v4236 = vsel %vm2383, %v2492, inf
      %v4237 = vrot.slane %v4236, 4
      %v4238 = vmin.f32 %v4236, %v4237
      %v4239 = vrot.slane %v4238, 2
      %v4240 = vmin.f32 %v4238, %v4239
      %v4241 = vrot.slane %v4240, 1
      %v4242 = vmin.f32 %v4240, %v4241
      %v4243 = vsel %vm2383, %v2684, inf
      %v4244 = vrot.slane %v4243, 4
      %v4245 = vmin.f32 %v4243, %v4244
      %v4246 = vrot.slane %v4245, 2
      %v4247 = vmin.f32 %v4245, %v4246
      %v4248 = vrot.slane %v4247, 1
      %v4249 = vmin.f32 %v4247, %v4248
      %v4250 = vsel %vm2383, %v2685, inf
      %v4251 = vrot.slane %v4250, 4
      %v4252 = vmin.f32 %v4250, %v4251
      %v4253 = vrot.slane %v4252, 2
      %v4254 = vmin.f32 %v4252, %v4253
      %v4255 = vrot.slane %v4254, 1
      %v4256 = vmin.f32 %v4254, %v4255
      %v4257 = vsel %vm2383, %v2686, inf
      %v4258 = vrot.slane %v4257, 4
      %v4259 = vmin.f32 %v4257, %v4258
      %v4260 = vrot.slane %v4259, 2
      %v4261 = vmin.f32 %v4259, %v4260
      %v4262 = vrot.slane %v4261, 1
      %v4263 = vmin.f32 %v4261, %v4262
      %v4264 = vsel %vm2383, %v2493, inf
      %v4265 = vrot.slane %v4264, 4
      %v4266 = vmin.f32 %v4264, %v4265
      %v4267 = vrot.slane %v4266, 2
      %v4268 = vmin.f32 %v4266, %v4267
      %v4269 = vrot.slane %v4268, 1
      %v4270 = vmin.f32 %v4268, %v4269
      %v4271 = vsel %vm2383, %v2687, inf
      %v4272 = vrot.slane %v4271, 4
      %v4273 = vmin.f32 %v4271, %v4272
      %v4274 = vrot.slane %v4273, 2
      %v4275 = vmin.f32 %v4273, %v4274
      %v4276 = vrot.slane %v4275, 1
      %v4277 = vmin.f32 %v4275, %v4276
      %v4278 = vsel %vm2383, %v2688, inf
      %v4279 = vrot.slane %v4278, 4
      %v4280 = vmin.f32 %v4278, %v4279
      %v4281 = vrot.slane %v4280, 2
      %v4282 = vmin.f32 %v4280, %v4281
      %v4283 = vrot.slane %v4282, 1
      %v4284 = vmin.f32 %v4282, %v4283
      %v4285 = vsel %vm2383, %v2689, inf
      %v4286 = vrot.slane %v4285, 4
      %v4287 = vmin.f32 %v4285, %v4286
      %v4288 = vrot.slane %v4287, 2
      %v4289 = vmin.f32 %v4287, %v4288
      %v4290 = vrot.slane %v4289, 1
      %v4291 = vmin.f32 %v4289, %v4290
      %v4292 = vsel %vm2383, %v2494, inf
      %v4293 = vrot.slane %v4292, 4
      %v4294 = vmin.f32 %v4292, %v4293
      %v4295 = vrot.slane %v4294, 2
      %v4296 = vmin.f32 %v4294, %v4295
      %v4297 = vrot.slane %v4296, 1
      %v4298 = vmin.f32 %v4296, %v4297
      %v4299 = vsel %vm2383, %v2690, inf
      %v4300 = vrot.slane %v4299, 4
      %v4301 = vmin.f32 %v4299, %v4300
      %v4302 = vrot.slane %v4301, 2
      %v4303 = vmin.f32 %v4301, %v4302
      %v4304 = vrot.slane %v4303, 1
      %v4305 = vmin.f32 %v4303, %v4304
      %v4306 = vsel %vm2383, %v2691, inf
      %v4307 = vrot.slane %v4306, 4
      %v4308 = vmin.f32 %v4306, %v4307
      %v4309 = vrot.slane %v4308, 2
      %v4310 = vmin.f32 %v4308, %v4309
      %v4311 = vrot.slane %v4310, 1
      %v4312 = vmin.f32 %v4310, %v4311
      %v4313 = vsel %vm2383, %v2692, inf
      %v4314 = vrot.slane %v4313, 4
      %v4315 = vmin.f32 %v4313, %v4314
      %v4316 = vrot.slane %v4315, 2
      %v4317 = vmin.f32 %v4315, %v4316
      %v4318 = vrot.slane %v4317, 1
      %v4319 = vmin.f32 %v4317, %v4318
      %v4320 = vsel %vm2383, %v2495, inf
      %v4321 = vrot.slane %v4320, 4
      %v4322 = vmin.f32 %v4320, %v4321
      %v4323 = vrot.slane %v4322, 2
      %v4324 = vmin.f32 %v4322, %v4323
      %v4325 = vrot.slane %v4324, 1
      %v4326 = vmin.f32 %v4324, %v4325
      %v4327 = vsel %vm2383, %v2693, inf
      %v4328 = vrot.slane %v4327, 4
      %v4329 = vmin.f32 %v4327, %v4328
      %v4330 = vrot.slane %v4329, 2
      %v4331 = vmin.f32 %v4329, %v4330
      %v4332 = vrot.slane %v4331, 1
      %v4333 = vmin.f32 %v4331, %v4332
      %v4334 = vsel %vm2383, %v2694, inf
      %v4335 = vrot.slane %v4334, 4
      %v4336 = vmin.f32 %v4334, %v4335
      %v4337 = vrot.slane %v4336, 2
      %v4338 = vmin.f32 %v4336, %v4337
      %v4339 = vrot.slane %v4338, 1
      %v4340 = vmin.f32 %v4338, %v4339
      %v4341 = vsel %vm2383, %v2695, inf
      %v4342 = vrot.slane %v4341, 4
      %v4343 = vmin.f32 %v4341, %v4342
      %v4344 = vrot.slane %v4343, 2
      %v4345 = vmin.f32 %v4343, %v4344
      %v4346 = vrot.slane %v4345, 1
      %v4347 = vmin.f32 %v4345, %v4346
      %v4348 = vsel %vm2383, %v2496, inf
      %v4349 = vrot.slane %v4348, 4
      %v4350 = vmin.f32 %v4348, %v4349
      %v4351 = vrot.slane %v4350, 2
      %v4352 = vmin.f32 %v4350, %v4351
      %v4353 = vrot.slane %v4352, 1
      %v4354 = vmin.f32 %v4352, %v4353
      %v4355 = vsel %vm2383, %v2696, inf
      %v4356 = vrot.slane %v4355, 4
      %v4357 = vmin.f32 %v4355, %v4356
      %v4358 = vrot.slane %v4357, 2
      %v4359 = vmin.f32 %v4357, %v4358
      %v4360 = vrot.slane %v4359, 1
      %v4361 = vmin.f32 %v4359, %v4360
      %v4362 = vsel %vm2383, %v2697, inf
      %v4363 = vrot.slane %v4362, 4
      %v4364 = vmin.f32 %v4362, %v4363
      %v4365 = vrot.slane %v4364, 2
      %v4366 = vmin.f32 %v4364, %v4365
      %v4367 = vrot.slane %v4366, 1
      %v4368 = vmin.f32 %v4366, %v4367
      %v4369 = vsel %vm2383, %v2698, inf
      %v4370 = vrot.slane %v4369, 4
      %v4371 = vmin.f32 %v4369, %v4370
      %v4372 = vrot.slane %v4371, 2
      %v4373 = vmin.f32 %v4371, %v4372
      %v4374 = vrot.slane %v4373, 1
      %v4375 = vmin.f32 %v4373, %v4374
      %v4376 = vsel %vm2383, %v2497, inf
      %v4377 = vrot.slane %v4376, 4
      %v4378 = vmin.f32 %v4376, %v4377
      %v4379 = vrot.slane %v4378, 2
      %v4380 = vmin.f32 %v4378, %v4379
      %v4381 = vrot.slane %v4380, 1
      %v4382 = vmin.f32 %v4380, %v4381
      %v4383 = vsel %vm2383, %v2699, inf
      %v4384 = vrot.slane %v4383, 4
      %v4385 = vmin.f32 %v4383, %v4384
      %v4386 = vrot.slane %v4385, 2
      %v4387 = vmin.f32 %v4385, %v4386
      %v4388 = vrot.slane %v4387, 1
      %v4389 = vmin.f32 %v4387, %v4388
      %v4390 = vsel %vm2383, %v2700, inf
      %v4391 = vrot.slane %v4390, 4
      %v4392 = vmin.f32 %v4390, %v4391
      %v4393 = vrot.slane %v4392, 2
      %v4394 = vmin.f32 %v4392, %v4393
      %v4395 = vrot.slane %v4394, 1
      %v4396 = vmin.f32 %v4394, %v4395
      %v4397 = vsel %vm2383, %v2701, inf
      %v4398 = vrot.slane %v4397, 4
      %v4399 = vmin.f32 %v4397, %v4398
      %v4400 = vrot.slane %v4399, 2
      %v4401 = vmin.f32 %v4399, %v4400
      %v4402 = vrot.slane %v4401, 1
      %v4403 = vmin.f32 %v4401, %v4402
      %v4404 = vsel %vm2383, %v2498, inf
      %v4405 = vrot.slane %v4404, 4
      %v4406 = vmin.f32 %v4404, %v4405
      %v4407 = vrot.slane %v4406, 2
      %v4408 = vmin.f32 %v4406, %v4407
      %v4409 = vrot.slane %v4408, 1
      %v4410 = vmin.f32 %v4408, %v4409
      %v4411 = vsel %vm2383, %v2702, inf
      %v4412 = vrot.slane %v4411, 4
      %v4413 = vmin.f32 %v4411, %v4412
      %v4414 = vrot.slane %v4413, 2
      %v4415 = vmin.f32 %v4413, %v4414
      %v4416 = vrot.slane %v4415, 1
      %v4417 = vmin.f32 %v4415, %v4416
      %v4418 = vsel %vm2383, %v2703, inf
      %v4419 = vrot.slane %v4418, 4
      %v4420 = vmin.f32 %v4418, %v4419
      %v4421 = vrot.slane %v4420, 2
      %v4422 = vmin.f32 %v4420, %v4421
      %v4423 = vrot.slane %v4422, 1
      %v4424 = vmin.f32 %v4422, %v4423
      %v4425 = vsel %vm2383, %v2704, inf
      %v4426 = vrot.slane %v4425, 4
      %v4427 = vmin.f32 %v4425, %v4426
      %v4428 = vrot.slane %v4427, 2
      %v4429 = vmin.f32 %v4427, %v4428
      %v4430 = vrot.slane %v4429, 1
      %v4431 = vmin.f32 %v4429, %v4430
      %v4432 = vsel %vm2383, %v2499, inf
      %v4433 = vrot.slane %v4432, 4
      %v4434 = vmin.f32 %v4432, %v4433
      %v4435 = vrot.slane %v4434, 2
      %v4436 = vmin.f32 %v4434, %v4435
      %v4437 = vrot.slane %v4436, 1
      %v4438 = vmin.f32 %v4436, %v4437
      %v4439 = vsel %vm2383, %v2705, inf
      %v4440 = vrot.slane %v4439, 4
      %v4441 = vmin.f32 %v4439, %v4440
      %v4442 = vrot.slane %v4441, 2
      %v4443 = vmin.f32 %v4441, %v4442
      %v4444 = vrot.slane %v4443, 1
      %v4445 = vmin.f32 %v4443, %v4444
      %v4446 = vsel %vm2383, %v2706, inf
      %v4447 = vrot.slane %v4446, 4
      %v4448 = vmin.f32 %v4446, %v4447
      %v4449 = vrot.slane %v4448, 2
      %v4450 = vmin.f32 %v4448, %v4449
      %v4451 = vrot.slane %v4450, 1
      %v4452 = vmin.f32 %v4450, %v4451
      %v4453 = vsel %vm2383, %v2707, inf
      %v4454 = vrot.slane %v4453, 4
      %v4455 = vmin.f32 %v4453, %v4454
      %v4456 = vrot.slane %v4455, 2
      %v4457 = vmin.f32 %v4455, %v4456
      %v4458 = vrot.slane %v4457, 1
      %v4459 = vmin.f32 %v4457, %v4458
      %v4460 = vsel %vm2383, %v2500, inf
      %v4461 = vrot.slane %v4460, 4
      %v4462 = vmin.f32 %v4460, %v4461
      %v4463 = vrot.slane %v4462, 2
      %v4464 = vmin.f32 %v4462, %v4463
      %v4465 = vrot.slane %v4464, 1
      %v4466 = vmin.f32 %v4464, %v4465
      %v4467 = vsel %vm2383, %v2708, inf
      %v4468 = vrot.slane %v4467, 4
      %v4469 = vmin.f32 %v4467, %v4468
      %v4470 = vrot.slane %v4469, 2
      %v4471 = vmin.f32 %v4469, %v4470
      %v4472 = vrot.slane %v4471, 1
      %v4473 = vmin.f32 %v4471, %v4472
      %v4474 = vsel %vm2383, %v2709, inf
      %v4475 = vrot.slane %v4474, 4
      %v4476 = vmin.f32 %v4474, %v4475
      %v4477 = vrot.slane %v4476, 2
      %v4478 = vmin.f32 %v4476, %v4477
      %v4479 = vrot.slane %v4478, 1
      %v4480 = vmin.f32 %v4478, %v4479
      %v4481 = vsel %vm2383, %v2710, inf
      %v4482 = vrot.slane %v4481, 4
      %v4483 = vmin.f32 %v4481, %v4482
      %v4484 = vrot.slane %v4483, 2
      %v4485 = vmin.f32 %v4483, %v4484
      %v4486 = vrot.slane %v4485, 1
      %v4487 = vmin.f32 %v4485, %v4486
      %v4488 = vsel %vm2383, %v2501, inf
      %v4489 = vrot.slane %v4488, 4
      %v4490 = vmin.f32 %v4488, %v4489
      %v4491 = vrot.slane %v4490, 2
      %v4492 = vmin.f32 %v4490, %v4491
      %v4493 = vrot.slane %v4492, 1
      %v4494 = vmin.f32 %v4492, %v4493
      %v4495 = vsel %vm2383, %v2711, inf
      %v4496 = vrot.slane %v4495, 4
      %v4497 = vmin.f32 %v4495, %v4496
      %v4498 = vrot.slane %v4497, 2
      %v4499 = vmin.f32 %v4497, %v4498
      %v4500 = vrot.slane %v4499, 1
      %v4501 = vmin.f32 %v4499, %v4500
      %v4502 = vsel %vm2383, %v2712, inf
      %v4503 = vrot.slane %v4502, 4
      %v4504 = vmin.f32 %v4502, %v4503
      %v4505 = vrot.slane %v4504, 2
      %v4506 = vmin.f32 %v4504, %v4505
      %v4507 = vrot.slane %v4506, 1
      %v4508 = vmin.f32 %v4506, %v4507
      %v4509 = vsel %vm2383, %v2713, inf
      %v4510 = vrot.slane %v4509, 4
      %v4511 = vmin.f32 %v4509, %v4510
      %v4512 = vrot.slane %v4511, 2
      %v4513 = vmin.f32 %v4511, %v4512
      %v4514 = vrot.slane %v4513, 1
      %v4515 = vmin.f32 %v4513, %v4514
      %v4516 = vsel %vm2383, %v2502, inf
      %v4517 = vrot.slane %v4516, 4
      %v4518 = vmin.f32 %v4516, %v4517
      %v4519 = vrot.slane %v4518, 2
      %v4520 = vmin.f32 %v4518, %v4519
      %v4521 = vrot.slane %v4520, 1
      %v4522 = vmin.f32 %v4520, %v4521
      %v4523 = vsel %vm2383, %v2714, inf
      %v4524 = vrot.slane %v4523, 4
      %v4525 = vmin.f32 %v4523, %v4524
      %v4526 = vrot.slane %v4525, 2
      %v4527 = vmin.f32 %v4525, %v4526
      %v4528 = vrot.slane %v4527, 1
      %v4529 = vmin.f32 %v4527, %v4528
      %v4530 = vsel %vm2383, %v2715, inf
      %v4531 = vrot.slane %v4530, 4
      %v4532 = vmin.f32 %v4530, %v4531
      %v4533 = vrot.slane %v4532, 2
      %v4534 = vmin.f32 %v4532, %v4533
      %v4535 = vrot.slane %v4534, 1
      %v4536 = vmin.f32 %v4534, %v4535
      %v4537 = vsel %vm2383, %v2716, inf
      %v4538 = vrot.slane %v4537, 4
      %v4539 = vmin.f32 %v4537, %v4538
      %v4540 = vrot.slane %v4539, 2
      %v4541 = vmin.f32 %v4539, %v4540
      %v4542 = vrot.slane %v4541, 1
      %v4543 = vmin.f32 %v4541, %v4542
      %v4544 = vsel %vm2383, %v2503, inf
      %v4545 = vrot.slane %v4544, 4
      %v4546 = vmin.f32 %v4544, %v4545
      %v4547 = vrot.slane %v4546, 2
      %v4548 = vmin.f32 %v4546, %v4547
      %v4549 = vrot.slane %v4548, 1
      %v4550 = vmin.f32 %v4548, %v4549
      %v4551 = vsel %vm2383, %v2717, inf
      %v4552 = vrot.slane %v4551, 4
      %v4553 = vmin.f32 %v4551, %v4552
      %v4554 = vrot.slane %v4553, 2
      %v4555 = vmin.f32 %v4553, %v4554
      %v4556 = vrot.slane %v4555, 1
      %v4557 = vmin.f32 %v4555, %v4556
      %v4558 = vsel %vm2383, %v2718, inf
      %v4559 = vrot.slane %v4558, 4
      %v4560 = vmin.f32 %v4558, %v4559
      %v4561 = vrot.slane %v4560, 2
      %v4562 = vmin.f32 %v4560, %v4561
      %v4563 = vrot.slane %v4562, 1
      %v4564 = vmin.f32 %v4562, %v4563
      %v4565 = vsel %vm2383, %v2719, inf
      %v4566 = vrot.slane %v4565, 4
      %v4567 = vmin.f32 %v4565, %v4566
      %v4568 = vrot.slane %v4567, 2
      %v4569 = vmin.f32 %v4567, %v4568
      %v4570 = vrot.slane %v4569, 1
      %v4571 = vmin.f32 %v4569, %v4570
      %v4572 = vsel %vm2383, %v2504, inf
      %v4573 = vrot.slane %v4572, 4
      %v4574 = vmin.f32 %v4572, %v4573
      %v4575 = vrot.slane %v4574, 2
      %v4576 = vmin.f32 %v4574, %v4575
      %v4577 = vrot.slane %v4576, 1
      %v4578 = vmin.f32 %v4576, %v4577
      %v4579 = vsel %vm2383, %v2720, inf
      %v4580 = vrot.slane %v4579, 4
      %v4581 = vmin.f32 %v4579, %v4580
      %v4582 = vrot.slane %v4581, 2
      %v4583 = vmin.f32 %v4581, %v4582
      %v4584 = vrot.slane %v4583, 1
      %v4585 = vmin.f32 %v4583, %v4584
      %v4586 = vsel %vm2383, %v2721, inf
      %v4587 = vrot.slane %v4586, 4
      %v4588 = vmin.f32 %v4586, %v4587
      %v4589 = vrot.slane %v4588, 2
      %v4590 = vmin.f32 %v4588, %v4589
      %v4591 = vrot.slane %v4590, 1
      %v4592 = vmin.f32 %v4590, %v4591
      %v4593 = vsel %vm2383, %v2722, inf
      %v4594 = vrot.slane %v4593, 4
      %v4595 = vmin.f32 %v4593, %v4594
      %v4596 = vrot.slane %v4595, 2
      %v4597 = vmin.f32 %v4595, %v4596
      %v4598 = vrot.slane %v4597, 1
      %v4599 = vmin.f32 %v4597, %v4598
      %v4600 = vsel %vm2383, %v2505, inf
      %v4601 = vrot.slane %v4600, 4
      %v4602 = vmin.f32 %v4600, %v4601
      %v4603 = vrot.slane %v4602, 2
      %v4604 = vmin.f32 %v4602, %v4603
      %v4605 = vrot.slane %v4604, 1
      %v4606 = vmin.f32 %v4604, %v4605
      %v4607 = vsel %vm2383, %v2723, inf
      %v4608 = vrot.slane %v4607, 4
      %v4609 = vmin.f32 %v4607, %v4608
      %v4610 = vrot.slane %v4609, 2
      %v4611 = vmin.f32 %v4609, %v4610
      %v4612 = vrot.slane %v4611, 1
      %v4613 = vmin.f32 %v4611, %v4612
      %v4614 = vsel %vm2383, %v2724, inf
      %v4615 = vrot.slane %v4614, 4
      %v4616 = vmin.f32 %v4614, %v4615
      %v4617 = vrot.slane %v4616, 2
      %v4618 = vmin.f32 %v4616, %v4617
      %v4619 = vrot.slane %v4618, 1
      %v4620 = vmin.f32 %v4618, %v4619
      %v4621 = vsel %vm2383, %v2725, inf
      %v4622 = vrot.slane %v4621, 4
      %v4623 = vmin.f32 %v4621, %v4622
      %v4624 = vrot.slane %v4623, 2
      %v4625 = vmin.f32 %v4623, %v4624
      %v4626 = vrot.slane %v4625, 1
      %v4627 = vmin.f32 %v4625, %v4626
      %v4628 = vsel %vm2383, %v2506, inf
      %v4629 = vrot.slane %v4628, 4
      %v4630 = vmin.f32 %v4628, %v4629
      %v4631 = vrot.slane %v4630, 2
      %v4632 = vmin.f32 %v4630, %v4631
      %v4633 = vrot.slane %v4632, 1
      %v4634 = vmin.f32 %v4632, %v4633
      %v4635 = vsel %vm2383, %v2726, inf
      %v4636 = vrot.slane %v4635, 4
      %v4637 = vmin.f32 %v4635, %v4636
      %v4638 = vrot.slane %v4637, 2
      %v4639 = vmin.f32 %v4637, %v4638
      %v4640 = vrot.slane %v4639, 1
      %v4641 = vmin.f32 %v4639, %v4640
      %v4642 = vsel %vm2383, %v2727, inf
      %v4643 = vrot.slane %v4642, 4
      %v4644 = vmin.f32 %v4642, %v4643
      %v4645 = vrot.slane %v4644, 2
      %v4646 = vmin.f32 %v4644, %v4645
      %v4647 = vrot.slane %v4646, 1
      %v4648 = vmin.f32 %v4646, %v4647
      %v4649 = vsel %vm2383, %v2728, inf
      %v4650 = vrot.slane %v4649, 4
      %v4651 = vmin.f32 %v4649, %v4650
      %v4652 = vrot.slane %v4651, 2
      %v4653 = vmin.f32 %v4651, %v4652
      %v4654 = vrot.slane %v4653, 1
      %v4655 = vmin.f32 %v4653, %v4654
      %v4656 = vsel %vm2383, %v2507, inf
      %v4657 = vrot.slane %v4656, 4
      %v4658 = vmin.f32 %v4656, %v4657
      %v4659 = vrot.slane %v4658, 2
      %v4660 = vmin.f32 %v4658, %v4659
      %v4661 = vrot.slane %v4660, 1
      %v4662 = vmin.f32 %v4660, %v4661
      %v4663 = vsel %vm2383, %v2729, inf
      %v4664 = vrot.slane %v4663, 4
      %v4665 = vmin.f32 %v4663, %v4664
      %v4666 = vrot.slane %v4665, 2
      %v4667 = vmin.f32 %v4665, %v4666
      %v4668 = vrot.slane %v4667, 1
      %v4669 = vmin.f32 %v4667, %v4668
      %v4670 = vsel %vm2383, %v2730, inf
      %v4671 = vrot.slane %v4670, 4
      %v4672 = vmin.f32 %v4670, %v4671
      %v4673 = vrot.slane %v4672, 2
      %v4674 = vmin.f32 %v4672, %v4673
      %v4675 = vrot.slane %v4674, 1
      %v4676 = vmin.f32 %v4674, %v4675
      %v4677 = vsel %vm2383, %v2731, inf
      %v4678 = vrot.slane %v4677, 4
      %v4679 = vmin.f32 %v4677, %v4678
      %v4680 = vrot.slane %v4679, 2
      %v4681 = vmin.f32 %v4679, %v4680
      %v4682 = vrot.slane %v4681, 1
      %v4683 = vmin.f32 %v4681, %v4682
      %v4684 = vmin.f32 %v3794, %v3850
      %v4685 = vmin.f32 %v3801, %v3857
      %v4686 = vmin.f32 %v3808, %v3864
      %v4687 = vmin.f32 %v3815, %v3871
      %v4688 = vmin.f32 %v3822, %v3878
      %v4689 = vmin.f32 %v3829, %v3885
      %v4690 = vmin.f32 %v3836, %v3892
      %v4691 = vmin.f32 %v3843, %v3899
      %v4692 = vmin.f32 %v3906, %v3962
      %v4693 = vmin.f32 %v3913, %v3969
      %v4694 = vmin.f32 %v3920, %v3976
      %v4695 = vmin.f32 %v3927, %v3983
      %v4696 = vmin.f32 %v3934, %v3990
      %v4697 = vmin.f32 %v3941, %v3997
      %v4698 = vmin.f32 %v3948, %v4004
      %v4699 = vmin.f32 %v3955, %v4011
      %v4700 = vmin.f32 %v4018, %v4074
      %v4701 = vmin.f32 %v4025, %v4081
      %v4702 = vmin.f32 %v4032, %v4088
      %v4703 = vmin.f32 %v4039, %v4095
      %v4704 = vmin.f32 %v4046, %v4102
      %v4705 = vmin.f32 %v4053, %v4109
      %v4706 = vmin.f32 %v4060, %v4116
      %v4707 = vmin.f32 %v4067, %v4123
      %v4708 = vmin.f32 %v4130, %v4186
      %v4709 = vmin.f32 %v4137, %v4193
      %v4710 = vmin.f32 %v4144, %v4200
      %v4711 = vmin.f32 %v4151, %v4207
      %v4712 = vmin.f32 %v4158, %v4214
      %v4713 = vmin.f32 %v4165, %v4221
      %v4714 = vmin.f32 %v4172, %v4228
      %v4715 = vmin.f32 %v4179, %v4235
      %v4716 = vmin.f32 %v4242, %v4298
      %v4717 = vmin.f32 %v4249, %v4305
      %v4718 = vmin.f32 %v4256, %v4312
      %v4719 = vmin.f32 %v4263, %v4319
      %v4720 = vmin.f32 %v4270, %v4326
      %v4721 = vmin.f32 %v4277, %v4333
      %v4722 = vmin.f32 %v4284, %v4340
      %v4723 = vmin.f32 %v4291, %v4347
      %v4724 = vmin.f32 %v4354, %v4410
      %v4725 = vmin.f32 %v4361, %v4417
      %v4726 = vmin.f32 %v4368, %v4424
      %v4727 = vmin.f32 %v4375, %v4431
      %v4728 = vmin.f32 %v4382, %v4438
      %v4729 = vmin.f32 %v4389, %v4445
      %v4730 = vmin.f32 %v4396, %v4452
      %v4731 = vmin.f32 %v4403, %v4459
      %v4732 = vmin.f32 %v4466, %v4522
      %v4733 = vmin.f32 %v4473, %v4529
      %v4734 = vmin.f32 %v4480, %v4536
      %v4735 = vmin.f32 %v4487, %v4543
      %v4736 = vmin.f32 %v4494, %v4550
      %v4737 = vmin.f32 %v4501, %v4557
      %v4738 = vmin.f32 %v4508, %v4564
      %v4739 = vmin.f32 %v4515, %v4571
      %v4740 = vmin.f32 %v4578, %v4634
      %v4741 = vmin.f32 %v4585, %v4641
      %v4742 = vmin.f32 %v4592, %v4648
      %v4743 = vmin.f32 %v4599, %v4655
      %v4744 = vmin.f32 %v4606, %v4662
      %v4745 = vmin.f32 %v4613, %v4669
      %v4746 = vmin.f32 %v4620, %v4676
      %v4747 = vmin.f32 %v4627, %v4683
      %v4748 = vpack.c.bf16 %v3724, %v3724
      %v4749 = vpack.c.bf16 %v3725, %v3725
      %v4750 = vpack.c.bf16 %v3726, %v3726
      %v4751 = vpack.c.bf16 %v3727, %v3727
      %v4752 = vpack.c.bf16 %v3728, %v3728
      %v4753 = vpack.c.bf16 %v3729, %v3729
      %v4754 = vpack.c.bf16 %v3730, %v3730
      %v4755 = vpack.c.bf16 %v3731, %v3731
      %v4756 = vpack.c.bf16 %v3732, %v3732
      %v4757 = vpack.c.bf16 %v3733, %v3733
      %v4758 = vpack.c.bf16 %v3734, %v3734
      %v4759 = vpack.c.bf16 %v3735, %v3735
      %v4760 = vpack.c.bf16 %v3736, %v3736
      %v4761 = vpack.c.bf16 %v3737, %v3737
      %v4762 = vpack.c.bf16 %v3738, %v3738
      %v4763 = vpack.c.bf16 %v3739, %v3739
      %v4764 = vpack.c.bf16 %v3740, %v3740
      %v4765 = vpack.c.bf16 %v3741, %v3741
      %v4766 = vpack.c.bf16 %v3742, %v3742
      %v4767 = vpack.c.bf16 %v3743, %v3743
      %v4768 = vpack.c.bf16 %v3744, %v3744
      %v4769 = vpack.c.bf16 %v3745, %v3745
      %v4770 = vpack.c.bf16 %v3746, %v3746
      %v4771 = vpack.c.bf16 %v3747, %v3747
      %v4772 = vpack.c.bf16 %v3748, %v3748
      %v4773 = vpack.c.bf16 %v3749, %v3749
      %v4774 = vpack.c.bf16 %v3750, %v3750
      %v4775 = vpack.c.bf16 %v3751, %v3751
      %v4776 = vpack.c.bf16 %v3752, %v3752
      %v4777 = vpack.c.bf16 %v3753, %v3753
      %v4778 = vpack.c.bf16 %v3754, %v3754
      %v4779 = vpack.c.bf16 %v3755, %v3755
      %v4780 = vpack.c.bf16 %v3756, %v3756
      %v4781 = vpack.c.bf16 %v3757, %v3757
      %v4782 = vpack.c.bf16 %v3758, %v3758
      %v4783 = vpack.c.bf16 %v3759, %v3759
      %v4784 = vpack.c.bf16 %v3760, %v3760
      %v4785 = vpack.c.bf16 %v3761, %v3761
      %v4786 = vpack.c.bf16 %v3762, %v3762
      %v4787 = vpack.c.bf16 %v3763, %v3763
      %v4788 = vpack.c.bf16 %v3764, %v3764
      %v4789 = vpack.c.bf16 %v3765, %v3765
      %v4790 = vpack.c.bf16 %v3766, %v3766
      %v4791 = vpack.c.bf16 %v3767, %v3767
      %v4792 = vpack.c.bf16 %v3768, %v3768
      %v4793 = vpack.c.bf16 %v3769, %v3769
      %v4794 = vpack.c.bf16 %v3770, %v3770
      %v4795 = vpack.c.bf16 %v3771, %v3771
      %v4796 = vpack.c.bf16 %v3772, %v3772
      %v4797 = vpack.c.bf16 %v3773, %v3773
      %v4798 = vpack.c.bf16 %v3774, %v3774
      %v4799 = vpack.c.bf16 %v3775, %v3775
      %v4800 = vpack.c.bf16 %v3776, %v3776
      %v4801 = vpack.c.bf16 %v3777, %v3777
      %v4802 = vpack.c.bf16 %v3778, %v3778
      %v4803 = vpack.c.bf16 %v3779, %v3779
      %v4804 = vpack.c.bf16 %v3780, %v3780
      %v4805 = vpack.c.bf16 %v3781, %v3781
      %v4806 = vpack.c.bf16 %v3782, %v3782
      %v4807 = vpack.c.bf16 %v3783, %v3783
      %v4808 = vpack.c.bf16 %v3784, %v3784
      %v4809 = vpack.c.bf16 %v3785, %v3785
      %v4810 = vpack.c.bf16 %v3786, %v3786
      %v4811 = vpack.c.bf16 %v3787, %v3787
      %v4876 = vunpack.c.l.b16 %v4748
      %v4877 = vunpack.c.l.b16 %v4749
      %v4878 = vunpack.c.l.b16 %v4750
      %v4879 = vunpack.c.l.b16 %v4751
      %v4880 = vunpack.c.l.b16 %v4752
      %v4881 = vunpack.c.l.b16 %v4753
      %v4882 = vunpack.c.l.b16 %v4754
      %v4883 = vunpack.c.l.b16 %v4755
      %v4884 = vunpack.c.l.b16 %v4756
      %v4885 = vunpack.c.l.b16 %v4757
      %v4886 = vunpack.c.l.b16 %v4758
      %v4887 = vunpack.c.l.b16 %v4759
      %v4888 = vunpack.c.l.b16 %v4760
      %v4889 = vunpack.c.l.b16 %v4761
      %v4890 = vunpack.c.l.b16 %v4762
      %v4891 = vunpack.c.l.b16 %v4763
      %v4892 = vunpack.c.l.b16 %v4764
      %v4893 = vunpack.c.l.b16 %v4765
      %v4894 = vunpack.c.l.b16 %v4766
      %v4895 = vunpack.c.l.b16 %v4767
      %v4896 = vunpack.c.l.b16 %v4768
      %v4897 = vunpack.c.l.b16 %v4769
      %v4898 = vunpack.c.l.b16 %v4770
      %v4899 = vunpack.c.l.b16 %v4771
      %v4900 = vunpack.c.l.b16 %v4772
      %v4901 = vunpack.c.l.b16 %v4773
      %v4902 = vunpack.c.l.b16 %v4774
      %v4903 = vunpack.c.l.b16 %v4775
      %v4904 = vunpack.c.l.b16 %v4776
      %v4905 = vunpack.c.l.b16 %v4777
      %v4906 = vunpack.c.l.b16 %v4778
      %v4907 = vunpack.c.l.b16 %v4779
      %v4908 = vunpack.c.l.b16 %v4780
      %v4909 = vunpack.c.l.b16 %v4781
      %v4910 = vunpack.c.l.b16 %v4782
      %v4911 = vunpack.c.l.b16 %v4783
      %v4912 = vunpack.c.l.b16 %v4784
      %v4913 = vunpack.c.l.b16 %v4785
      %v4914 = vunpack.c.l.b16 %v4786
      %v4915 = vunpack.c.l.b16 %v4787
      %v4916 = vunpack.c.l.b16 %v4788
      %v4917 = vunpack.c.l.b16 %v4789
      %v4918 = vunpack.c.l.b16 %v4790
      %v4919 = vunpack.c.l.b16 %v4791
      %v4920 = vunpack.c.l.b16 %v4792
      %v4921 = vunpack.c.l.b16 %v4793
      %v4922 = vunpack.c.l.b16 %v4794
      %v4923 = vunpack.c.l.b16 %v4795
      %v4924 = vunpack.c.l.b16 %v4796
      %v4925 = vunpack.c.l.b16 %v4797
      %v4926 = vunpack.c.l.b16 %v4798
      %v4927 = vunpack.c.l.b16 %v4799
      %v4928 = vunpack.c.l.b16 %v4800
      %v4929 = vunpack.c.l.b16 %v4801
      %v4930 = vunpack.c.l.b16 %v4802
      %v4931 = vunpack.c.l.b16 %v4803
      %v4932 = vunpack.c.l.b16 %v4804
      %v4933 = vunpack.c.l.b16 %v4805
      %v4934 = vunpack.c.l.b16 %v4806
      %v4935 = vunpack.c.l.b16 %v4807
      %v4936 = vunpack.c.l.b16 %v4808
      %v4937 = vunpack.c.l.b16 %v4809
      %v4938 = vunpack.c.l.b16 %v4810
      %v4939 = vunpack.c.l.b16 %v4811
      %vm4940 = vcmask 1041409
      %v4941 = vsel %vm4940, %v4877, %v4876
      %vm4942 = vcmask 1042434
      %v4943 = vsel %vm4942, %v4878, %v4941
      %vm4944 = vcmask 1043459
      %v4945 = vsel %vm4944, %v4879, %v4943
      %vm4946 = vcmask 1044484
      %v4947 = vsel %vm4946, %v4880, %v4945
      %vm4948 = vcmask 1045509
      %v4949 = vsel %vm4948, %v4881, %v4947
      %vm4950 = vcmask 1046534
      %v4951 = vsel %vm4950, %v4882, %v4949
      %vm4952 = vcmask 1047559
      %v4953 = vsel %vm4952, %v4883, %v4951
      %v4954 = vsel %vm4940, %v4885, %v4884
      %v4955 = vsel %vm4942, %v4886, %v4954
      %v4956 = vsel %vm4944, %v4887, %v4955
      %v4957 = vsel %vm4946, %v4888, %v4956
      %v4958 = vsel %vm4948, %v4889, %v4957
      %v4959 = vsel %vm4950, %v4890, %v4958
      %v4960 = vsel %vm4952, %v4891, %v4959
      %v4961 = vsel %vm4940, %v4893, %v4892
      %v4962 = vsel %vm4942, %v4894, %v4961
      %v4963 = vsel %vm4944, %v4895, %v4962
      %v4964 = vsel %vm4946, %v4896, %v4963
      %v4965 = vsel %vm4948, %v4897, %v4964
      %v4966 = vsel %vm4950, %v4898, %v4965
      %v4967 = vsel %vm4952, %v4899, %v4966
      %v4968 = vsel %vm4940, %v4901, %v4900
      %v4969 = vsel %vm4942, %v4902, %v4968
      %v4970 = vsel %vm4944, %v4903, %v4969
      %v4971 = vsel %vm4946, %v4904, %v4970
      %v4972 = vsel %vm4948, %v4905, %v4971
      %v4973 = vsel %vm4950, %v4906, %v4972
      %v4974 = vsel %vm4952, %v4907, %v4973
      %v4975 = vsel %vm4940, %v4909, %v4908
      %v4976 = vsel %vm4942, %v4910, %v4975
      %v4977 = vsel %vm4944, %v4911, %v4976
      %v4978 = vsel %vm4946, %v4912, %v4977
      %v4979 = vsel %vm4948, %v4913, %v4978
      %v4980 = vsel %vm4950, %v4914, %v4979
      %v4981 = vsel %vm4952, %v4915, %v4980
      %v4982 = vsel %vm4940, %v4917, %v4916
      %v4983 = vsel %vm4942, %v4918, %v4982
      %v4984 = vsel %vm4944, %v4919, %v4983
      %v4985 = vsel %vm4946, %v4920, %v4984
      %v4986 = vsel %vm4948, %v4921, %v4985
      %v4987 = vsel %vm4950, %v4922, %v4986
      %v4988 = vsel %vm4952, %v4923, %v4987
      %v4989 = vsel %vm4940, %v4925, %v4924
      %v4990 = vsel %vm4942, %v4926, %v4989
      %v4991 = vsel %vm4944, %v4927, %v4990
      %v4992 = vsel %vm4946, %v4928, %v4991
      %v4993 = vsel %vm4948, %v4929, %v4992
      %v4994 = vsel %vm4950, %v4930, %v4993
      %v4995 = vsel %vm4952, %v4931, %v4994
      %v4996 = vsel %vm4940, %v4933, %v4932
      %v4997 = vsel %vm4942, %v4934, %v4996
      %v4998 = vsel %vm4944, %v4935, %v4997
      %v4999 = vsel %vm4946, %v4936, %v4998
      %v5000 = vsel %vm4948, %v4937, %v4999
      %v5001 = vsel %vm4950, %v4938, %v5000
      %v5002 = vsel %vm4952, %v4939, %v5001
      %v5003 = vpack.c.b16 %v4953, %v4953
      %v5004 = vpack.c.b16 %v4960, %v4960
      %v5005 = vpack.c.b16 %v4967, %v4967
      %v5006 = vpack.c.b16 %v4974, %v4974
      %v5007 = vpack.c.b16 %v4981, %v4981
      %v5008 = vpack.c.b16 %v4988, %v4988
      %v5009 = vpack.c.b16 %v4995, %v4995
      %v5010 = vpack.c.b16 %v5002, %v5002
      %5019 = vst [vmem:[%s309] sm:$0xf] %v5003
      %5020 = vst [vmem:[%s309 + $0x4] sm:$0xf] %v5004
      %5021 = vst [vmem:[%s309 + $0x8] sm:$0xf] %v5005
      %5022 = vst [vmem:[%s309 + $0xc] sm:$0xf] %v5006
      %5023 = vst [vmem:[%s309 + $0x10] sm:$0xf] %v5007
      %5024 = vst [vmem:[%s309 + $0x14] sm:$0xf] %v5008
      %5025 = vst [vmem:[%s309 + $0x18] sm:$0xf] %v5009
      %5026 = vst [vmem:[%s309 + $0x1c] sm:$0xf] %v5010
      %v5027 = vpack.c.bf16 %v4684, %v4684
      %v5028 = vpack.c.bf16 %v4685, %v4685
      %v5029 = vpack.c.bf16 %v4686, %v4686
      %v5030 = vpack.c.bf16 %v4687, %v4687
      %v5031 = vpack.c.bf16 %v4688, %v4688
      %v5032 = vpack.c.bf16 %v4689, %v4689
      %v5033 = vpack.c.bf16 %v4690, %v4690
      %v5034 = vpack.c.bf16 %v4691, %v4691
      %v5035 = vpack.c.bf16 %v4692, %v4692
      %v5036 = vpack.c.bf16 %v4693, %v4693
      %v5037 = vpack.c.bf16 %v4694, %v4694
      %v5038 = vpack.c.bf16 %v4695, %v4695
      %v5039 = vpack.c.bf16 %v4696, %v4696
      %v5040 = vpack.c.bf16 %v4697, %v4697
      %v5041 = vpack.c.bf16 %v4698, %v4698
      %v5042 = vpack.c.bf16 %v4699, %v4699
      %v5043 = vpack.c.bf16 %v4700, %v4700
      %v5044 = vpack.c.bf16 %v4701, %v4701
      %v5045 = vpack.c.bf16 %v4702, %v4702
      %v5046 = vpack.c.bf16 %v4703, %v4703
      %v5047 = vpack.c.bf16 %v4704, %v4704
      %v5048 = vpack.c.bf16 %v4705, %v4705
      %v5049 = vpack.c.bf16 %v4706, %v4706
      %v5050 = vpack.c.bf16 %v4707, %v4707
      %v5051 = vpack.c.bf16 %v4708, %v4708
      %v5052 = vpack.c.bf16 %v4709, %v4709
      %v5053 = vpack.c.bf16 %v4710, %v4710
      %v5054 = vpack.c.bf16 %v4711, %v4711
      %v5055 = vpack.c.bf16 %v4712, %v4712
      %v5056 = vpack.c.bf16 %v4713, %v4713
      %v5057 = vpack.c.bf16 %v4714, %v4714
      %v5058 = vpack.c.bf16 %v4715, %v4715
      %v5059 = vpack.c.bf16 %v4716, %v4716
      %v5060 = vpack.c.bf16 %v4717, %v4717
      %v5061 = vpack.c.bf16 %v4718, %v4718
      %v5062 = vpack.c.bf16 %v4719, %v4719
      %v5063 = vpack.c.bf16 %v4720, %v4720
      %v5064 = vpack.c.bf16 %v4721, %v4721
      %v5065 = vpack.c.bf16 %v4722, %v4722
      %v5066 = vpack.c.bf16 %v4723, %v4723
      %v5067 = vpack.c.bf16 %v4724, %v4724
      %v5068 = vpack.c.bf16 %v4725, %v4725
      %v5069 = vpack.c.bf16 %v4726, %v4726
      %v5070 = vpack.c.bf16 %v4727, %v4727
      %v5071 = vpack.c.bf16 %v4728, %v4728
      %v5072 = vpack.c.bf16 %v4729, %v4729
      %v5073 = vpack.c.bf16 %v4730, %v4730
      %v5074 = vpack.c.bf16 %v4731, %v4731
      %v5075 = vpack.c.bf16 %v4732, %v4732
      %v5076 = vpack.c.bf16 %v4733, %v4733
      %v5077 = vpack.c.bf16 %v4734, %v4734
      %v5078 = vpack.c.bf16 %v4735, %v4735
      %v5079 = vpack.c.bf16 %v4736, %v4736
      %v5080 = vpack.c.bf16 %v4737, %v4737
      %v5081 = vpack.c.bf16 %v4738, %v4738
      %v5082 = vpack.c.bf16 %v4739, %v4739
      %v5083 = vpack.c.bf16 %v4740, %v4740
      %v5084 = vpack.c.bf16 %v4741, %v4741
      %v5085 = vpack.c.bf16 %v4742, %v4742
      %v5086 = vpack.c.bf16 %v4743, %v4743
      %v5087 = vpack.c.bf16 %v4744, %v4744
      %v5088 = vpack.c.bf16 %v4745, %v4745
      %v5089 = vpack.c.bf16 %v4746, %v4746
      %v5090 = vpack.c.bf16 %v4747, %v4747
      %v5155 = vunpack.c.l.b16 %v5027
      %v5156 = vunpack.c.l.b16 %v5028
      %v5157 = vunpack.c.l.b16 %v5029
      %v5158 = vunpack.c.l.b16 %v5030
      %v5159 = vunpack.c.l.b16 %v5031
      %v5160 = vunpack.c.l.b16 %v5032
      %v5161 = vunpack.c.l.b16 %v5033
      %v5162 = vunpack.c.l.b16 %v5034
      %v5163 = vunpack.c.l.b16 %v5035
      %v5164 = vunpack.c.l.b16 %v5036
      %v5165 = vunpack.c.l.b16 %v5037
      %v5166 = vunpack.c.l.b16 %v5038
      %v5167 = vunpack.c.l.b16 %v5039
      %v5168 = vunpack.c.l.b16 %v5040
      %v5169 = vunpack.c.l.b16 %v5041
      %v5170 = vunpack.c.l.b16 %v5042
      %v5171 = vunpack.c.l.b16 %v5043
      %v5172 = vunpack.c.l.b16 %v5044
      %v5173 = vunpack.c.l.b16 %v5045
      %v5174 = vunpack.c.l.b16 %v5046
      %v5175 = vunpack.c.l.b16 %v5047
      %v5176 = vunpack.c.l.b16 %v5048
      %v5177 = vunpack.c.l.b16 %v5049
      %v5178 = vunpack.c.l.b16 %v5050
      %v5179 = vunpack.c.l.b16 %v5051
      %v5180 = vunpack.c.l.b16 %v5052
      %v5181 = vunpack.c.l.b16 %v5053
      %v5182 = vunpack.c.l.b16 %v5054
      %v5183 = vunpack.c.l.b16 %v5055
      %v5184 = vunpack.c.l.b16 %v5056
      %v5185 = vunpack.c.l.b16 %v5057
      %v5186 = vunpack.c.l.b16 %v5058
      %v5187 = vunpack.c.l.b16 %v5059
      %v5188 = vunpack.c.l.b16 %v5060
      %v5189 = vunpack.c.l.b16 %v5061
      %v5190 = vunpack.c.l.b16 %v5062
      %v5191 = vunpack.c.l.b16 %v5063
      %v5192 = vunpack.c.l.b16 %v5064
      %v5193 = vunpack.c.l.b16 %v5065
      %v5194 = vunpack.c.l.b16 %v5066
      %v5195 = vunpack.c.l.b16 %v5067
      %v5196 = vunpack.c.l.b16 %v5068
      %v5197 = vunpack.c.l.b16 %v5069
      %v5198 = vunpack.c.l.b16 %v5070
      %v5199 = vunpack.c.l.b16 %v5071
      %v5200 = vunpack.c.l.b16 %v5072
      %v5201 = vunpack.c.l.b16 %v5073
      %v5202 = vunpack.c.l.b16 %v5074
      %v5203 = vunpack.c.l.b16 %v5075
      %v5204 = vunpack.c.l.b16 %v5076
      %v5205 = vunpack.c.l.b16 %v5077
      %v5206 = vunpack.c.l.b16 %v5078
      %v5207 = vunpack.c.l.b16 %v5079
      %v5208 = vunpack.c.l.b16 %v5080
      %v5209 = vunpack.c.l.b16 %v5081
      %v5210 = vunpack.c.l.b16 %v5082
      %v5211 = vunpack.c.l.b16 %v5083
      %v5212 = vunpack.c.l.b16 %v5084
      %v5213 = vunpack.c.l.b16 %v5085
      %v5214 = vunpack.c.l.b16 %v5086
      %v5215 = vunpack.c.l.b16 %v5087
      %v5216 = vunpack.c.l.b16 %v5088
      %v5217 = vunpack.c.l.b16 %v5089
      %v5218 = vunpack.c.l.b16 %v5090
      %v5219 = vsel %vm4940, %v5156, %v5155
      %v5220 = vsel %vm4942, %v5157, %v5219
      %v5221 = vsel %vm4944, %v5158, %v5220
      %v5222 = vsel %vm4946, %v5159, %v5221
      %v5223 = vsel %vm4948, %v5160, %v5222
      %v5224 = vsel %vm4950, %v5161, %v5223
      %v5225 = vsel %vm4952, %v5162, %v5224
      %v5226 = vsel %vm4940, %v5164, %v5163
      %v5227 = vsel %vm4942, %v5165, %v5226
      %v5228 = vsel %vm4944, %v5166, %v5227
      %v5229 = vsel %vm4946, %v5167, %v5228
      %v5230 = vsel %vm4948, %v5168, %v5229
      %v5231 = vsel %vm4950, %v5169, %v5230
      %v5232 = vsel %vm4952, %v5170, %v5231
      %v5233 = vsel %vm4940, %v5172, %v5171
      %v5234 = vsel %vm4942, %v5173, %v5233
      %v5235 = vsel %vm4944, %v5174, %v5234
      %v5236 = vsel %vm4946, %v5175, %v5235
      %v5237 = vsel %vm4948, %v5176, %v5236
      %v5238 = vsel %vm4950, %v5177, %v5237
      %v5239 = vsel %vm4952, %v5178, %v5238
      %v5240 = vsel %vm4940, %v5180, %v5179
      %v5241 = vsel %vm4942, %v5181, %v5240
      %v5242 = vsel %vm4944, %v5182, %v5241
      %v5243 = vsel %vm4946, %v5183, %v5242
      %v5244 = vsel %vm4948, %v5184, %v5243
      %v5245 = vsel %vm4950, %v5185, %v5244
      %v5246 = vsel %vm4952, %v5186, %v5245
      %v5247 = vsel %vm4940, %v5188, %v5187
      %v5248 = vsel %vm4942, %v5189, %v5247
      %v5249 = vsel %vm4944, %v5190, %v5248
      %v5250 = vsel %vm4946, %v5191, %v5249
      %v5251 = vsel %vm4948, %v5192, %v5250
      %v5252 = vsel %vm4950, %v5193, %v5251
      %v5253 = vsel %vm4952, %v5194, %v5252
      %v5254 = vsel %vm4940, %v5196, %v5195
      %v5255 = vsel %vm4942, %v5197, %v5254
      %v5256 = vsel %vm4944, %v5198, %v5255
      %v5257 = vsel %vm4946, %v5199, %v5256
      %v5258 = vsel %vm4948, %v5200, %v5257
      %v5259 = vsel %vm4950, %v5201, %v5258
      %v5260 = vsel %vm4952, %v5202, %v5259
      %v5261 = vsel %vm4940, %v5204, %v5203
      %v5262 = vsel %vm4942, %v5205, %v5261
      %v5263 = vsel %vm4944, %v5206, %v5262
      %v5264 = vsel %vm4946, %v5207, %v5263
      %v5265 = vsel %vm4948, %v5208, %v5264
      %v5266 = vsel %vm4950, %v5209, %v5265
      %v5267 = vsel %vm4952, %v5210, %v5266
      %v5268 = vsel %vm4940, %v5212, %v5211
      %v5269 = vsel %vm4942, %v5213, %v5268
      %v5270 = vsel %vm4944, %v5214, %v5269
      %v5271 = vsel %vm4946, %v5215, %v5270
      %v5272 = vsel %vm4948, %v5216, %v5271
      %v5273 = vsel %vm4950, %v5217, %v5272
      %v5274 = vsel %vm4952, %v5218, %v5273
      %v5275 = vpack.c.b16 %v5225, %v5225
      %v5276 = vpack.c.b16 %v5232, %v5232
      %v5277 = vpack.c.b16 %v5239, %v5239
      %v5278 = vpack.c.b16 %v5246, %v5246
      %v5279 = vpack.c.b16 %v5253, %v5253
      %v5280 = vpack.c.b16 %v5260, %v5260
      %v5281 = vpack.c.b16 %v5267, %v5267
      %v5282 = vpack.c.b16 %v5274, %v5274
      %5291 = vst [vmem:[%s319] sm:$0xf] %v5275
      %5292 = vst [vmem:[%s319 + $0x4] sm:$0xf] %v5276
      %5293 = vst [vmem:[%s319 + $0x8] sm:$0xf] %v5277
      %5294 = vst [vmem:[%s319 + $0xc] sm:$0xf] %v5278
      %5295 = vst [vmem:[%s319 + $0x10] sm:$0xf] %v5279
      %5296 = vst [vmem:[%s319 + $0x14] sm:$0xf] %v5280
      %5297 = vst [vmem:[%s319 + $0x18] sm:$0xf] %v5281
      %5298 = vst [vmem:[%s319 + $0x1c] sm:$0xf] %v5282
      %s5299 = smul.u32 8, %s23
      %p5300 = scmp.lt.s32.totalorder %s22, 1
      %s5301 = scalar_select %p5300, %s22, 1
      %p5302 = scmp.lt.s32.totalorder %s5299, 7
      %s5303 = scalar_select %p5302, %s5299, 7
      %s5304 = smul.addr %s5301, 8
      %s5305 = sadd.s32 %s5303, %s5304
      %s5306 = smul.addr %s5305, 4
      %s5307 = scalar_lea.vmem %s3, %s5306
      %s5308 = smul.u32 8, %s23
      %p5309 = scmp.lt.s32.totalorder %s22, 1
      %s5310 = scalar_select %p5309, %s22, 1
      %p5311 = scmp.lt.s32.totalorder %s5308, 7
      %s5312 = scalar_select %p5311, %s5308, 7
      %s5313 = smul.addr %s5310, 8
      %s5314 = sadd.s32 %s5312, %s5313
      %s5315 = smul.addr %s5314, 4
      %s5316 = scalar_lea.vmem %s4, %s5315
      %p5317 = scmp.lt.s32.totalorder %s22, 1
      %s5318 = scalar_select %p5317, %s22, 1
      %p5319 = scmp.lt.s32.totalorder %s23, 0
      %s5320 = scalar_select %p5319, %s23, 0
      %s5321 = sadd.s32 %s5320, %s5318
      %s5322 = smul.addr %s5321, 8
      %s5323 = scalar_lea.vmem %s5, %s5322
      %p5324 = scmp.lt.s32.totalorder %s22, 1
      %s5325 = scalar_select %p5324, %s22, 1
      %p5326 = scmp.lt.s32.totalorder %s23, 0
      %s5327 = scalar_select %p5326, %s23, 0
      %s5328 = sadd.s32 %s5327, %s5325
      %s5329 = smul.addr %s5328, 8
      %s5330 = scalar_lea.vmem %s6, %s5329
      // Predicated region
      $region33: #{conv_block_forward.2} parent=31 // pred_check
        %p5331 = pneg %p118
      $region34: #{conv_block_forward.2} parent=31 // pred_check_branch
        %5333 = sbr.rel (%p5331) target = $region36
      $region35: #{conv_block_forward.2} parent=31 // pred_region
        %s5334 = smul.u32 8, %s23
      $region36: #{conv_block_forward.2} parent=31 // pred_fallthru
        _
      // Predicated region
      $region37: #{conv_block_forward.2} parent=31 // pred_check
        %p5335 = pneg %p146
      $region38: #{conv_block_forward.2} parent=31 // pred_check_branch
        %5337 = sbr.rel (%p5335) target = $region40
      $region39: #{conv_block_forward.2} parent=31 // pred_region
        %s5338 = smul.u32 8, %s23
      $region40: #{conv_block_forward.2} parent=31 // pred_fallthru
        _
      // Predicated region
      $region41: #{conv_block_forward.2} parent=31 // pred_check
        %p5339 = pneg %p174
      $region42: #{conv_block_forward.2} parent=31 // pred_check_branch
        %5341 = sbr.rel (%p5339) target = $region44
      $region43: #{conv_block_forward.2} parent=31 // pred_region
        _
      $region44: #{conv_block_forward.2} parent=31 // pred_fallthru
        _
      // Predicated region
      $region45: #{conv_block_forward.2} parent=31 // pred_check
        %p5342 = pneg %p202
      $region46: #{conv_block_forward.2} parent=31 // pred_check_branch
        %5344 = sbr.rel (%p5342) target = $region48
      $region47: #{conv_block_forward.2} parent=31 // pred_region
        _
      $region48: #{conv_block_forward.2} parent=31 // pred_fallthru
        _
    $region32: #{conv_block_forward.2} parent=5 // pred_fallthru
      _
    %p5345 = scmp.le.s32.totalorder 2, %s13
    // Predicated region
    $region49: #{conv_block_forward.2} parent=5 // pred_check
      %p5346 = pneg %p5345
    $region50: #{conv_block_forward.2} parent=5 // pred_check_branch
      %5348 = sbr.rel (%p5346) target = $region52
    $region51: #{conv_block_forward.2} parent=5 // pred_region
      %s5349 = ssub.s32 %s13, 2
      // Predicated region
      $region53: #{conv_block_forward.2} parent=51 // pred_check
        %p5350 = pneg %p124
      $region54: #{conv_block_forward.2} parent=51 // pred_check_branch
        %5352 = sbr.rel (%p5350) target = $region56
      $region55: #{conv_block_forward.2} parent=51 // pred_region
        %s5353 = smul.u32 8, %s25
        %p5354 = scmp.lt.s32.totalorder %s24, 1
        %s5355 = scalar_select %p5354, %s24, 1
        %p5356 = scmp.lt.s32.totalorder %s5353, 7
        %s5357 = scalar_select %p5356, %s5353, 7
        %s5358 = smul.addr %s5355, 8
        %s5359 = sadd.s32 %s5357, %s5358
        %s5360 = smul.addr %s5359, 4
        %s5361 = scalar_lea.vmem %s3, %s5360
      $region56: #{conv_block_forward.2} parent=51 // pred_fallthru
        _
      // Predicated region
      $region57: #{conv_block_forward.2} parent=51 // pred_check
        %p5362 = pneg %p152
      $region58: #{conv_block_forward.2} parent=51 // pred_check_branch
        %5364 = sbr.rel (%p5362) target = $region60
      $region59: #{conv_block_forward.2} parent=51 // pred_region
        %s5365 = smul.u32 8, %s25
        %p5366 = scmp.lt.s32.totalorder %s24, 1
        %s5367 = scalar_select %p5366, %s24, 1
        %p5368 = scmp.lt.s32.totalorder %s5365, 7
        %s5369 = scalar_select %p5368, %s5365, 7
        %s5370 = smul.addr %s5367, 8
        %s5371 = sadd.s32 %s5369, %s5370
        %s5372 = smul.addr %s5371, 4
        %s5373 = scalar_lea.vmem %s4, %s5372
      $region60: #{conv_block_forward.2} parent=51 // pred_fallthru
        _
      // Predicated region
      $region61: #{conv_block_forward.2} parent=51 // pred_check
        %p5374 = pneg %p180
      $region62: #{conv_block_forward.2} parent=51 // pred_check_branch
        %5376 = sbr.rel (%p5374) target = $region64
      $region63: #{conv_block_forward.2} parent=51 // pred_region
        %p5377 = scmp.lt.s32.totalorder %s24, 1
        %s5378 = scalar_select %p5377, %s24, 1
        %p5379 = scmp.lt.s32.totalorder %s25, 0
        %s5380 = scalar_select %p5379, %s25, 0
        %s5381 = sadd.s32 %s5380, %s5378
        %s5382 = smul.addr %s5381, 8
        %s5383 = scalar_lea.vmem %s5, %s5382
      $region64: #{conv_block_forward.2} parent=51 // pred_fallthru
        _
      // Predicated region
      $region65: #{conv_block_forward.2} parent=51 // pred_check
        %p5384 = pneg %p208
      $region66: #{conv_block_forward.2} parent=51 // pred_check_branch
        %5386 = sbr.rel (%p5384) target = $region68
      $region67: #{conv_block_forward.2} parent=51 // pred_region
        %p5387 = scmp.lt.s32.totalorder %s24, 1
        %s5388 = scalar_select %p5387, %s24, 1
        %p5389 = scmp.lt.s32.totalorder %s25, 0
        %s5390 = scalar_select %p5389, %s25, 0
        %s5391 = sadd.s32 %s5390, %s5388
        %s5392 = smul.addr %s5391, 8
        %s5393 = scalar_lea.vmem %s6, %s5392
      $region68: #{conv_block_forward.2} parent=51 // pred_fallthru
        _
    $region52: #{conv_block_forward.2} parent=5 // pred_fallthru
      _
  $region6: #{conv_block_forward.2} parent=0 // loop_footer
    %s17 = sadd.s32 1, %s13
  $region7: #{conv_block_forward.2} parent=0 // loop_footer_branch
    %12 = sbr.rel target = $region3
  $region8: #{conv_block_forward.2} parent=0 // loop_exit
    _

</llo_original>
